<compile_context>
chip_gen: v5e
topology: v5e:2x2
jax: 0.10.0
libtpu: 0.0.40
codegen_flags: <defaults>
</compile_context>

<pallas_src>
import functools
import math

import jax
import jax.numpy as jnp
from jax.experimental import pallas as pl
from jax.experimental.pallas import tpu as pltpu

_LN_EPS = 1e-5


# ----------------------------- helpers ---------------------------------------

def _nbytes(shape, dtype):
    return int(math.prod(shape)) * jnp.dtype(dtype).itemsize


def _row_tile(m, desired, itemsize):
    """Row tile: a multiple of the sublane-pack step (8 f32 / 16 bf16 / 32 int8)."""
    step = max(8, 32 // max(1, itemsize))
    tm = min(desired, m)
    return max(step, ((tm + step - 1) // step) * step)


def _pick_seq_tile(s, desired):
    """Largest multiple of 8 dividing s (<= desired); fallback: full s (always legal
    for (B,S,E)-shaped arrays since it equals the full dim)."""
    t = min(desired, s)
    t -= t % 8
    while t >= 8:
        if s % t == 0:
            return t
        t -= 8
    return s


def _pick_head_group(num_heads, head_dim):
    """Smallest head group whose width is lane-dense (multiple of 128); otherwise all
    heads (group width == E == full array width, always layout-legal)."""
    for hg in range(1, num_heads + 1):
        if num_heads % hg == 0 and (hg * head_dim) % 128 == 0:
            return hg
    return num_heads


def _pick_ff_tile(f, desired):
    """FFN-hidden tile: multiple of 128 dividing f (<= desired); fallback: full f."""
    if f <= desired:
        return f
    t = (min(desired, f) // 128) * 128
    while t >= 128:
        if f % t == 0:
            return t
        t -= 128
    return f


def _spec(shape, index_map, buffer_count=None):
    """BlockSpec; grid-invariant weights get single-buffering (saves VMEM on v7x)."""
    if buffer_count is not None and hasattr(pl, "Buffered"):
        try:
            return pl.BlockSpec(shape, index_map, pipeline_mode=pl.Buffered(buffer_count))
        except TypeError:  # older BlockSpec without pipeline_mode — fall back cleanly
            pass
    return pl.BlockSpec(shape, index_map)


def _compiler_params(vmem_est_bytes, semantics):
    # Generation-aware scoped-VMEM budget: ~80% of physical VMEM (128 MiB on v5e/v6e,
    # 64 MiB/TC on v7x) instead of a hard 64 MiB cap.
    try:
        cap = int(pltpu.get_tpu_info().vmem_capacity_bytes * 0.8)
    except Exception:
        cap = 64 * 1024 * 1024
    limit = int(min(max(int(vmem_est_bytes * 1.25), 32 * 1024 * 1024), cap))
    return pltpu.CompilerParams(dimension_semantics=semantics, vmem_limit_bytes=limit)


def _layer_norm_f32(s, g, b):
    mu = jnp.mean(s, axis=-1, keepdims=True)
    d = s - mu
    var = jnp.mean(d * d, axis=-1, keepdims=True)
    return d * jax.lax.rsqrt(var + _LN_EPS) * g + b


# ----------------------------- kernel 1: Q/K/V projections --------------------

def _qkv_kernel(x_ref, wq_ref, wk_ref, wv_ref, bq_ref, bk_ref, bv_ref,
                q_ref, k_ref, v_ref):
    x = x_ref[...]                                   # x read ONCE for all three matmuls
    q = jnp.dot(x, wq_ref[...], preferred_element_type=jnp.float32) + bq_ref[...]
    k = jnp.dot(x, wk_ref[...], preferred_element_type=jnp.float32) + bk_ref[...]
    v = jnp.dot(x, wv_ref[...], preferred_element_type=jnp.float32) + bv_ref[...]
    q_ref[...] = q.astype(q_ref.dtype)
    k_ref[...] = k.astype(k_ref.dtype)
    v_ref[...] = v.astype(v_ref.dtype)


def _qkv_proj(x2d, wq, wk, wv, bq, bk, bv, *, tile_m):
    m, e = x2d.shape
    isz = x2d.dtype.itemsize
    wisz = wq.dtype.itemsize
    tm = _row_tile(m, tile_m, isz)
    gm = pl.cdiv(m, tm)
    row = lambda i: (i, 0)
    inv = lambda i: (0, 0)
    vmem_est = (2 * tm * e * isz + 3 * e * e * wisz + 3 * e * 4
                + 3 * 2 * tm * e * isz + 4 * tm * e * 4)
    cost = pl.CostEstimate(
        flops=6 * m * e * e, transcendentals=0,
        bytes_accessed=4 * _nbytes((m, e), x2d.dtype) + 3 * e * e * wisz + 3 * e * 4)
    out_sds = jax.ShapeDtypeStruct((m, e), x2d.dtype)
    return pl.pallas_call(
        _qkv_kernel,
        out_shape=(out_sds, out_sds, out_sds),
        grid_spec=pltpu.PrefetchScalarGridSpec(
            num_scalar_prefetch=0, grid=(gm,),
            in_specs=[pl.BlockSpec((tm, e), row),
                      _spec((e, e), inv, 1), _spec((e, e), inv, 1), _spec((e, e), inv, 1),
                      _spec((1, e), inv, 1), _spec((1, e), inv, 1), _spec((1, e), inv, 1)],
            out_specs=[pl.BlockSpec((tm, e), row)] * 3),
        compiler_params=_compiler_params(vmem_est, ("parallel",)),
        cost_estimate=cost,
    )(x2d, wq, wk, wv, bq, bk, bv)


# ----------------------------- kernel 2: flash self-attention ------------------

def _attn_kernel(q_ref, k_ref, v_ref, o_ref, m_sc, l_sc, acc_sc, *,
                 inv_scale, head_group, head_dim):
    ki = pl.program_id(3)

    @pl.when(ki == 0)
    def _():
        m_sc[...] = jnp.full(m_sc.shape, -jnp.inf, m_sc.dtype)
        l_sc[...] = jnp.zeros(l_sc.shape, l_sc.dtype)
        acc_sc[...] = jnp.zeros(acc_sc.shape, acc_sc.dtype)

    # Static (unrolled) loop over the heads held in this lane-dense head group.
    for h in range(head_group):
        sl = slice(h * head_dim, (h + 1) * head_dim)
        s = jax.lax.dot_general(                      # (tq, tk) = q @ k.T, f32 acc
            q_ref[:, sl], k_ref[:, sl], (((1,), (1,)), ((), ())),
            preferred_element_type=jnp.float32) * inv_scale
        m_prev = m_sc[h]
        m_new = jnp.maximum(m_prev, jnp.max(s, axis=-1, keepdims=True))
        alpha = jnp.exp(m_prev - m_new)
        p = jnp.exp(s - m_new)                        # unnormalized probabilities (f32)
        l_sc[h] = alpha * l_sc[h] + jnp.sum(p, axis=-1, keepdims=True)
        acc_sc[h] = alpha * acc_sc[h] + jnp.dot(
            p.astype(v_ref.dtype), v_ref[:, sl], preferred_element_type=jnp.float32)
        m_sc[h] = m_new

    @pl.when(ki == pl.num_programs(3) - 1)
    def _():
        # Deferred softmax normalization: one reciprocal per row/head on the EUP.
        for h in range(head_group):
            sl = slice(h * head_dim, (h + 1) * head_dim)
            inv_l = pl.reciprocal(l_sc[h], approx=True)
            o_ref[:, sl] = (acc_sc[h] * inv_l).astype(o_ref.dtype)


def _attention(q3, k3, v3, *, num_heads, seq_tile):
    b, s, e = q3.shape
    d = e // num_heads
    hg = _pick_head_group(num_heads, d)
    nhg = num_heads // hg
    gw = hg * d                                       # column width of one head group
    tq = _pick_seq_tile(s, seq_tile)
    tk = _pick_seq_tile(s, seq_tile)
    isz = q3.dtype.itemsize
    inv_scale = 1.0 / math.sqrt(d)

    q_spec = pl.BlockSpec((None, tq, gw), lambda bi, hi, qi, ki: (bi, qi, hi))
    k_spec = pl.BlockSpec((None, tk, gw), lambda bi, hi, qi, ki: (bi, ki, hi))
    v_spec = pl.BlockSpec((None, tk, gw), lambda bi, hi, qi, ki: (bi, ki, hi))
    o_spec = pl.BlockSpec((None, tq, gw), lambda bi, hi, qi, ki: (bi, qi, hi))

    vmem_est = (2 * tq * gw * isz + 4 * tk * gw * isz + 2 * tq * gw * isz
                + (2 * tq * hg + tq * gw) * 4 + 3 * tq * tk * 4)
    cost = pl.CostEstimate(
        flops=4 * b * num_heads * s * s * d,
        transcendentals=b * num_heads * s * s,
        bytes_accessed=4 * _nbytes((b, s, e), q3.dtype))

    return pl.pallas_call(
        functools.partial(_attn_kernel, inv_scale=inv_scale,
                          head_group=hg, head_dim=d),
        out_shape=jax.ShapeDtypeStruct((b, s, e), q3.dtype),
        grid_spec=pltpu.PrefetchScalarGridSpec(
            num_scalar_prefetch=0, grid=(b, nhg, s // tq, s // tk),
            in_specs=[q_spec, k_spec, v_spec], out_specs=o_spec,
            scratch_shapes=[pltpu.VMEM((hg, tq, 1), jnp.float32),   # running max
                            pltpu.VMEM((hg, tq, 1), jnp.float32),   # running sum
                            pltpu.VMEM((hg, tq, d), jnp.float32)]), # output accumulator
        compiler_params=_compiler_params(
            vmem_est, ("parallel", "parallel", "parallel", "arbitrary")),
        cost_estimate=cost,
    )(q3, k3, v3)


# ----------------------------- kernel 3: out-proj + residual + LayerNorm1 -----

def _proj_add_ln_kernel(ctx_ref, res_ref, w_ref, b_ref, g_ref, beta_ref, o_ref):
    proj = jnp.dot(ctx_ref[...], w_ref[...], preferred_element_type=jnp.float32)
    s = res_ref[...].astype(jnp.float32) + proj + b_ref[...]      # residual in f32
    o_ref[...] = _layer_norm_f32(s, g_ref[...], beta_ref[...]).astype(o_ref.dtype)


def _proj_add_ln(ctx2d, res2d, w, b, g, beta, *, tile_m):
    m, e = ctx2d.shape
    isz = ctx2d.dtype.itemsize
    wisz = w.dtype.itemsize
    tm = _row_tile(m, tile_m, isz)
    gm = pl.cdiv(m, tm)
    row = lambda i: (i, 0)
    inv = lambda i: (0, 0)
    vmem_est = (4 * tm * e * isz + e * e * wisz + 3 * e * 4
                + 2 * tm * e * isz + 2 * tm * e * 4)
    cost = pl.CostEstimate(
        flops=2 * m * e * e + 10 * m * e, transcendentals=m,
        bytes_accessed=3 * _nbytes((m, e), ctx2d.dtype) + e * e * wisz + 12 * e)
    return pl.pallas_call(
        _proj_add_ln_kernel,
        out_shape=jax.ShapeDtypeStruct((m, e), ctx2d.dtype),
        grid_spec=pltpu.PrefetchScalarGridSpec(
            num_scalar_prefetch=0, grid=(gm,),
            in_specs=[pl.BlockSpec((tm, e), row),
                      pl.BlockSpec((tm, e), row),
                      _spec((e, e), inv, 1),
                      _spec((1, e), inv, 1),
                      _spec((1, e), inv, 1),
                      _spec((1, e), inv, 1)],
            out_specs=pl.BlockSpec((tm, e), row)),
        compiler_params=_compiler_params(vmem_est, ("parallel",)),
        cost_estimate=cost,
    )(ctx2d, res2d, w, b, g, beta)


# ----------------------------- kernel 4: FFN + residual + LayerNorm2 ----------

def _ffn_add_ln_kernel(x_ref, w1_ref, b1_ref, w2_ref, b2_ref, g_ref, beta_ref,
                       o_ref, acc_ref):
    kj = pl.program_id(1)

    @pl.when(kj == 0)
    def _():
        acc_ref[...] = jnp.zeros(acc_ref.shape, acc_ref.dtype)

    x = x_ref[...]
    h = jnp.dot(x, w1_ref[...], preferred_element_type=jnp.float32)
    h = jnp.maximum(h + b1_ref[...], 0.0)             # bias + ReLU in f32 (VPU)
    # Deliberate: downcast the f32 ReLU intermediate to the weight dtype (bf16 when
    # compute_dtype=bf16) for the second MXU pass; accumulation stays f32 in VMEM.
    acc_ref[...] += jnp.dot(h.astype(w2_ref.dtype), w2_ref[...],
                            preferred_element_type=jnp.float32)

    @pl.when(kj == pl.num_programs(1) - 1)
    def _():
        s = x.astype(jnp.float32) + acc_ref[...] + b2_ref[...]   # residual in f32
        o_ref[...] = _layer_norm_f32(s, g_ref[...], beta_ref[...]).astype(o_ref.dtype)


def _ffn_add_ln(x2d, w1, b1, w2, b2, g, beta, *, tile_m, ff_tile, out_dtype):
    m, e = x2d.shape
    f = w1.shape[1]
    isz = x2d.dtype.itemsize
    wisz = w1.dtype.itemsize
    tm = _row_tile(m, tile_m, isz)
    tf = _pick_ff_tile(f, ff_tile)
    gm, gf = pl.cdiv(m, tm), f // tf
    wbuf = 1 if gf == 1 else None      # single-buffer the FFN weights only if invariant
    row = lambda i, j: (i, 0)
    vmem_est = (2 * tm * e * isz
                + (2 if gf > 1 else 1) * (2 * e * tf * wisz + tf * 4) + 3 * e * 4
                + 2 * tm * e * jnp.dtype(out_dtype).itemsize
                + tm * e * 4 + tm * tf * 4 + tm * e * 4)
    cost = pl.CostEstimate(
        flops=4 * m * e * f + 10 * m * e, transcendentals=m,
        bytes_accessed=2 * _nbytes((m, e), x2d.dtype) + 2 * e * f * wisz + (f + 3 * e) * 4)
    return pl.pallas_call(
        _ffn_add_ln_kernel,
        out_shape=jax.ShapeDtypeStruct((m, e), out_dtype),
        grid_spec=pltpu.PrefetchScalarGridSpec(
            num_scalar_prefetch=0, grid=(gm, gf),
            in_specs=[pl.BlockSpec((tm, e), row),
                      _spec((e, tf), lambda i, j: (0, j), wbuf),
                      _spec((1, tf), lambda i, j: (0, j), wbuf),
                      _spec((tf, e), lambda i, j: (j, 0), wbuf),
                      _spec((1, e), lambda i, j: (0, 0), 1),
                      _spec((1, e), lambda i, j: (0, 0), 1),
                      _spec((1, e), lambda i, j: (0, 0), 1)],
            out_specs=pl.BlockSpec((tm, e), row),
            scratch_shapes=[pltpu.VMEM((tm, e), jnp.float32)]),
        compiler_params=_compiler_params(vmem_est, ("parallel", "arbitrary")),
        cost_estimate=cost,
    )(x2d, w1, b1, w2, b2, g, beta)


# ----------------------------- full encoder layer -----------------------------

def prepare_params(params, compute_dtype=jnp.float32):
    """One-time parameter prep (hoisted out of the forward): cast matmul weights to the
    MXU compute dtype, keep bias / LayerNorm params in f32 as (1, dim) rows."""
    cd = jnp.dtype(compute_dtype)
    prepped = {}
    for k in ("wq", "wk", "wv", "wo", "w1", "w2"):
        prepped[k] = jnp.asarray(params[k], cd)
    for k in ("bq", "bk", "bv", "bo", "b1", "b2", "g1", "beta1", "g2", "beta2"):
        v = jnp.asarray(params[k], jnp.float32)
        prepped[k] = v.reshape(1, v.shape[-1])
    return prepped


def transformer_encoder_layer(x, prepped, *, num_heads, compute_dtype=jnp.float32,
                              tile_m=256, seq_tile=256, ff_tile=2048):
    """Eval-mode forward of the PyTorch TransformerEncoderLayer (dropout == identity,
    mask=None).  `prepped` must come from prepare_params(params, compute_dtype)."""
    b, s, e = x.shape
    assert e % num_heads == 0
    m = b * s
    cd = jnp.dtype(compute_dtype)

    x2d = x.reshape(m, e).astype(cd)                  # single activation cast

    # 1) Q/K/V projections (x read once; weights single-buffered).
    q2d, k2d, v2d = _qkv_proj(x2d, prepped["wq"], prepped["wk"], prepped["wv"],
                              prepped["bq"], prepped["bk"], prepped["bv"],
                              tile_m=tile_m)

    # 2) Flash attention on (B,S,E) views (free reshapes, no head transposes); ctx is
    #    written directly back in (B,S,E) layout.
    ctx = _attention(q2d.reshape(b, s, e), k2d.reshape(b, s, e), v2d.reshape(b, s, e),
                     num_heads=num_heads, seq_tile=seq_tile)

    # 3) out-projection + residual + LayerNorm1.
    x1 = _proj_add_ln(ctx.reshape(m, e), x2d, prepped["wo"], prepped["bo"],
                      prepped["g1"], prepped["beta1"], tile_m=tile_m)

    # 4) FFN (hidden axis reduction-tiled, f32 accumulator) + residual + LayerNorm2.
    out2d = _ffn_add_ln(x1, prepped["w1"], prepped["b1"], prepped["w2"], prepped["b2"],
                        prepped["g2"], prepped["beta2"],
                        tile_m=tile_m, ff_tile=ff_tile, out_dtype=x.dtype)
    return out2d.reshape(b, s, e)


# ----------------------------- reference + test --------------------------------

def _reference(x, params, *, num_heads):
    b, s, e = x.shape
    h = num_heads
    d = e // h
    hp = jax.lax.Precision.HIGHEST

    def lin(t, w, bb):
        return jnp.dot(t, w, precision=hp) + bb

    def ln(t, g, bb):
        mu = jnp.mean(t, axis=-1, keepdims=True)
        var = jnp.mean((t - mu) ** 2, axis=-1, keepdims=True)
        return (t - mu) / jnp.sqrt(var + _LN_EPS) * g + bb

    q = lin(x, params["wq"], params["bq"]).reshape(b, s, h, d).transpose(0, 2, 1, 3)
    k = lin(x, params["wk"], params["bk"]).reshape(b, s, h, d).transpose(0, 2, 1, 3)
    v = lin(x, params["wv"], params["bv"]).reshape(b, s, h, d).transpose(0, 2, 1, 3)
    scores = jnp.einsum("bhqd,bhkd->bhqk", q, k, precision=hp) / math.sqrt(d)
    attn = jax.nn.softmax(scores, axis=-1)
    ctx = jnp.einsum("bhqk,bhkd->bhqd", attn, v, precision=hp)
    ctx = ctx.transpose(0, 2, 1, 3).reshape(b, s, e)
    x1 = ln(x + lin(ctx, params["wo"], params["bo"]), params["g1"], params["beta1"])
    ff = lin(jnp.maximum(lin(x1, params["w1"], params["b1"]), 0.0),
             params["w2"], params["b2"])
    return ln(x1 + ff, params["g2"], params["beta2"])


def _init_params(key, embed_dim, ff_dim):
    ks = jax.random.split(key, 16)

    def linear_init(kw, kb, fan_in, fan_out):
        bound = 1.0 / math.sqrt(fan_in)              # torch nn.Linear init, pre-transposed
        w = jax.random.uniform(kw, (fan_in, fan_out), jnp.float32, -bound, bound)
        b = jax.random.uniform(kb, (fan_out,), jnp.float32, -bound, bound)
        return w, b

    wq, bq = linear_init(ks[0], ks[1], embed_dim, embed_dim)
    wk, bk = linear_init(ks[2], ks[3], embed_dim, embed_dim)
    wv, bv = linear_init(ks[4], ks[5], embed_dim, embed_dim)
    wo, bo = linear_init(ks[6], ks[7], embed_dim, embed_dim)
    w1, b1 = linear_init(ks[8], ks[9], embed_dim, ff_dim)
    w2, b2 = linear_init(ks[10], ks[11], ff_dim, embed_dim)
    g1 = 1.0 + 0.1 * jax.random.normal(ks[12], (embed_dim,), jnp.float32)
    beta1 = 0.1 * jax.random.normal(ks[13], (embed_dim,), jnp.float32)
    g2 = 1.0 + 0.1 * jax.random.normal(ks[14], (embed_dim,), jnp.float32)
    beta2 = 0.1 * jax.random.normal(ks[15], (embed_dim,), jnp.float32)
    return dict(wq=wq, bq=bq, wk=wk, bk=bk, wv=wv, bv=bv, wo=wo, bo=bo,
                w1=w1, b1=b1, w2=w2, b2=b2,
                g1=g1, beta1=beta1, g2=g2, beta2=beta2)


if __name__ == "__main__":
    batch, seq, embed_dim, num_heads, ff_dim = 2, 16, 32, 4, 64

    key = jax.random.PRNGKey(0)
    kx, kp = jax.random.split(key)
    x = jax.random.normal(kx, (batch, seq, embed_dim), dtype=jnp.float32)
    params = _init_params(kp, embed_dim, ff_dim)

    ref = _reference(x, params, num_heads=num_heads)

    # --- f32 compute, default (large) tiles.
    prep32 = prepare_params(params, jnp.float32)
    fwd = jax.jit(functools.partial(transformer_encoder_layer, num_heads=num_heads,
                                    compute_dtype=jnp.float32))
    out = fwd(x, prep32)
    jax.block_until_ready(out)
    assert out.shape == (batch, seq, embed_dim)
    assert jnp.allclose(out, ref, atol=1e-2, rtol=1e-2), \
        float(jnp.max(jnp.abs(out - ref)))

    # --- f32, small tiles: exercises the row grid and the online-softmax accumulation
    #     across multiple Q/KV tiles (flash path).
    fwd_small = jax.jit(functools.partial(transformer_encoder_layer, num_heads=num_heads,
                                          compute_dtype=jnp.float32,
                                          tile_m=8, seq_tile=8))
    out_s = fwd_small(x, prep32)
    jax.block_until_ready(out_s)
    assert jnp.allclose(out_s, ref, atol=1e-2, rtol=1e-2), \
        float(jnp.max(jnp.abs(out_s - ref)))

    # --- bf16 compute (MXU-native), f32 accumulate + f32 element-wise math.
    prep16 = prepare_params(params, jnp.bfloat16)
    fwd_bf16 = jax.jit(functools.partial(transformer_encoder_layer, num_heads=num_heads,
                                         compute_dtype=jnp.bfloat16))
    out_bf16 = fwd_bf16(x, prep16)
    jax.block_until_ready(out_bf16)
    assert jnp.allclose(out_bf16.astype(jnp.float32), ref, atol=0.25, rtol=0.1), \
        float(jnp.max(jnp.abs(out_bf16.astype(jnp.float32) - ref)))

    print("KERNEL_OK")
</pallas_src>

<mosaic_0001>
module attributes {stable_mosaic.version = 11 : i64} {
  func.func @_proj_add_ln_kernel(%arg0: i32, %arg1: memref<32x32xf32, #tpu.memory_space<vmem>>, %arg2: memref<32x32xf32, #tpu.memory_space<vmem>>, %arg3: memref<32x32xf32, #tpu.memory_space<vmem>>, %arg4: memref<1x32xf32, #tpu.memory_space<vmem>>, %arg5: memref<1x32xf32, #tpu.memory_space<vmem>>, %arg6: memref<1x32xf32, #tpu.memory_space<vmem>>, %arg7: memref<32x32xf32, #tpu.memory_space<vmem>>) attributes {dimension_semantics = [#tpu.dimension_semantics<parallel>], iteration_bounds = array<i64: 1>, scalar_prefetch = 0 : i64, scratch_operands = 0 : i64, tpu.core_type = #tpu.core_type<tc>, window_params = [{transform_indices = @transform_0, window_bounds = array<i64: 32, 32>}, {transform_indices = @transform_1, window_bounds = array<i64: 32, 32>}, {pipeline_mode = #tpu.pipeline_mode<synchronous>, transform_indices = @transform_2, window_bounds = array<i64: 32, 32>}, {pipeline_mode = #tpu.pipeline_mode<synchronous>, transform_indices = @transform_3, window_bounds = array<i64: 1, 32>}, {pipeline_mode = #tpu.pipeline_mode<synchronous>, transform_indices = @transform_4, window_bounds = array<i64: 1, 32>}, {pipeline_mode = #tpu.pipeline_mode<synchronous>, transform_indices = @transform_5, window_bounds = array<i64: 1, 32>}, {transform_indices = @transform_6, window_bounds = array<i64: 32, 32>}]} {
    %c0 = arith.constant 0 : index
    %c0_0 = arith.constant 0 : index
    %0 = vector.load %arg1[%c0, %c0_0] : memref<32x32xf32, #tpu.memory_space<vmem>>, vector<32x32xf32>
    %c0_1 = arith.constant 0 : index
    %c0_2 = arith.constant 0 : index
    %1 = vector.load %arg3[%c0_1, %c0_2] : memref<32x32xf32, #tpu.memory_space<vmem>>, vector<32x32xf32>
    %cst = arith.constant dense<0.000000e+00> : vector<32x32xf32>
    %2 = tpu.matmul %0, %1, %cst {dimension_numbers = #tpu.dot_dimension_numbers<[1], [0], [0], [1], [0, 0, 1, 1], [], []>} : vector<32x32xf32>, vector<32x32xf32>, vector<32x32xf32> -> vector<32x32xf32>
    %c0_3 = arith.constant 0 : index
    %c0_4 = arith.constant 0 : index
    %3 = vector.load %arg2[%c0_3, %c0_4] : memref<32x32xf32, #tpu.memory_space<vmem>>, vector<32x32xf32>
    %4 = arith.addf %3, %2 : vector<32x32xf32>
    %c0_5 = arith.constant 0 : index
    %c0_6 = arith.constant 0 : index
    %5 = vector.load %arg4[%c0_5, %c0_6] : memref<1x32xf32, #tpu.memory_space<vmem>>, vector<1x32xf32>
    %6 = vector.broadcast %5 : vector<1x32xf32> to vector<32x32xf32>
    %7 = arith.addf %4, %6 : vector<32x32xf32>
    %c0_7 = arith.constant 0 : index
    %c0_8 = arith.constant 0 : index
    %8 = vector.load %arg5[%c0_7, %c0_8] : memref<1x32xf32, #tpu.memory_space<vmem>>, vector<1x32xf32>
    %c0_9 = arith.constant 0 : index
    %c0_10 = arith.constant 0 : index
    %9 = vector.load %arg6[%c0_9, %c0_10] : memref<1x32xf32, #tpu.memory_space<vmem>>, vector<1x32xf32>
    %cst_11 = arith.constant dense<0.000000e+00> : vector<32xf32>
    %10 = vector.multi_reduction <add>, %7, %cst_11 [1] : vector<32x32xf32> to vector<32xf32>
    %11 = vector.shape_cast %10 : vector<32xf32> to vector<32x1xf32>
    %cst_12 = arith.constant 3.200000e+01 : f32
    %12 = vector.broadcast %cst_12 : f32 to vector<32x1xf32>
    %13 = arith.divf %11, %12 : vector<32x1xf32>
    %14 = vector.broadcast %13 : vector<32x1xf32> to vector<32x32xf32>
    %15 = arith.subf %7, %14 : vector<32x32xf32>
    %16 = arith.mulf %15, %15 : vector<32x32xf32>
    %cst_13 = arith.constant dense<0.000000e+00> : vector<32xf32>
    %17 = vector.multi_reduction <add>, %16, %cst_13 [1] : vector<32x32xf32> to vector<32xf32>
    %18 = vector.shape_cast %17 : vector<32xf32> to vector<32x1xf32>
    %cst_14 = arith.constant 3.200000e+01 : f32
    %19 = vector.broadcast %cst_14 : f32 to vector<32x1xf32>
    %20 = arith.divf %18, %19 : vector<32x1xf32>
    %cst_15 = arith.constant 9.99999974E-6 : f32
    %21 = vector.broadcast %cst_15 : f32 to vector<32x1xf32>
    %22 = arith.addf %20, %21 : vector<32x1xf32>
    %23 = math.rsqrt %22 : vector<32x1xf32>
    %24 = vector.broadcast %23 : vector<32x1xf32> to vector<32x32xf32>
    %25 = arith.mulf %15, %24 : vector<32x32xf32>
    %26 = vector.broadcast %8 : vector<1x32xf32> to vector<32x32xf32>
    %27 = arith.mulf %25, %26 : vector<32x32xf32>
    %28 = vector.broadcast %9 : vector<1x32xf32> to vector<32x32xf32>
    %29 = arith.addf %27, %28 : vector<32x32xf32>
    %c0_16 = arith.constant 0 : index
    %c0_17 = arith.constant 0 : index
    %30 = vector.load %arg7[%c0_16, %c0_17] : memref<32x32xf32, #tpu.memory_space<vmem>>, vector<32x32xf32>
    tpu.vector_store %arg7[%c0_16, %c0_17], %29 {strides = array<i32>} : memref<32x32xf32, #tpu.memory_space<vmem>>, vector<32x32xf32>,
    return
  }
  func.func @transform_0(%arg0: i32) -> (i32, i32) {
    %c0_i32 = arith.constant 0 : i32
    %c0_i32_0 = arith.constant 0 : i32
    return %arg0, %c0_i32 : i32, i32
  }
  func.func @transform_1(%arg0: i32) -> (i32, i32) {
    %c0_i32 = arith.constant 0 : i32
    %c0_i32_0 = arith.constant 0 : i32
    return %arg0, %c0_i32 : i32, i32
  }
  func.func @transform_2(%arg0: i32) -> (i32, i32) {
    %c0_i32 = arith.constant 0 : i32
    %c0_i32_0 = arith.constant 0 : i32
    %c0_i32_1 = arith.constant 0 : i32
    return %c0_i32, %c0_i32_0 : i32, i32
  }
  func.func @transform_3(%arg0: i32) -> (i32, i32) {
    %c0_i32 = arith.constant 0 : i32
    %c0_i32_0 = arith.constant 0 : i32
    %c0_i32_1 = arith.constant 0 : i32
    return %c0_i32, %c0_i32_0 : i32, i32
  }
  func.func @transform_4(%arg0: i32) -> (i32, i32) {
    %c0_i32 = arith.constant 0 : i32
    %c0_i32_0 = arith.constant 0 : i32
    %c0_i32_1 = arith.constant 0 : i32
    return %c0_i32, %c0_i32_0 : i32, i32
  }
  func.func @transform_5(%arg0: i32) -> (i32, i32) {
    %c0_i32 = arith.constant 0 : i32
    %c0_i32_0 = arith.constant 0 : i32
    %c0_i32_1 = arith.constant 0 : i32
    return %c0_i32, %c0_i32_0 : i32, i32
  }
  func.func @transform_6(%arg0: i32) -> (i32, i32) {
    %c0_i32 = arith.constant 0 : i32
    %c0_i32_0 = arith.constant 0 : i32
    return %arg0, %c0_i32 : i32, i32
  }
}

module attributes {stable_mosaic.version = 11 : i64} {
  func.func @_qkv_kernel(%arg0: i32, %arg1: memref<32x32xf32, #tpu.memory_space<vmem>>, %arg2: memref<32x32xf32, #tpu.memory_space<vmem>>, %arg3: memref<32x32xf32, #tpu.memory_space<vmem>>, %arg4: memref<32x32xf32, #tpu.memory_space<vmem>>, %arg5: memref<1x32xf32, #tpu.memory_space<vmem>>, %arg6: memref<1x32xf32, #tpu.memory_space<vmem>>, %arg7: memref<1x32xf32, #tpu.memory_space<vmem>>, %arg8: memref<32x32xf32, #tpu.memory_space<vmem>>, %arg9: memref<32x32xf32, #tpu.memory_space<vmem>>, %arg10: memref<32x32xf32, #tpu.memory_space<vmem>>) attributes {dimension_semantics = [#tpu.dimension_semantics<parallel>], iteration_bounds = array<i64: 1>, scalar_prefetch = 0 : i64, scratch_operands = 0 : i64, tpu.core_type = #tpu.core_type<tc>, window_params = [{transform_indices = @transform_0, window_bounds = array<i64: 32, 32>}, {pipeline_mode = #tpu.pipeline_mode<synchronous>, transform_indices = @transform_1, window_bounds = array<i64: 32, 32>}, {pipeline_mode = #tpu.pipeline_mode<synchronous>, transform_indices = @transform_2, window_bounds = array<i64: 32, 32>}, {pipeline_mode = #tpu.pipeline_mode<synchronous>, transform_indices = @transform_3, window_bounds = array<i64: 32, 32>}, {pipeline_mode = #tpu.pipeline_mode<synchronous>, transform_indices = @transform_4, window_bounds = array<i64: 1, 32>}, {pipeline_mode = #tpu.pipeline_mode<synchronous>, transform_indices = @transform_5, window_bounds = array<i64: 1, 32>}, {pipeline_mode = #tpu.pipeline_mode<synchronous>, transform_indices = @transform_6, window_bounds = array<i64: 1, 32>}, {transform_indices = @transform_7, window_bounds = array<i64: 32, 32>}, {transform_indices = @transform_8, window_bounds = array<i64: 32, 32>}, {transform_indices = @transform_9, window_bounds = array<i64: 32, 32>}]} {
    %c0 = arith.constant 0 : index
    %c0_0 = arith.constant 0 : index
    %0 = vector.load %arg1[%c0, %c0_0] : memref<32x32xf32, #tpu.memory_space<vmem>>, vector<32x32xf32>
    %c0_1 = arith.constant 0 : index
    %c0_2 = arith.constant 0 : index
    %1 = vector.load %arg2[%c0_1, %c0_2] : memref<32x32xf32, #tpu.memory_space<vmem>>, vector<32x32xf32>
    %cst = arith.constant dense<0.000000e+00> : vector<32x32xf32>
    %2 = tpu.matmul %0, %1, %cst {dimension_numbers = #tpu.dot_dimension_numbers<[1], [0], [0], [1], [0, 0, 1, 1], [], []>} : vector<32x32xf32>, vector<32x32xf32>, vector<32x32xf32> -> vector<32x32xf32>
    %c0_3 = arith.constant 0 : index
    %c0_4 = arith.constant 0 : index
    %3 = vector.load %arg5[%c0_3, %c0_4] : memref<1x32xf32, #tpu.memory_space<vmem>>, vector<1x32xf32>
    %4 = vector.broadcast %3 : vector<1x32xf32> to vector<32x32xf32>
    %5 = arith.addf %2, %4 : vector<32x32xf32>
    %c0_5 = arith.constant 0 : index
    %c0_6 = arith.constant 0 : index
    %6 = vector.load %arg3[%c0_5, %c0_6] : memref<32x32xf32, #tpu.memory_space<vmem>>, vector<32x32xf32>
    %cst_7 = arith.constant dense<0.000000e+00> : vector<32x32xf32>
    %7 = tpu.matmul %0, %6, %cst_7 {dimension_numbers = #tpu.dot_dimension_numbers<[1], [0], [0], [1], [0, 0, 1, 1], [], []>} : vector<32x32xf32>, vector<32x32xf32>, vector<32x32xf32> -> vector<32x32xf32>
    %c0_8 = arith.constant 0 : index
    %c0_9 = arith.constant 0 : index
    %8 = vector.load %arg6[%c0_8, %c0_9] : memref<1x32xf32, #tpu.memory_space<vmem>>, vector<1x32xf32>
    %9 = vector.broadcast %8 : vector<1x32xf32> to vector<32x32xf32>
    %10 = arith.addf %7, %9 : vector<32x32xf32>
    %c0_10 = arith.constant 0 : index
    %c0_11 = arith.constant 0 : index
    %11 = vector.load %arg4[%c0_10, %c0_11] : memref<32x32xf32, #tpu.memory_space<vmem>>, vector<32x32xf32>
    %cst_12 = arith.constant dense<0.000000e+00> : vector<32x32xf32>
    %12 = tpu.matmul %0, %11, %cst_12 {dimension_numbers = #tpu.dot_dimension_numbers<[1], [0], [0], [1], [0, 0, 1, 1], [], []>} : vector<32x32xf32>, vector<32x32xf32>, vector<32x32xf32> -> vector<32x32xf32>
    %c0_13 = arith.constant 0 : index
    %c0_14 = arith.constant 0 : index
    %13 = vector.load %arg7[%c0_13, %c0_14] : memref<1x32xf32, #tpu.memory_space<vmem>>, vector<1x32xf32>
    %14 = vector.broadcast %13 : vector<1x32xf32> to vector<32x32xf32>
    %15 = arith.addf %12, %14 : vector<32x32xf32>
    %c0_15 = arith.constant 0 : index
    %c0_16 = arith.constant 0 : index
    %16 = vector.load %arg8[%c0_15, %c0_16] : memref<32x32xf32, #tpu.memory_space<vmem>>, vector<32x32xf32>
    tpu.vector_store %arg8[%c0_15, %c0_16], %5 {strides = array<i32>} : memref<32x32xf32, #tpu.memory_space<vmem>>, vector<32x32xf32>,
    %c0_17 = arith.constant 0 : index
    %c0_18 = arith.constant 0 : index
    %17 = vector.load %arg9[%c0_17, %c0_18] : memref<32x32xf32, #tpu.memory_space<vmem>>, vector<32x32xf32>
    tpu.vector_store %arg9[%c0_17, %c0_18], %10 {strides = array<i32>} : memref<32x32xf32, #tpu.memory_space<vmem>>, vector<32x32xf32>,
    %c0_19 = arith.constant 0 : index
    %c0_20 = arith.constant 0 : index
    %18 = vector.load %arg10[%c0_19, %c0_20] : memref<32x32xf32, #tpu.memory_space<vmem>>, vector<32x32xf32>
    tpu.vector_store %arg10[%c0_19, %c0_20], %15 {strides = array<i32>} : memref<32x32xf32, #tpu.memory_space<vmem>>, vector<32x32xf32>,
    return
  }
  func.func @transform_0(%arg0: i32) -> (i32, i32) {
    %c0_i32 = arith.constant 0 : i32
    %c0_i32_0 = arith.constant 0 : i32
    return %arg0, %c0_i32 : i32, i32
  }
  func.func @transform_1(%arg0: i32) -> (i32, i32) {
    %c0_i32 = arith.constant 0 : i32
    %c0_i32_0 = arith.constant 0 : i32
    %c0_i32_1 = arith.constant 0 : i32
    return %c0_i32, %c0_i32_0 : i32, i32
  }
  func.func @transform_2(%arg0: i32) -> (i32, i32) {
    %c0_i32 = arith.constant 0 : i32
    %c0_i32_0 = arith.constant 0 : i32
    %c0_i32_1 = arith.constant 0 : i32
    return %c0_i32, %c0_i32_0 : i32, i32
  }
  func.func @transform_3(%arg0: i32) -> (i32, i32) {
    %c0_i32 = arith.constant 0 : i32
    %c0_i32_0 = arith.constant 0 : i32
    %c0_i32_1 = arith.constant 0 : i32
    return %c0_i32, %c0_i32_0 : i32, i32
  }
  func.func @transform_4(%arg0: i32) -> (i32, i32) {
    %c0_i32 = arith.constant 0 : i32
    %c0_i32_0 = arith.constant 0 : i32
    %c0_i32_1 = arith.constant 0 : i32
    return %c0_i32, %c0_i32_0 : i32, i32
  }
  func.func @transform_5(%arg0: i32) -> (i32, i32) {
    %c0_i32 = arith.constant 0 : i32
    %c0_i32_0 = arith.constant 0 : i32
    %c0_i32_1 = arith.constant 0 : i32
    return %c0_i32, %c0_i32_0 : i32, i32
  }
  func.func @transform_6(%arg0: i32) -> (i32, i32) {
    %c0_i32 = arith.constant 0 : i32
    %c0_i32_0 = arith.constant 0 : i32
    %c0_i32_1 = arith.constant 0 : i32
    return %c0_i32, %c0_i32_0 : i32, i32
  }
  func.func @transform_7(%arg0: i32) -> (i32, i32) {
    %c0_i32 = arith.constant 0 : i32
    %c0_i32_0 = arith.constant 0 : i32
    return %arg0, %c0_i32 : i32, i32
  }
  func.func @transform_8(%arg0: i32) -> (i32, i32) {
    %c0_i32 = arith.constant 0 : i32
    %c0_i32_0 = arith.constant 0 : i32
    return %arg0, %c0_i32 : i32, i32
  }
  func.func @transform_9(%arg0: i32) -> (i32, i32) {
    %c0_i32 = arith.constant 0 : i32
    %c0_i32_0 = arith.constant 0 : i32
    return %arg0, %c0_i32 : i32, i32
  }
}

module attributes {stable_mosaic.version = 11 : i64} {
  func.func @_attn_kernel(%arg0: i32, %arg1: i32, %arg2: i32, %arg3: i32, %arg4: memref<1x16x32xf32, #tpu.memory_space<vmem>>, %arg5: memref<1x16x32xf32, #tpu.memory_space<vmem>>, %arg6: memref<1x16x32xf32, #tpu.memory_space<vmem>>, %arg7: memref<1x16x32xf32, #tpu.memory_space<vmem>>, %arg8: memref<4x16x1xf32, #tpu.memory_space<vmem>>, %arg9: memref<4x16x1xf32, #tpu.memory_space<vmem>>, %arg10: memref<4x16x8xf32, #tpu.memory_space<vmem>>) attributes {dimension_semantics = [#tpu.dimension_semantics<parallel>, #tpu.dimension_semantics<parallel>, #tpu.dimension_semantics<parallel>, #tpu.dimension_semantics<arbitrary>], iteration_bounds = array<i64: 2, 1, 1, 1>, scalar_prefetch = 0 : i64, scratch_operands = 3 : i64, tpu.core_type = #tpu.core_type<tc>, window_params = [{transform_indices = @transform_0, window_bounds = array<i64: 1, 16, 32>}, {transform_indices = @transform_1, window_bounds = array<i64: 1, 16, 32>}, {transform_indices = @transform_2, window_bounds = array<i64: 1, 16, 32>}, {transform_indices = @transform_3, window_bounds = array<i64: 1, 16, 32>}]} {
    %c0_i32 = arith.constant 0 : i32
    %0 = arith.cmpi eq, %arg3, %c0_i32 : i32
    %1 = arith.extui %0 : i1 to i32
    %c0_i32_0 = arith.constant 0 : i32
    %2 = arith.cmpi ne, %1, %c0_i32_0 : i32
    scf.if %2 {
      %cst_123 = arith.constant 0xFF800000 : f32
      %166 = vector.broadcast %cst_123 : f32 to vector<4x16x1xf32>
      %c0_124 = arith.constant 0 : index
      %c0_125 = arith.constant 0 : index
      %c0_126 = arith.constant 0 : index
      %167 = vector.load %arg8[%c0_124, %c0_125, %c0_126] : memref<4x16x1xf32, #tpu.memory_space<vmem>>, vector<4x16x1xf32>
      tpu.vector_store %arg8[%c0_124, %c0_125, %c0_126], %166 {strides = array<i32>} : memref<4x16x1xf32, #tpu.memory_space<vmem>>, vector<4x16x1xf32>,
      %cst_127 = arith.constant 0.000000e+00 : f32
      %168 = vector.broadcast %cst_127 : f32 to vector<4x16x1xf32>
      %c0_128 = arith.constant 0 : index
      %c0_129 = arith.constant 0 : index
      %c0_130 = arith.constant 0 : index
      %169 = vector.load %arg9[%c0_128, %c0_129, %c0_130] : memref<4x16x1xf32, #tpu.memory_space<vmem>>, vector<4x16x1xf32>
      tpu.vector_store %arg9[%c0_128, %c0_129, %c0_130], %168 {strides = array<i32>} : memref<4x16x1xf32, #tpu.memory_space<vmem>>, vector<4x16x1xf32>,
      %cst_131 = arith.constant 0.000000e+00 : f32
      %170 = vector.broadcast %cst_131 : f32 to vector<4x16x8xf32>
      %c0_132 = arith.constant 0 : index
      %c0_133 = arith.constant 0 : index
      %c0_134 = arith.constant 0 : index
      %171 = vector.load %arg10[%c0_132, %c0_133, %c0_134] : memref<4x16x8xf32, #tpu.memory_space<vmem>>, vector<4x16x8xf32>
      tpu.vector_store %arg10[%c0_132, %c0_133, %c0_134], %170 {strides = array<i32>} : memref<4x16x8xf32, #tpu.memory_space<vmem>>, vector<4x16x8xf32>,
    } else {
    }
    %c0 = arith.constant 0 : index
    %c0_1 = arith.constant 0 : index
    %c0_2 = arith.constant 0 : index
    %3 = vector.load %arg4[%c0, %c0_1, %c0_2] : memref<1x16x32xf32, #tpu.memory_space<vmem>>, vector<1x16x8xf32>
    %4 = vector.shape_cast %3 : vector<1x16x8xf32> to vector<16x8xf32>
    %c0_3 = arith.constant 0 : index
    %c0_4 = arith.constant 0 : index
    %c0_5 = arith.constant 0 : index
    %5 = vector.load %arg5[%c0_3, %c0_4, %c0_5] : memref<1x16x32xf32, #tpu.memory_space<vmem>>, vector<1x16x8xf32>
    %6 = vector.shape_cast %5 : vector<1x16x8xf32> to vector<16x8xf32>
    %cst = arith.constant dense<0.000000e+00> : vector<16x16xf32>
    %7 = tpu.matmul %4, %6, %cst {dimension_numbers = #tpu.dot_dimension_numbers<[1], [1], [0], [0], [0, 0, 1, 0], [], []>} : vector<16x8xf32>, vector<16x8xf32>, vector<16x16xf32> -> vector<16x16xf32>
    %cst_6 = arith.constant 0.353553385 : f32
    %8 = vector.broadcast %cst_6 : f32 to vector<16x16xf32>
    %9 = arith.mulf %7, %8 : vector<16x16xf32>
    %c0_7 = arith.constant 0 : index
    %c0_8 = arith.constant 0 : index
    %c0_9 = arith.constant 0 : index
    %10 = vector.load %arg8[%c0_7, %c0_8, %c0_9] : memref<4x16x1xf32, #tpu.memory_space<vmem>>, vector<1x16x1xf32>
    %11 = vector.shape_cast %10 : vector<1x16x1xf32> to vector<16x1xf32>
    %cst_10 = arith.constant dense<0xFF800000> : vector<16xf32>
    %12 = vector.multi_reduction <maximumf>, %9, %cst_10 [1] : vector<16x16xf32> to vector<16xf32>
    %13 = vector.shape_cast %12 : vector<16xf32> to vector<16x1xf32>
    %14 = arith.maximumf %11, %13 : vector<16x1xf32>
    %15 = arith.subf %11, %14 : vector<16x1xf32>
    %16 = math.exp %15 : vector<16x1xf32>
    %17 = vector.broadcast %14 : vector<16x1xf32> to vector<16x16xf32>
    %18 = arith.subf %9, %17 : vector<16x16xf32>
    %19 = math.exp %18 : vector<16x16xf32>
    %c0_11 = arith.constant 0 : index
    %c0_12 = arith.constant 0 : index
    %c0_13 = arith.constant 0 : index
    %20 = vector.load %arg9[%c0_11, %c0_12, %c0_13] : memref<4x16x1xf32, #tpu.memory_space<vmem>>, vector<1x16x1xf32>
    %21 = vector.shape_cast %20 : vector<1x16x1xf32> to vector<16x1xf32>
    %22 = arith.mulf %16, %21 : vector<16x1xf32>
    %cst_14 = arith.constant dense<0.000000e+00> : vector<16xf32>
    %23 = vector.multi_reduction <add>, %19, %cst_14 [1] : vector<16x16xf32> to vector<16xf32>
    %24 = vector.shape_cast %23 : vector<16xf32> to vector<16x1xf32>
    %25 = arith.addf %22, %24 : vector<16x1xf32>
    %c0_15 = arith.constant 0 : index
    %c0_16 = arith.constant 0 : index
    %c0_17 = arith.constant 0 : index
    %26 = vector.load %arg9[%c0_15, %c0_16, %c0_17] : memref<4x16x1xf32, #tpu.memory_space<vmem>>, vector<1x16x1xf32>
    %27 = vector.shape_cast %26 : vector<1x16x1xf32> to vector<16x1xf32>
    %28 = vector.shape_cast %25 : vector<16x1xf32> to vector<1x16x1xf32>
    tpu.vector_store %arg9[%c0_15, %c0_16, %c0_17], %28 {strides = array<i32>} : memref<4x16x1xf32, #tpu.memory_space<vmem>>, vector<1x16x1xf32>,
    %c0_18 = arith.constant 0 : index
    %c0_19 = arith.constant 0 : index
    %c0_20 = arith.constant 0 : index
    %29 = vector.load %arg10[%c0_18, %c0_19, %c0_20] : memref<4x16x8xf32, #tpu.memory_space<vmem>>, vector<1x16x8xf32>
    %30 = vector.shape_cast %29 : vector<1x16x8xf32> to vector<16x8xf32>
    %31 = vector.broadcast %16 : vector<16x1xf32> to vector<16x8xf32>
    %32 = arith.mulf %31, %30 : vector<16x8xf32>
    %c0_21 = arith.constant 0 : index
    %c0_22 = arith.constant 0 : index
    %c0_23 = arith.constant 0 : index
    %33 = vector.load %arg6[%c0_21, %c0_22, %c0_23] : memref<1x16x32xf32, #tpu.memory_space<vmem>>, vector<1x16x8xf32>
    %34 = vector.shape_cast %33 : vector<1x16x8xf32> to vector<16x8xf32>
    %cst_24 = arith.constant dense<0.000000e+00> : vector<16x8xf32>
    %35 = tpu.matmul %19, %34, %cst_24 {dimension_numbers = #tpu.dot_dimension_numbers<[1], [0], [0], [1], [0, 0, 1, 1], [], []>} : vector<16x16xf32>, vector<16x8xf32>, vector<16x8xf32> -> vector<16x8xf32>
    %36 = arith.addf %32, %35 : vector<16x8xf32>
    %c0_25 = arith.constant 0 : index
    %c0_26 = arith.constant 0 : index
    %c0_27 = arith.constant 0 : index
    %37 = vector.load %arg10[%c0_25, %c0_26, %c0_27] : memref<4x16x8xf32, #tpu.memory_space<vmem>>, vector<1x16x8xf32>
    %38 = vector.shape_cast %37 : vector<1x16x8xf32> to vector<16x8xf32>
    %39 = vector.shape_cast %36 : vector<16x8xf32> to vector<1x16x8xf32>
    tpu.vector_store %arg10[%c0_25, %c0_26, %c0_27], %39 {strides = array<i32>} : memref<4x16x8xf32, #tpu.memory_space<vmem>>, vector<1x16x8xf32>,
    %c0_28 = arith.constant 0 : index
    %c0_29 = arith.constant 0 : index
    %c0_30 = arith.constant 0 : index
    %40 = vector.load %arg8[%c0_28, %c0_29, %c0_30] : memref<4x16x1xf32, #tpu.memory_space<vmem>>, vector<1x16x1xf32>
    %41 = vector.shape_cast %40 : vector<1x16x1xf32> to vector<16x1xf32>
    %42 = vector.shape_cast %14 : vector<16x1xf32> to vector<1x16x1xf32>
    tpu.vector_store %arg8[%c0_28, %c0_29, %c0_30], %42 {strides = array<i32>} : memref<4x16x1xf32, #tpu.memory_space<vmem>>, vector<1x16x1xf32>,
    %c0_31 = arith.constant 0 : index
    %c0_32 = arith.constant 0 : index
    %c8 = arith.constant 8 : index
    %43 = vector.load %arg4[%c0_31, %c0_32, %c8] : memref<1x16x32xf32, #tpu.memory_space<vmem>>, vector<1x16x8xf32>
    %44 = vector.shape_cast %43 : vector<1x16x8xf32> to vector<16x8xf32>
    %c0_33 = arith.constant 0 : index
    %c0_34 = arith.constant 0 : index
    %c8_35 = arith.constant 8 : index
    %45 = vector.load %arg5[%c0_33, %c0_34, %c8_35] : memref<1x16x32xf32, #tpu.memory_space<vmem>>, vector<1x16x8xf32>
    %46 = vector.shape_cast %45 : vector<1x16x8xf32> to vector<16x8xf32>
    %cst_36 = arith.constant dense<0.000000e+00> : vector<16x16xf32>
    %47 = tpu.matmul %44, %46, %cst_36 {dimension_numbers = #tpu.dot_dimension_numbers<[1], [1], [0], [0], [0, 0, 1, 0], [], []>} : vector<16x8xf32>, vector<16x8xf32>, vector<16x16xf32> -> vector<16x16xf32>
    %cst_37 = arith.constant 0.353553385 : f32
    %48 = vector.broadcast %cst_37 : f32 to vector<16x16xf32>
    %49 = arith.mulf %47, %48 : vector<16x16xf32>
    %c1 = arith.constant 1 : index
    %c0_38 = arith.constant 0 : index
    %c0_39 = arith.constant 0 : index
    %50 = vector.load %arg8[%c1, %c0_38, %c0_39] : memref<4x16x1xf32, #tpu.memory_space<vmem>>, vector<1x16x1xf32>
    %51 = vector.shape_cast %50 : vector<1x16x1xf32> to vector<16x1xf32>
    %cst_40 = arith.constant dense<0xFF800000> : vector<16xf32>
    %52 = vector.multi_reduction <maximumf>, %49, %cst_40 [1] : vector<16x16xf32> to vector<16xf32>
    %53 = vector.shape_cast %52 : vector<16xf32> to vector<16x1xf32>
    %54 = arith.maximumf %51, %53 : vector<16x1xf32>
    %55 = arith.subf %51, %54 : vector<16x1xf32>
    %56 = math.exp %55 : vector<16x1xf32>
    %57 = vector.broadcast %54 : vector<16x1xf32> to vector<16x16xf32>
    %58 = arith.subf %49, %57 : vector<16x16xf32>
    %59 = math.exp %58 : vector<16x16xf32>
    %c1_41 = arith.constant 1 : index
    %c0_42 = arith.constant 0 : index
    %c0_43 = arith.constant 0 : index
    %60 = vector.load %arg9[%c1_41, %c0_42, %c0_43] : memref<4x16x1xf32, #tpu.memory_space<vmem>>, vector<1x16x1xf32>
    %61 = vector.shape_cast %60 : vector<1x16x1xf32> to vector<16x1xf32>
    %62 = arith.mulf %56, %61 : vector<16x1xf32>
    %cst_44 = arith.constant dense<0.000000e+00> : vector<16xf32>
    %63 = vector.multi_reduction <add>, %59, %cst_44 [1] : vector<16x16xf32> to vector<16xf32>
    %64 = vector.shape_cast %63 : vector<16xf32> to vector<16x1xf32>
    %65 = arith.addf %62, %64 : vector<16x1xf32>
    %c1_45 = arith.constant 1 : index
    %c0_46 = arith.constant 0 : index
    %c0_47 = arith.constant 0 : index
    %66 = vector.load %arg9[%c1_45, %c0_46, %c0_47] : memref<4x16x1xf32, #tpu.memory_space<vmem>>, vector<1x16x1xf32>
    %67 = vector.shape_cast %66 : vector<1x16x1xf32> to vector<16x1xf32>
    %68 = vector.shape_cast %65 : vector<16x1xf32> to vector<1x16x1xf32>
    tpu.vector_store %arg9[%c1_45, %c0_46, %c0_47], %68 {strides = array<i32>} : memref<4x16x1xf32, #tpu.memory_space<vmem>>, vector<1x16x1xf32>,
    %c1_48 = arith.constant 1 : index
    %c0_49 = arith.constant 0 : index
    %c0_50 = arith.constant 0 : index
    %69 = vector.load %arg10[%c1_48, %c0_49, %c0_50] : memref<4x16x8xf32, #tpu.memory_space<vmem>>, vector<1x16x8xf32>
    %70 = vector.shape_cast %69 : vector<1x16x8xf32> to vector<16x8xf32>
    %71 = vector.broadcast %56 : vector<16x1xf32> to vector<16x8xf32>
    %72 = arith.mulf %71, %70 : vector<16x8xf32>
    %c0_51 = arith.constant 0 : index
    %c0_52 = arith.constant 0 : index
    %c8_53 = arith.constant 8 : index
    %73 = vector.load %arg6[%c0_51, %c0_52, %c8_53] : memref<1x16x32xf32, #tpu.memory_space<vmem>>, vector<1x16x8xf32>
    %74 = vector.shape_cast %73 : vector<1x16x8xf32> to vector<16x8xf32>
    %cst_54 = arith.constant dense<0.000000e+00> : vector<16x8xf32>
    %75 = tpu.matmul %59, %74, %cst_54 {dimension_numbers = #tpu.dot_dimension_numbers<[1], [0], [0], [1], [0, 0, 1, 1], [], []>} : vector<16x16xf32>, vector<16x8xf32>, vector<16x8xf32> -> vector<16x8xf32>
    %76 = arith.addf %72, %75 : vector<16x8xf32>
    %c1_55 = arith.constant 1 : index
    %c0_56 = arith.constant 0 : index
    %c0_57 = arith.constant 0 : index
    %77 = vector.load %arg10[%c1_55, %c0_56, %c0_57] : memref<4x16x8xf32, #tpu.memory_space<vmem>>, vector<1x16x8xf32>
    %78 = vector.shape_cast %77 : vector<1x16x8xf32> to vector<16x8xf32>
    %79 = vector.shape_cast %76 : vector<16x8xf32> to vector<1x16x8xf32>
    tpu.vector_store %arg10[%c1_55, %c0_56, %c0_57], %79 {strides = array<i32>} : memref<4x16x8xf32, #tpu.memory_space<vmem>>, vector<1x16x8xf32>,
    %c1_58 = arith.constant 1 : index
    %c0_59 = arith.constant 0 : index
    %c0_60 = arith.constant 0 : index
    %80 = vector.load %arg8[%c1_58, %c0_59, %c0_60] : memref<4x16x1xf32, #tpu.memory_space<vmem>>, vector<1x16x1xf32>
    %81 = vector.shape_cast %80 : vector<1x16x1xf32> to vector<16x1xf32>
    %82 = vector.shape_cast %54 : vector<16x1xf32> to vector<1x16x1xf32>
    tpu.vector_store %arg8[%c1_58, %c0_59, %c0_60], %82 {strides = array<i32>} : memref<4x16x1xf32, #tpu.memory_space<vmem>>, vector<1x16x1xf32>,
    %c0_61 = arith.constant 0 : index
    %c0_62 = arith.constant 0 : index
    %c16 = arith.constant 16 : index
    %83 = vector.load %arg4[%c0_61, %c0_62, %c16] : memref<1x16x32xf32, #tpu.memory_space<vmem>>, vector<1x16x8xf32>
    %84 = vector.shape_cast %83 : vector<1x16x8xf32> to vector<16x8xf32>
    %c0_63 = arith.constant 0 : index
    %c0_64 = arith.constant 0 : index
    %c16_65 = arith.constant 16 : index
    %85 = vector.load %arg5[%c0_63, %c0_64, %c16_65] : memref<1x16x32xf32, #tpu.memory_space<vmem>>, vector<1x16x8xf32>
    %86 = vector.shape_cast %85 : vector<1x16x8xf32> to vector<16x8xf32>
    %cst_66 = arith.constant dense<0.000000e+00> : vector<16x16xf32>
    %87 = tpu.matmul %84, %86, %cst_66 {dimension_numbers = #tpu.dot_dimension_numbers<[1], [1], [0], [0], [0, 0, 1, 0], [], []>} : vector<16x8xf32>, vector<16x8xf32>, vector<16x16xf32> -> vector<16x16xf32>
    %cst_67 = arith.constant 0.353553385 : f32
    %88 = vector.broadcast %cst_67 : f32 to vector<16x16xf32>
    %89 = arith.mulf %87, %88 : vector<16x16xf32>
    %c2 = arith.constant 2 : index
    %c0_68 = arith.constant 0 : index
    %c0_69 = arith.constant 0 : index
    %90 = vector.load %arg8[%c2, %c0_68, %c0_69] : memref<4x16x1xf32, #tpu.memory_space<vmem>>, vector<1x16x1xf32>
    %91 = vector.shape_cast %90 : vector<1x16x1xf32> to vector<16x1xf32>
    %cst_70 = arith.constant dense<0xFF800000> : vector<16xf32>
    %92 = vector.multi_reduction <maximumf>, %89, %cst_70 [1] : vector<16x16xf32> to vector<16xf32>
    %93 = vector.shape_cast %92 : vector<16xf32> to vector<16x1xf32>
    %94 = arith.maximumf %91, %93 : vector<16x1xf32>
    %95 = arith.subf %91, %94 : vector<16x1xf32>
    %96 = math.exp %95 : vector<16x1xf32>
    %97 = vector.broadcast %94 : vector<16x1xf32> to vector<16x16xf32>
    %98 = arith.subf %89, %97 : vector<16x16xf32>
    %99 = math.exp %98 : vector<16x16xf32>
    %c2_71 = arith.constant 2 : index
    %c0_72 = arith.constant 0 : index
    %c0_73 = arith.constant 0 : index
    %100 = vector.load %arg9[%c2_71, %c0_72, %c0_73] : memref<4x16x1xf32, #tpu.memory_space<vmem>>, vector<1x16x1xf32>
    %101 = vector.shape_cast %100 : vector<1x16x1xf32> to vector<16x1xf32>
    %102 = arith.mulf %96, %101 : vector<16x1xf32>
    %cst_74 = arith.constant dense<0.000000e+00> : vector<16xf32>
    %103 = vector.multi_reduction <add>, %99, %cst_74 [1] : vector<16x16xf32> to vector<16xf32>
    %104 = vector.shape_cast %103 : vector<16xf32> to vector<16x1xf32>
    %105 = arith.addf %102, %104 : vector<16x1xf32>
    %c2_75 = arith.constant 2 : index
    %c0_76 = arith.constant 0 : index
    %c0_77 = arith.constant 0 : index
    %106 = vector.load %arg9[%c2_75, %c0_76, %c0_77] : memref<4x16x1xf32, #tpu.memory_space<vmem>>, vector<1x16x1xf32>
    %107 = vector.shape_cast %106 : vector<1x16x1xf32> to vector<16x1xf32>
    %108 = vector.shape_cast %105 : vector<16x1xf32> to vector<1x16x1xf32>
    tpu.vector_store %arg9[%c2_75, %c0_76, %c0_77], %108 {strides = array<i32>} : memref<4x16x1xf32, #tpu.memory_space<vmem>>, vector<1x16x1xf32>,
    %c2_78 = arith.constant 2 : index
    %c0_79 = arith.constant 0 : index
    %c0_80 = arith.constant 0 : index
    %109 = vector.load %arg10[%c2_78, %c0_79, %c0_80] : memref<4x16x8xf32, #tpu.memory_space<vmem>>, vector<1x16x8xf32>
    %110 = vector.shape_cast %109 : vector<1x16x8xf32> to vector<16x8xf32>
    %111 = vector.broadcast %96 : vector<16x1xf32> to vector<16x8xf32>
    %112 = arith.mulf %111, %110 : vector<16x8xf32>
    %c0_81 = arith.constant 0 : index
    %c0_82 = arith.constant 0 : index
    %c16_83 = arith.constant 16 : index
    %113 = vector.load %arg6[%c0_81, %c0_82, %c16_83] : memref<1x16x32xf32, #tpu.memory_space<vmem>>, vector<1x16x8xf32>
    %114 = vector.shape_cast %113 : vector<1x16x8xf32> to vector<16x8xf32>
    %cst_84 = arith.constant dense<0.000000e+00> : vector<16x8xf32>
    %115 = tpu.matmul %99, %114, %cst_84 {dimension_numbers = #tpu.dot_dimension_numbers<[1], [0], [0], [1], [0, 0, 1, 1], [], []>} : vector<16x16xf32>, vector<16x8xf32>, vector<16x8xf32> -> vector<16x8xf32>
    %116 = arith.addf %112, %115 : vector<16x8xf32>
    %c2_85 = arith.constant 2 : index
    %c0_86 = arith.constant 0 : index
    %c0_87 = arith.constant 0 : index
    %117 = vector.load %arg10[%c2_85, %c0_86, %c0_87] : memref<4x16x8xf32, #tpu.memory_space<vmem>>, vector<1x16x8xf32>
    %118 = vector.shape_cast %117 : vector<1x16x8xf32> to vector<16x8xf32>
    %119 = vector.shape_cast %116 : vector<16x8xf32> to vector<1x16x8xf32>
    tpu.vector_store %arg10[%c2_85, %c0_86, %c0_87], %119 {strides = array<i32>} : memref<4x16x8xf32, #tpu.memory_space<vmem>>, vector<1x16x8xf32>,
    %c2_88 = arith.constant 2 : index
    %c0_89 = arith.constant 0 : index
    %c0_90 = arith.constant 0 : index
    %120 = vector.load %arg8[%c2_88, %c0_89, %c0_90] : memref<4x16x1xf32, #tpu.memory_space<vmem>>, vector<1x16x1xf32>
    %121 = vector.shape_cast %120 : vector<1x16x1xf32> to vector<16x1xf32>
    %122 = vector.shape_cast %94 : vector<16x1xf32> to vector<1x16x1xf32>
    tpu.vector_store %arg8[%c2_88, %c0_89, %c0_90], %122 {strides = array<i32>} : memref<4x16x1xf32, #tpu.memory_space<vmem>>, vector<1x16x1xf32>,
    %c0_91 = arith.constant 0 : index
    %c0_92 = arith.constant 0 : index
    %c24 = arith.constant 24 : index
    %123 = vector.load %arg4[%c0_91, %c0_92, %c24] : memref<1x16x32xf32, #tpu.memory_space<vmem>>, vector<1x16x8xf32>
    %124 = vector.shape_cast %123 : vector<1x16x8xf32> to vector<16x8xf32>
    %c0_93 = arith.constant 0 : index
    %c0_94 = arith.constant 0 : index
    %c24_95 = arith.constant 24 : index
    %125 = vector.load %arg5[%c0_93, %c0_94, %c24_95] : memref<1x16x32xf32, #tpu.memory_space<vmem>>, vector<1x16x8xf32>
    %126 = vector.shape_cast %125 : vector<1x16x8xf32> to vector<16x8xf32>
    %cst_96 = arith.constant dense<0.000000e+00> : vector<16x16xf32>
    %127 = tpu.matmul %124, %126, %cst_96 {dimension_numbers = #tpu.dot_dimension_numbers<[1], [1], [0], [0], [0, 0, 1, 0], [], []>} : vector<16x8xf32>, vector<16x8xf32>, vector<16x16xf32> -> vector<16x16xf32>
    %cst_97 = arith.constant 0.353553385 : f32
    %128 = vector.broadcast %cst_97 : f32 to vector<16x16xf32>
    %129 = arith.mulf %127, %128 : vector<16x16xf32>
    %c3 = arith.constant 3 : index
    %c0_98 = arith.constant 0 : index
    %c0_99 = arith.constant 0 : index
    %130 = vector.load %arg8[%c3, %c0_98, %c0_99] : memref<4x16x1xf32, #tpu.memory_space<vmem>>, vector<1x16x1xf32>
    %131 = vector.shape_cast %130 : vector<1x16x1xf32> to vector<16x1xf32>
    %cst_100 = arith.constant dense<0xFF800000> : vector<16xf32>
    %132 = vector.multi_reduction <maximumf>, %129, %cst_100 [1] : vector<16x16xf32> to vector<16xf32>
    %133 = vector.shape_cast %132 : vector<16xf32> to vector<16x1xf32>
    %134 = arith.maximumf %131, %133 : vector<16x1xf32>
    %135 = arith.subf %131, %134 : vector<16x1xf32>
    %136 = math.exp %135 : vector<16x1xf32>
    %137 = vector.broadcast %134 : vector<16x1xf32> to vector<16x16xf32>
    %138 = arith.subf %129, %137 : vector<16x16xf32>
    %139 = math.exp %138 : vector<16x16xf32>
    %c3_101 = arith.constant 3 : index
    %c0_102 = arith.constant 0 : index
    %c0_103 = arith.constant 0 : index
    %140 = vector.load %arg9[%c3_101, %c0_102, %c0_103] : memref<4x16x1xf32, #tpu.memory_space<vmem>>, vector<1x16x1xf32>
    %141 = vector.shape_cast %140 : vector<1x16x1xf32> to vector<16x1xf32>
    %142 = arith.mulf %136, %141 : vector<16x1xf32>
    %cst_104 = arith.constant dense<0.000000e+00> : vector<16xf32>
    %143 = vector.multi_reduction <add>, %139, %cst_104 [1] : vector<16x16xf32> to vector<16xf32>
    %144 = vector.shape_cast %143 : vector<16xf32> to vector<16x1xf32>
    %145 = arith.addf %142, %144 : vector<16x1xf32>
    %c3_105 = arith.constant 3 : index
    %c0_106 = arith.constant 0 : index
    %c0_107 = arith.constant 0 : index
    %146 = vector.load %arg9[%c3_105, %c0_106, %c0_107] : memref<4x16x1xf32, #tpu.memory_space<vmem>>, vector<1x16x1xf32>
    %147 = vector.shape_cast %146 : vector<1x16x1xf32> to vector<16x1xf32>
    %148 = vector.shape_cast %145 : vector<16x1xf32> to vector<1x16x1xf32>
    tpu.vector_store %arg9[%c3_105, %c0_106, %c0_107], %148 {strides = array<i32>} : memref<4x16x1xf32, #tpu.memory_space<vmem>>, vector<1x16x1xf32>,
    %c3_108 = arith.constant 3 : index
    %c0_109 = arith.constant 0 : index
    %c0_110 = arith.constant 0 : index
    %149 = vector.load %arg10[%c3_108, %c0_109, %c0_110] : memref<4x16x8xf32, #tpu.memory_space<vmem>>, vector<1x16x8xf32>
    %150 = vector.shape_cast %149 : vector<1x16x8xf32> to vector<16x8xf32>
    %151 = vector.broadcast %136 : vector<16x1xf32> to vector<16x8xf32>
    %152 = arith.mulf %151, %150 : vector<16x8xf32>
    %c0_111 = arith.constant 0 : index
    %c0_112 = arith.constant 0 : index
    %c24_113 = arith.constant 24 : index
    %153 = vector.load %arg6[%c0_111, %c0_112, %c24_113] : memref<1x16x32xf32, #tpu.memory_space<vmem>>, vector<1x16x8xf32>
    %154 = vector.shape_cast %153 : vector<1x16x8xf32> to vector<16x8xf32>
    %cst_114 = arith.constant dense<0.000000e+00> : vector<16x8xf32>
    %155 = tpu.matmul %139, %154, %cst_114 {dimension_numbers = #tpu.dot_dimension_numbers<[1], [0], [0], [1], [0, 0, 1, 1], [], []>} : vector<16x16xf32>, vector<16x8xf32>, vector<16x8xf32> -> vector<16x8xf32>
    %156 = arith.addf %152, %155 : vector<16x8xf32>
    %c3_115 = arith.constant 3 : index
    %c0_116 = arith.constant 0 : index
    %c0_117 = arith.constant 0 : index
    %157 = vector.load %arg10[%c3_115, %c0_116, %c0_117] : memref<4x16x8xf32, #tpu.memory_space<vmem>>, vector<1x16x8xf32>
    %158 = vector.shape_cast %157 : vector<1x16x8xf32> to vector<16x8xf32>
    %159 = vector.shape_cast %156 : vector<16x8xf32> to vector<1x16x8xf32>
    tpu.vector_store %arg10[%c3_115, %c0_116, %c0_117], %159 {strides = array<i32>} : memref<4x16x8xf32, #tpu.memory_space<vmem>>, vector<1x16x8xf32>,
    %c3_118 = arith.constant 3 : index
    %c0_119 = arith.constant 0 : index
    %c0_120 = arith.constant 0 : index
    %160 = vector.load %arg8[%c3_118, %c0_119, %c0_120] : memref<4x16x1xf32, #tpu.memory_space<vmem>>, vector<1x16x1xf32>
    %161 = vector.shape_cast %160 : vector<1x16x1xf32> to vector<16x1xf32>
    %162 = vector.shape_cast %134 : vector<16x1xf32> to vector<1x16x1xf32>
    tpu.vector_store %arg8[%c3_118, %c0_119, %c0_120], %162 {strides = array<i32>} : memref<4x16x1xf32, #tpu.memory_space<vmem>>, vector<1x16x1xf32>,
    %c0_i32_121 = arith.constant 0 : i32
    %163 = arith.cmpi eq, %arg3, %c0_i32_121 : i32
    %164 = arith.extui %163 : i1 to i32
    %c0_i32_122 = arith.constant 0 : i32
    %165 = arith.cmpi ne, %164, %c0_i32_122 : i32
    scf.if %165 {
      %c0_123 = arith.constant 0 : index
      %c0_124 = arith.constant 0 : index
      %c0_125 = arith.constant 0 : index
      %166 = vector.load %arg9[%c0_123, %c0_124, %c0_125] : memref<4x16x1xf32, #tpu.memory_space<vmem>>, vector<1x16x1xf32>
      %167 = vector.shape_cast %166 : vector<1x16x1xf32> to vector<16x1xf32>
      %168 = tpu.reciprocal %167 {approx = true} : vector<16x1xf32> -> vector<16x1xf32>
      %c0_126 = arith.constant 0 : index
      %c0_127 = arith.constant 0 : index
      %c0_128 = arith.constant 0 : index
      %169 = vector.load %arg10[%c0_126, %c0_127, %c0_128] : memref<4x16x8xf32, #tpu.memory_space<vmem>>, vector<1x16x8xf32>
      %170 = vector.shape_cast %169 : vector<1x16x8xf32> to vector<16x8xf32>
      %171 = vector.broadcast %168 : vector<16x1xf32> to vector<16x8xf32>
      %172 = arith.mulf %170, %171 : vector<16x8xf32>
      %c0_129 = arith.constant 0 : index
      %c0_130 = arith.constant 0 : index
      %c0_131 = arith.constant 0 : index
      %173 = vector.load %arg7[%c0_129, %c0_130, %c0_131] : memref<1x16x32xf32, #tpu.memory_space<vmem>>, vector<1x16x8xf32>
      %174 = vector.shape_cast %173 : vector<1x16x8xf32> to vector<16x8xf32>
      %175 = vector.shape_cast %172 : vector<16x8xf32> to vector<1x16x8xf32>
      tpu.vector_store %arg7[%c0_129, %c0_130, %c0_131], %175 {strides = array<i32>} : memref<1x16x32xf32, #tpu.memory_space<vmem>>, vector<1x16x8xf32>,
      %c1_132 = arith.constant 1 : index
      %c0_133 = arith.constant 0 : index
      %c0_134 = arith.constant 0 : index
      %176 = vector.load %arg9[%c1_132, %c0_133, %c0_134] : memref<4x16x1xf32, #tpu.memory_space<vmem>>, vector<1x16x1xf32>
      %177 = vector.shape_cast %176 : vector<1x16x1xf32> to vector<16x1xf32>
      %178 = tpu.reciprocal %177 {approx = true} : vector<16x1xf32> -> vector<16x1xf32>
      %c1_135 = arith.constant 1 : index
      %c0_136 = arith.constant 0 : index
      %c0_137 = arith.constant 0 : index
      %179 = vector.load %arg10[%c1_135, %c0_136, %c0_137] : memref<4x16x8xf32, #tpu.memory_space<vmem>>, vector<1x16x8xf32>
      %180 = vector.shape_cast %179 : vector<1x16x8xf32> to vector<16x8xf32>
      %181 = vector.broadcast %178 : vector<16x1xf32> to vector<16x8xf32>
      %182 = arith.mulf %180, %181 : vector<16x8xf32>
      %c0_138 = arith.constant 0 : index
      %c0_139 = arith.constant 0 : index
      %c8_140 = arith.constant 8 : index
      %183 = vector.load %arg7[%c0_138, %c0_139, %c8_140] : memref<1x16x32xf32, #tpu.memory_space<vmem>>, vector<1x16x8xf32>
      %184 = vector.shape_cast %183 : vector<1x16x8xf32> to vector<16x8xf32>
      %185 = vector.shape_cast %182 : vector<16x8xf32> to vector<1x16x8xf32>
      tpu.vector_store %arg7[%c0_138, %c0_139, %c8_140], %185 {strides = array<i32>} : memref<1x16x32xf32, #tpu.memory_space<vmem>>, vector<1x16x8xf32>,
      %c2_141 = arith.constant 2 : index
      %c0_142 = arith.constant 0 : index
      %c0_143 = arith.constant 0 : index
      %186 = vector.load %arg9[%c2_141, %c0_142, %c0_143] : memref<4x16x1xf32, #tpu.memory_space<vmem>>, vector<1x16x1xf32>
      %187 = vector.shape_cast %186 : vector<1x16x1xf32> to vector<16x1xf32>
      %188 = tpu.reciprocal %187 {approx = true} : vector<16x1xf32> -> vector<16x1xf32>
      %c2_144 = arith.constant 2 : index
      %c0_145 = arith.constant 0 : index
      %c0_146 = arith.constant 0 : index
      %189 = vector.load %arg10[%c2_144, %c0_145, %c0_146] : memref<4x16x8xf32, #tpu.memory_space<vmem>>, vector<1x16x8xf32>
      %190 = vector.shape_cast %189 : vector<1x16x8xf32> to vector<16x8xf32>
      %191 = vector.broadcast %188 : vector<16x1xf32> to vector<16x8xf32>
      %192 = arith.mulf %190, %191 : vector<16x8xf32>
      %c0_147 = arith.constant 0 : index
      %c0_148 = arith.constant 0 : index
      %c16_149 = arith.constant 16 : index
      %193 = vector.load %arg7[%c0_147, %c0_148, %c16_149] : memref<1x16x32xf32, #tpu.memory_space<vmem>>, vector<1x16x8xf32>
      %194 = vector.shape_cast %193 : vector<1x16x8xf32> to vector<16x8xf32>
      %195 = vector.shape_cast %192 : vector<16x8xf32> to vector<1x16x8xf32>
      tpu.vector_store %arg7[%c0_147, %c0_148, %c16_149], %195 {strides = array<i32>} : memref<1x16x32xf32, #tpu.memory_space<vmem>>, vector<1x16x8xf32>,
      %c3_150 = arith.constant 3 : index
      %c0_151 = arith.constant 0 : index
      %c0_152 = arith.constant 0 : index
      %196 = vector.load %arg9[%c3_150, %c0_151, %c0_152] : memref<4x16x1xf32, #tpu.memory_space<vmem>>, vector<1x16x1xf32>
      %197 = vector.shape_cast %196 : vector<1x16x1xf32> to vector<16x1xf32>
      %198 = tpu.reciprocal %197 {approx = true} : vector<16x1xf32> -> vector<16x1xf32>
      %c3_153 = arith.constant 3 : index
      %c0_154 = arith.constant 0 : index
      %c0_155 = arith.constant 0 : index
      %199 = vector.load %arg10[%c3_153, %c0_154, %c0_155] : memref<4x16x8xf32, #tpu.memory_space<vmem>>, vector<1x16x8xf32>
      %200 = vector.shape_cast %199 : vector<1x16x8xf32> to vector<16x8xf32>
      %201 = vector.broadcast %198 : vector<16x1xf32> to vector<16x8xf32>
      %202 = arith.mulf %200, %201 : vector<16x8xf32>
      %c0_156 = arith.constant 0 : index
      %c0_157 = arith.constant 0 : index
      %c24_158 = arith.constant 24 : index
      %203 = vector.load %arg7[%c0_156, %c0_157, %c24_158] : memref<1x16x32xf32, #tpu.memory_space<vmem>>, vector<1x16x8xf32>
      %204 = vector.shape_cast %203 : vector<1x16x8xf32> to vector<16x8xf32>
      %205 = vector.shape_cast %202 : vector<16x8xf32> to vector<1x16x8xf32>
      tpu.vector_store %arg7[%c0_156, %c0_157, %c24_158], %205 {strides = array<i32>} : memref<1x16x32xf32, #tpu.memory_space<vmem>>, vector<1x16x8xf32>,
    } else {
    }
    return
  }
  func.func @transform_0(%arg0: i32, %arg1: i32, %arg2: i32, %arg3: i32) -> (i32, i32, i32) {
    %c0_i32 = arith.constant 0 : i32
    return %arg0, %arg2, %arg1 : i32, i32, i32
  }
  func.func @transform_1(%arg0: i32, %arg1: i32, %arg2: i32, %arg3: i32) -> (i32, i32, i32) {
    %c0_i32 = arith.constant 0 : i32
    return %arg0, %arg3, %arg1 : i32, i32, i32
  }
  func.func @transform_2(%arg0: i32, %arg1: i32, %arg2: i32, %arg3: i32) -> (i32, i32, i32) {
    %c0_i32 = arith.constant 0 : i32
    return %arg0, %arg3, %arg1 : i32, i32, i32
  }
  func.func @transform_3(%arg0: i32, %arg1: i32, %arg2: i32, %arg3: i32) -> (i32, i32, i32) {
    %c0_i32 = arith.constant 0 : i32
    return %arg0, %arg2, %arg1 : i32, i32, i32
  }
}

module attributes {stable_mosaic.version = 11 : i64} {
  func.func @_ffn_add_ln_kernel(%arg0: i32, %arg1: i32, %arg2: memref<32x32xf32, #tpu.memory_space<vmem>>, %arg3: memref<32x64xf32, #tpu.memory_space<vmem>>, %arg4: memref<1x64xf32, #tpu.memory_space<vmem>>, %arg5: memref<64x32xf32, #tpu.memory_space<vmem>>, %arg6: memref<1x32xf32, #tpu.memory_space<vmem>>, %arg7: memref<1x32xf32, #tpu.memory_space<vmem>>, %arg8: memref<1x32xf32, #tpu.memory_space<vmem>>, %arg9: memref<32x32xf32, #tpu.memory_space<vmem>>, %arg10: memref<32x32xf32, #tpu.memory_space<vmem>>) attributes {dimension_semantics = [#tpu.dimension_semantics<parallel>, #tpu.dimension_semantics<arbitrary>], iteration_bounds = array<i64: 1, 1>, scalar_prefetch = 0 : i64, scratch_operands = 1 : i64, tpu.core_type = #tpu.core_type<tc>, window_params = [{transform_indices = @transform_0, window_bounds = array<i64: 32, 32>}, {pipeline_mode = #tpu.pipeline_mode<synchronous>, transform_indices = @transform_1, window_bounds = array<i64: 32, 64>}, {pipeline_mode = #tpu.pipeline_mode<synchronous>, transform_indices = @transform_2, window_bounds = array<i64: 1, 64>}, {pipeline_mode = #tpu.pipeline_mode<synchronous>, transform_indices = @transform_3, window_bounds = array<i64: 64, 32>}, {pipeline_mode = #tpu.pipeline_mode<synchronous>, transform_indices = @transform_4, window_bounds = array<i64: 1, 32>}, {pipeline_mode = #tpu.pipeline_mode<synchronous>, transform_indices = @transform_5, window_bounds = array<i64: 1, 32>}, {pipeline_mode = #tpu.pipeline_mode<synchronous>, transform_indices = @transform_6, window_bounds = array<i64: 1, 32>}, {transform_indices = @transform_7, window_bounds = array<i64: 32, 32>}]} {
    %c0_i32 = arith.constant 0 : i32
    %0 = arith.cmpi eq, %arg1, %c0_i32 : i32
    %1 = arith.extui %0 : i1 to i32
    %c0_i32_0 = arith.constant 0 : i32
    %2 = arith.cmpi ne, %1, %c0_i32_0 : i32
    scf.if %2 {
      %cst_16 = arith.constant 0.000000e+00 : f32
      %19 = vector.broadcast %cst_16 : f32 to vector<32x32xf32>
      %c0_17 = arith.constant 0 : index
      %c0_18 = arith.constant 0 : index
      %20 = vector.load %arg10[%c0_17, %c0_18] : memref<32x32xf32, #tpu.memory_space<vmem>>, vector<32x32xf32>
      tpu.vector_store %arg10[%c0_17, %c0_18], %19 {strides = array<i32>} : memref<32x32xf32, #tpu.memory_space<vmem>>, vector<32x32xf32>,
    } else {
    }
    %c0 = arith.constant 0 : index
    %c0_1 = arith.constant 0 : index
    %3 = vector.load %arg2[%c0, %c0_1] : memref<32x32xf32, #tpu.memory_space<vmem>>, vector<32x32xf32>
    %c0_2 = arith.constant 0 : index
    %c0_3 = arith.constant 0 : index
    %4 = vector.load %arg3[%c0_2, %c0_3] : memref<32x64xf32, #tpu.memory_space<vmem>>, vector<32x64xf32>
    %cst = arith.constant dense<0.000000e+00> : vector<32x64xf32>
    %5 = tpu.matmul %3, %4, %cst {dimension_numbers = #tpu.dot_dimension_numbers<[1], [0], [0], [1], [0, 0, 1, 1], [], []>} : vector<32x32xf32>, vector<32x64xf32>, vector<32x64xf32> -> vector<32x64xf32>
    %c0_4 = arith.constant 0 : index
    %c0_5 = arith.constant 0 : index
    %6 = vector.load %arg4[%c0_4, %c0_5] : memref<1x64xf32, #tpu.memory_space<vmem>>, vector<1x64xf32>
    %7 = vector.broadcast %6 : vector<1x64xf32> to vector<32x64xf32>
    %8 = arith.addf %5, %7 : vector<32x64xf32>
    %cst_6 = arith.constant 0.000000e+00 : f32
    %9 = vector.broadcast %cst_6 : f32 to vector<32x64xf32>
    %10 = arith.maximumf %8, %9 : vector<32x64xf32>
    %c0_7 = arith.constant 0 : index
    %c0_8 = arith.constant 0 : index
    %11 = vector.load %arg10[%c0_7, %c0_8] : memref<32x32xf32, #tpu.memory_space<vmem>>, vector<32x32xf32>
    %c0_9 = arith.constant 0 : index
    %c0_10 = arith.constant 0 : index
    %12 = vector.load %arg5[%c0_9, %c0_10] : memref<64x32xf32, #tpu.memory_space<vmem>>, vector<64x32xf32>
    %cst_11 = arith.constant dense<0.000000e+00> : vector<32x32xf32>
    %13 = tpu.matmul %10, %12, %cst_11 {dimension_numbers = #tpu.dot_dimension_numbers<[1], [0], [0], [1], [0, 0, 1, 1], [], []>} : vector<32x64xf32>, vector<64x32xf32>, vector<32x32xf32> -> vector<32x32xf32>
    %14 = arith.addf %11, %13 : vector<32x32xf32>
    %c0_12 = arith.constant 0 : index
    %c0_13 = arith.constant 0 : index
    %15 = vector.load %arg10[%c0_12, %c0_13] : memref<32x32xf32, #tpu.memory_space<vmem>>, vector<32x32xf32>
    tpu.vector_store %arg10[%c0_12, %c0_13], %14 {strides = array<i32>} : memref<32x32xf32, #tpu.memory_space<vmem>>, vector<32x32xf32>,
    %c0_i32_14 = arith.constant 0 : i32
    %16 = arith.cmpi eq, %arg1, %c0_i32_14 : i32
    %17 = arith.extui %16 : i1 to i32
    %c0_i32_15 = arith.constant 0 : i32
    %18 = arith.cmpi ne, %17, %c0_i32_15 : i32
    scf.if %18 {
      %c0_16 = arith.constant 0 : index
      %c0_17 = arith.constant 0 : index
      %19 = vector.load %arg10[%c0_16, %c0_17] : memref<32x32xf32, #tpu.memory_space<vmem>>, vector<32x32xf32>
      %20 = arith.addf %3, %19 : vector<32x32xf32>
      %c0_18 = arith.constant 0 : index
      %c0_19 = arith.constant 0 : index
      %21 = vector.load %arg6[%c0_18, %c0_19] : memref<1x32xf32, #tpu.memory_space<vmem>>, vector<1x32xf32>
      %22 = vector.broadcast %21 : vector<1x32xf32> to vector<32x32xf32>
      %23 = arith.addf %20, %22 : vector<32x32xf32>
      %c0_20 = arith.constant 0 : index
      %c0_21 = arith.constant 0 : index
      %24 = vector.load %arg7[%c0_20, %c0_21] : memref<1x32xf32, #tpu.memory_space<vmem>>, vector<1x32xf32>
      %c0_22 = arith.constant 0 : index
      %c0_23 = arith.constant 0 : index
      %25 = vector.load %arg8[%c0_22, %c0_23] : memref<1x32xf32, #tpu.memory_space<vmem>>, vector<1x32xf32>
      %cst_24 = arith.constant dense<0.000000e+00> : vector<32xf32>
      %26 = vector.multi_reduction <add>, %23, %cst_24 [1] : vector<32x32xf32> to vector<32xf32>
      %27 = vector.shape_cast %26 : vector<32xf32> to vector<32x1xf32>
      %cst_25 = arith.constant 3.200000e+01 : f32
      %28 = vector.broadcast %cst_25 : f32 to vector<32x1xf32>
      %29 = arith.divf %27, %28 : vector<32x1xf32>
      %30 = vector.broadcast %29 : vector<32x1xf32> to vector<32x32xf32>
      %31 = arith.subf %23, %30 : vector<32x32xf32>
      %32 = arith.mulf %31, %31 : vector<32x32xf32>
      %cst_26 = arith.constant dense<0.000000e+00> : vector<32xf32>
      %33 = vector.multi_reduction <add>, %32, %cst_26 [1] : vector<32x32xf32> to vector<32xf32>
      %34 = vector.shape_cast %33 : vector<32xf32> to vector<32x1xf32>
      %cst_27 = arith.constant 3.200000e+01 : f32
      %35 = vector.broadcast %cst_27 : f32 to vector<32x1xf32>
      %36 = arith.divf %34, %35 : vector<32x1xf32>
      %cst_28 = arith.constant 9.99999974E-6 : f32
      %37 = vector.broadcast %cst_28 : f32 to vector<32x1xf32>
      %38 = arith.addf %36, %37 : vector<32x1xf32>
      %39 = math.rsqrt %38 : vector<32x1xf32>
      %40 = vector.broadcast %39 : vector<32x1xf32> to vector<32x32xf32>
      %41 = arith.mulf %31, %40 : vector<32x32xf32>
      %42 = vector.broadcast %24 : vector<1x32xf32> to vector<32x32xf32>
      %43 = arith.mulf %41, %42 : vector<32x32xf32>
      %44 = vector.broadcast %25 : vector<1x32xf32> to vector<32x32xf32>
      %45 = arith.addf %43, %44 : vector<32x32xf32>
      %c0_29 = arith.constant 0 : index
      %c0_30 = arith.constant 0 : index
      %46 = vector.load %arg9[%c0_29, %c0_30] : memref<32x32xf32, #tpu.memory_space<vmem>>, vector<32x32xf32>
      tpu.vector_store %arg9[%c0_29, %c0_30], %45 {strides = array<i32>} : memref<32x32xf32, #tpu.memory_space<vmem>>, vector<32x32xf32>,
    } else {
    }
    return
  }
  func.func @transform_0(%arg0: i32, %arg1: i32) -> (i32, i32) {
    %c0_i32 = arith.constant 0 : i32
    %c0_i32_0 = arith.constant 0 : i32
    return %arg0, %c0_i32 : i32, i32
  }
  func.func @transform_1(%arg0: i32, %arg1: i32) -> (i32, i32) {
    %c0_i32 = arith.constant 0 : i32
    %c0_i32_0 = arith.constant 0 : i32
    return %c0_i32, %arg1 : i32, i32
  }
  func.func @transform_2(%arg0: i32, %arg1: i32) -> (i32, i32) {
    %c0_i32 = arith.constant 0 : i32
    %c0_i32_0 = arith.constant 0 : i32
    return %c0_i32, %arg1 : i32, i32
  }
  func.func @transform_3(%arg0: i32, %arg1: i32) -> (i32, i32) {
    %c0_i32 = arith.constant 0 : i32
    %c0_i32_0 = arith.constant 0 : i32
    return %arg1, %c0_i32 : i32, i32
  }
  func.func @transform_4(%arg0: i32, %arg1: i32) -> (i32, i32) {
    %c0_i32 = arith.constant 0 : i32
    %c0_i32_0 = arith.constant 0 : i32
    %c0_i32_1 = arith.constant 0 : i32
    return %c0_i32, %c0_i32_0 : i32, i32
  }
  func.func @transform_5(%arg0: i32, %arg1: i32) -> (i32, i32) {
    %c0_i32 = arith.constant 0 : i32
    %c0_i32_0 = arith.constant 0 : i32
    %c0_i32_1 = arith.constant 0 : i32
    return %c0_i32, %c0_i32_0 : i32, i32
  }
  func.func @transform_6(%arg0: i32, %arg1: i32) -> (i32, i32) {
    %c0_i32 = arith.constant 0 : i32
    %c0_i32_0 = arith.constant 0 : i32
    %c0_i32_1 = arith.constant 0 : i32
    return %c0_i32, %c0_i32_0 : i32, i32
  }
  func.func @transform_7(%arg0: i32, %arg1: i32) -> (i32, i32) {
    %c0_i32 = arith.constant 0 : i32
    %c0_i32_0 = arith.constant 0 : i32
    return %arg0, %c0_i32 : i32, i32
  }
}

</mosaic_0001>

<llo_original>
// kernel: transformer_encoder_layer.6
$region0: #{transformer_encoder_layer.6}
  #allocation0 [shape = 'u32[]', space=smem, size = 0x4, offset = 0x4, fixed_abs, tag = 'smem constant byte address 0x4 - core index']
  #allocation1 [shape = 'u32[72,128]{1,0:T(1,128)}', space=vmem, size = 0x9000, scoped, tag = 'internal scratch']
  %s0 = inlined_call_operand.vmem [shape: f32[32,32], index: 0, kind: input, shape index: {}]
  %s1 = inlined_call_operand.vmem [shape: f32[32,32], index: 1, kind: input, shape index: {}]
  %s2 = inlined_call_operand.vmem [shape: f32[32,32], index: 2, kind: input, shape index: {}]
  %s3 = inlined_call_operand.vmem [shape: f32[1,32], index: 3, kind: input, shape index: {}]
  %s4 = inlined_call_operand.vmem [shape: f32[1,32], index: 4, kind: input, shape index: {}]
  %s5 = inlined_call_operand.vmem [shape: f32[1,32], index: 5, kind: input, shape index: {}]
  %s6 = inlined_call_operand.vmem [shape: f32[32,32], index: 6, kind: output, shape index: {}]
  %s7 = sld [smem:[#allocation0]]
  $region34: #{transformer_encoder_layer.6} parent=0
    _
  %s9 = ssub.s32 1, %s7
  %s10 = scalar_select 0, %s9, %s7
  // Predicated region
  $region2: #{transformer_encoder_layer.6} parent=0 // pred_check
    _
  $region3: #{transformer_encoder_layer.6} parent=0 // pred_check_branch
    %12 = sbr.rel (0) target = $region5
  $region4: #{transformer_encoder_layer.6} parent=0 // pred_region
    _
  $region5: #{transformer_encoder_layer.6} parent=0 // pred_fallthru
    _
  // Predicated region
  $region6: #{transformer_encoder_layer.6} parent=0 // pred_check
    _
  $region7: #{transformer_encoder_layer.6} parent=0 // pred_check_branch
    %14 = sbr.rel (0) target = $region9
  $region8: #{transformer_encoder_layer.6} parent=0 // pred_region
    _
  $region9: #{transformer_encoder_layer.6} parent=0 // pred_fallthru
    _
  // Predicated region
  $region10: #{transformer_encoder_layer.6} parent=0 // pred_check
    _
  $region11: #{transformer_encoder_layer.6} parent=0 // pred_check_branch
    %16 = sbr.rel (0) target = $region13
  $region12: #{transformer_encoder_layer.6} parent=0 // pred_region
    _
  $region13: #{transformer_encoder_layer.6} parent=0 // pred_fallthru
    _
  // Predicated region
  $region14: #{transformer_encoder_layer.6} parent=0 // pred_check
    _
  $region15: #{transformer_encoder_layer.6} parent=0 // pred_check_branch
    %18 = sbr.rel (0) target = $region17
  $region16: #{transformer_encoder_layer.6} parent=0 // pred_region
    _
  $region17: #{transformer_encoder_layer.6} parent=0 // pred_fallthru
    _
  // Predicated region
  $region18: #{transformer_encoder_layer.6} parent=0 // pred_check
    _
  $region19: #{transformer_encoder_layer.6} parent=0 // pred_check_branch
    %20 = sbr.rel (0) target = $region21
  $region20: #{transformer_encoder_layer.6} parent=0 // pred_region
    _
  $region21: #{transformer_encoder_layer.6} parent=0 // pred_fallthru
    _
  // Predicated region
  $region22: #{transformer_encoder_layer.6} parent=0 // pred_check
    _
  $region23: #{transformer_encoder_layer.6} parent=0 // pred_check_branch
    %22 = sbr.rel (0) target = $region25
  $region24: #{transformer_encoder_layer.6} parent=0 // pred_region
    _
  $region25: #{transformer_encoder_layer.6} parent=0 // pred_fallthru
    _
  %v23 = vld [vmem:[%s0] sm:$0xff]
  %v24 = vld [vmem:[%s0 + $0x8] sm:$0xff]
  %v25 = vld [vmem:[%s0 + $0x10] sm:$0xff]
  %v26 = vld [vmem:[%s0 + $0x18] sm:$0xff]
  %v27 = vld [vmem:[%s2] sm:$0xff]
  %v28 = vld [vmem:[%s2 + $0x8] sm:$0xff]
  %v29 = vld [vmem:[%s2 + $0x10] sm:$0xff]
  %v30 = vld [vmem:[%s2 + $0x18] sm:$0xff]
  %vm31 = vcmask 261120
  %v33 = vsel %vm31, %v23, 0
  %v36 = vsel %vm31, %v24, 0
  %v39 = vsel %vm31, %v25, 0
  %v42 = vsel %vm31, %v26, 0
  %44 = vmatpush.msra.mxu0 0.0
  %45 = vmatpush.msra.mxu0 0.0
  %46 = vmatpush.msra.mxu0 0.0
  %47 = vmatpush.msra.mxu0 0.0
  %48 = vmatpush.msra.mxu0 0.0
  %49 = vmatpush.msra.mxu0 0.0
  %50 = vmatpush.msra.mxu0 0.0
  %51 = vmatpush.msra.mxu0 0.0
  %52 = vmatpush.msra.mxu0 0.0
  %53 = vmatpush.msra.mxu0 0.0
  %54 = vmatpush.msra.mxu0 0.0
  %55 = vmatpush.msra.mxu0 0.0
  %56 = vmatpush.msra.mxu0 %v30
  %57 = vmatpush.msra.mxu0 %v29
  %58 = vmatpush.msra.mxu0 %v28
  %59 = vmatpush.msra.mxu0 %v27
  %60 = vmatmul.f32.gmra.mxu0 %v33
  %v61 = vpop.f32.mrf.mxu0
  %v62 = vadd.f32 0.0, %v61
  %63 = vmatmul.f32.gmra.mxu0 %v36
  %v64 = vpop.f32.mrf.mxu0
  %v65 = vadd.f32 0.0, %v64
  %66 = vmatmul.f32.gmra.mxu0 %v39
  %v67 = vpop.f32.mrf.mxu0
  %v68 = vadd.f32 0.0, %v67
  %69 = vmatmul.f32.gmra.mxu0 %v42
  %v70 = vpop.f32.mrf.mxu0
  %v71 = vadd.f32 0.0, %v70
  %72 = vdwg.mxu0
  %v73 = vld [vmem:[%s1] sm:$0xff]
  %v74 = vld [vmem:[%s1 + $0x8] sm:$0xff]
  %v75 = vld [vmem:[%s1 + $0x10] sm:$0xff]
  %v76 = vld [vmem:[%s1 + $0x18] sm:$0xff]
  %v77 = vadd.f32 %v73, %v62
  %v78 = vadd.f32 %v74, %v65
  %v79 = vadd.f32 %v75, %v68
  %v80 = vadd.f32 %v76, %v71
  %v81 = vld [vmem:[%s3] sm:$0x1]
  %v83 = vperm.slane %v81, 0
  %v85 = vadd.f32 %v77, %v83
  %v86 = vadd.f32 %v78, %v83
  %v87 = vadd.f32 %v79, %v83
  %v88 = vadd.f32 %v80, %v83
  %v89 = vld [vmem:[%s4] sm:$0x1]
  %v90 = vld [vmem:[%s5] sm:$0x1]
  %v91 = vsel %vm31, %v85, 0.0
  %92 = vadd.xlane.f32.xlu0 %v91
  %v93 = vpop.xlane.xlu0 %92
  %v94 = vsel %vm31, %v86, 0.0
  %95 = vadd.xlane.f32.xlu0 %v94
  %v96 = vpop.xlane.xlu0 %95
  %v97 = vsel %vm31, %v87, 0.0
  %98 = vadd.xlane.f32.xlu0 %v97
  %v99 = vpop.xlane.xlu0 %98
  %v100 = vsel %vm31, %v88, 0.0
  %101 = vadd.xlane.f32.xlu0 %v100
  %v102 = vpop.xlane.xlu0 %101
  %v103 = vrcp.pop 32.0
  %v104 = vmul.f32 32.0, %v103
  %v105 = vsub.f32 1.0, %v104
  %v106 = vmul.f32 %v103, %v105
  %v107 = vadd.f32 %v103, %v106
  %vm108 = vweird.f32 %v103
  %v109 = vsel %vm108, %v103, %v107
  %v110 = vmul.f32 %v93, %v109
  %v111 = vmul.f32 %v96, %v109
  %v112 = vmul.f32 %v99, %v109
  %v113 = vmul.f32 %v102, %v109
  %v114 = vsub.f32 %v85, %v110
  %v115 = vsub.f32 %v86, %v111
  %v116 = vsub.f32 %v87, %v112
  %v117 = vsub.f32 %v88, %v113
  %v118 = vmul.f32 %v114, %v114
  %v119 = vmul.f32 %v115, %v115
  %v120 = vmul.f32 %v116, %v116
  %v121 = vmul.f32 %v117, %v117
  %v122 = vsel %vm31, %v118, 0.0
  %123 = vadd.xlane.f32.xlu0 %v122
  %v124 = vpop.xlane.xlu0 %123
  %v125 = vsel %vm31, %v119, 0.0
  %126 = vadd.xlane.f32.xlu0 %v125
  %v127 = vpop.xlane.xlu0 %126
  %v128 = vsel %vm31, %v120, 0.0
  %129 = vadd.xlane.f32.xlu0 %v128
  %v130 = vpop.xlane.xlu0 %129
  %v131 = vsel %vm31, %v121, 0.0
  %132 = vadd.xlane.f32.xlu0 %v131
  %v133 = vpop.xlane.xlu0 %132
  %v134 = vmul.f32 %v124, %v109
  %v135 = vmul.f32 %v127, %v109
  %v136 = vmul.f32 %v130, %v109
  %v137 = vmul.f32 %v133, %v109
  %v138 = vadd.f32 %v134, 1e-05
  %v139 = vadd.f32 %v135, 1e-05
  %v140 = vadd.f32 %v136, 1e-05
  %v141 = vadd.f32 %v137, 1e-05
  %v142 = vrsqrt.pop %v138
  %v143 = vmul.f32 %v142, %v138
  %v144 = vmul.f32 %v143, %v142
  %v145 = vmul.f32 0.5, %v144
  %v146 = vsub.f32 1.5, %v145
  %v147 = vmul.f32 %v142, %v146
  %vm148 = vweird.f32 %v138
  %vm149 = vweird.f32 %v142
  %vm150 = vmor %vm148, %vm149
  %v151 = vsel %vm150, %v142, %v147
  %v152 = vrsqrt.pop %v139
  %v153 = vmul.f32 %v152, %v139
  %v154 = vmul.f32 %v153, %v152
  %v155 = vmul.f32 0.5, %v154
  %v156 = vsub.f32 1.5, %v155
  %v157 = vmul.f32 %v152, %v156
  %vm158 = vweird.f32 %v139
  %vm159 = vweird.f32 %v152
  %vm160 = vmor %vm158, %vm159
  %v161 = vsel %vm160, %v152, %v157
  %v162 = vrsqrt.pop %v140
  %v163 = vmul.f32 %v162, %v140
  %v164 = vmul.f32 %v163, %v162
  %v165 = vmul.f32 0.5, %v164
  %v166 = vsub.f32 1.5, %v165
  %v167 = vmul.f32 %v162, %v166
  %vm168 = vweird.f32 %v140
  %vm169 = vweird.f32 %v162
  %vm170 = vmor %vm168, %vm169
  %v171 = vsel %vm170, %v162, %v167
  %v172 = vrsqrt.pop %v141
  %v173 = vmul.f32 %v172, %v141
  %v174 = vmul.f32 %v173, %v172
  %v175 = vmul.f32 0.5, %v174
  %v176 = vsub.f32 1.5, %v175
  %v177 = vmul.f32 %v172, %v176
  %vm178 = vweird.f32 %v141
  %vm179 = vweird.f32 %v172
  %vm180 = vmor %vm178, %vm179
  %v181 = vsel %vm180, %v172, %v177
  %v182 = vmul.f32 %v114, %v151
  %v183 = vmul.f32 %v115, %v161
  %v184 = vmul.f32 %v116, %v171
  %v185 = vmul.f32 %v117, %v181
  %v187 = vperm.slane %v89, 0
  %v189 = vmul.f32 %v182, %v187
  %v190 = vmul.f32 %v183, %v187
  %v191 = vmul.f32 %v184, %v187
  %v192 = vmul.f32 %v185, %v187
  %v194 = vperm.slane %v90, 0
  %v196 = vadd.f32 %v189, %v194
  %v197 = vadd.f32 %v190, %v194
  %v198 = vadd.f32 %v191, %v194
  %v199 = vadd.f32 %v192, %v194
  %200 = vst.msk [vmem:[%s6] sm:$0xff] %vm31, %v196
  %201 = vst.msk [vmem:[%s6 + $0x8] sm:$0xff] %vm31, %v197
  %202 = vst.msk [vmem:[%s6 + $0x10] sm:$0xff] %vm31, %v198
  %203 = vst.msk [vmem:[%s6 + $0x18] sm:$0xff] %vm31, %v199
  // Predicated region
  $region26: #{transformer_encoder_layer.6} parent=0 // pred_check
    _
  $region27: #{transformer_encoder_layer.6} parent=0 // pred_check_branch
    %205 = sbr.rel (0) target = $region29
  $region28: #{transformer_encoder_layer.6} parent=0 // pred_region
    _
  $region29: #{transformer_encoder_layer.6} parent=0 // pred_fallthru
    _
  // Predicated region
  $region30: #{transformer_encoder_layer.6} parent=0 // pred_check
    _
  $region31: #{transformer_encoder_layer.6} parent=0 // pred_check_branch
    %207 = sbr.rel (0) target = $region33
  $region32: #{transformer_encoder_layer.6} parent=0 // pred_region
    _
  $region33: #{transformer_encoder_layer.6} parent=0 // pred_fallthru
    _

// kernel: transformer_encoder_layer.4
$region0: #{transformer_encoder_layer.4}
  #allocation0 [shape = 'u32[]', space=smem, size = 0x4, offset = 0x4, fixed_abs, tag = 'smem constant byte address 0x4 - core index']
  #allocation1 [shape = 'u32[72,128]{1,0:T(1,128)}', space=vmem, size = 0x9000, scoped, tag = 'internal scratch']
  %s0 = inlined_call_operand.hbm [shape: f32[32,32], index: 0, kind: input, shape index: {}]
  %s1 = inlined_call_operand.hbm [shape: f32[32,32], index: 1, kind: input, shape index: {}]
  %s2 = inlined_call_operand.hbm [shape: f32[32,32], index: 2, kind: input, shape index: {}]
  %s3 = inlined_call_operand.hbm [shape: f32[32,32], index: 3, kind: input, shape index: {}]
  %s4 = inlined_call_operand.vmem [shape: f32[1,32], index: 4, kind: input, shape index: {}]
  %s5 = inlined_call_operand.vmem [shape: f32[1,32], index: 5, kind: input, shape index: {}]
  %s6 = inlined_call_operand.vmem [shape: f32[1,32], index: 6, kind: input, shape index: {}]
  %s7 = inlined_call_operand.vmem [shape: f32[32,32], index: 7, kind: output, shape index: {0}]
  %s8 = inlined_call_operand.vmem [shape: f32[32,32], index: 8, kind: output, shape index: {1}]
  %s9 = inlined_call_operand.vmem [shape: f32[32,32], index: 9, kind: output, shape index: {2}]
  %10 = xla_tuple %s7, %s8, %s9
  %s11 = sld [smem:[#allocation0]]
  $region70: #{transformer_encoder_layer.4} parent=0
    _
  %s13 = ssub.s32 1, %s11
  %s14 = scalar_select 0, %s13, %s11
  $region1: #{transformer_encoder_layer.4} parent=0
    #allocation2 [shape = 'u8[16384]{0}', space=vmem, size = 0x4000, scoped, tag = 'input window, operand 0, single buffered']
    #allocation3 [shape = 's32[1]{0}', space=sflag, size = 0x4, scoped, tag = 'scoped memory for transformer_encoder_layer.4']
    #allocation4 [shape = 'u8[16384]{0}', space=vmem, size = 0x4000, scoped, tag = 'input window, operand 1, single buffered']
    #allocation5 [shape = 's32[1]{0}', space=sflag, size = 0x4, scoped, tag = 'scoped memory for transformer_encoder_layer.4']
    #allocation6 [shape = 'u8[16384]{0}', space=vmem, size = 0x4000, scoped, tag = 'input window, operand 2, single buffered']
    #allocation7 [shape = 'u8[16384]{0}', space=vmem, size = 0x4000, scoped, tag = 'input window, operand 3, single buffered']
    #allocation8 [shape = 's32[1]{0}', space=sflag, size = 0x4, scoped, tag = 'scoped memory for transformer_encoder_layer.4']
    %15 = vsyncpa [#allocation3], 0
    %16 = vsyncpa [#allocation5], 0
    %17 = vsyncpa [#allocation8], 0
    // Predicated region
    $region2: #{transformer_encoder_layer.4} parent=1 // pred_check
      _
    $region3: #{transformer_encoder_layer.4} parent=1 // pred_check_branch
      %19 = sbr.rel (0) target = $region5
    $region4: #{transformer_encoder_layer.4} parent=1 // pred_region
      %21 = vsyncadd [#allocation3], 0
      %s22 = sshll.u32 %s0, 4
      %s23 = int_to_ptr.hbm [resolvable:$true] %s22
      %s24 = sshll.u32 [#allocation2], 4
      %s25 = int_to_ptr.vmem [resolvable:$true] %s24
      %30 = dma.hbm_to_vmem [thread:$0]  %s23, 512, %s25, [#allocation3], 128, 128, 8
    $region5: #{transformer_encoder_layer.4} parent=1 // pred_fallthru
      _
    // Predicated region
    $region6: #{transformer_encoder_layer.4} parent=1 // pred_check
      _
    $region7: #{transformer_encoder_layer.4} parent=1 // pred_check_branch
      %32 = sbr.rel (0) target = $region9
    $region8: #{transformer_encoder_layer.4} parent=1 // pred_region
      %34 = vsyncadd [#allocation5], 0
      %s35 = sshll.u32 %s1, 4
      %s36 = int_to_ptr.hbm [resolvable:$true] %s35
      %s37 = sshll.u32 [#allocation4], 4
      %s38 = int_to_ptr.vmem [resolvable:$true] %s37
      %43 = dma.hbm_to_vmem [thread:$0]  %s36, 512, %s38, [#allocation5], 128, 128, 8
    $region9: #{transformer_encoder_layer.4} parent=1 // pred_fallthru
      _
    // Predicated region
    $region10: #{transformer_encoder_layer.4} parent=1 // pred_check
      _
    $region11: #{transformer_encoder_layer.4} parent=1 // pred_check_branch
      %45 = sbr.rel (0) target = $region13
    $region12: #{transformer_encoder_layer.4} parent=1 // pred_region
      %47 = vsyncadd [#allocation5], 0
      %s48 = sshll.u32 %s2, 4
      %s49 = int_to_ptr.hbm [resolvable:$true] %s48
      %s50 = sshll.u32 [#allocation6], 4
      %s51 = int_to_ptr.vmem [resolvable:$true] %s50
      %56 = dma.hbm_to_vmem [thread:$0]  %s49, 512, %s51, [#allocation5], 128, 128, 8
    $region13: #{transformer_encoder_layer.4} parent=1 // pred_fallthru
      _
    // Predicated region
    $region14: #{transformer_encoder_layer.4} parent=1 // pred_check
      _
    $region15: #{transformer_encoder_layer.4} parent=1 // pred_check_branch
      %58 = sbr.rel (0) target = $region17
    $region16: #{transformer_encoder_layer.4} parent=1 // pred_region
      %60 = vsyncadd [#allocation8], 0
      %s61 = sshll.u32 %s3, 4
      %s62 = int_to_ptr.hbm [resolvable:$true] %s61
      %s63 = sshll.u32 [#allocation7], 4
      %s64 = int_to_ptr.vmem [resolvable:$true] %s63
      %69 = dma.hbm_to_vmem [thread:$0]  %s62, 512, %s64, [#allocation8], 128, 128, 8
    $region17: #{transformer_encoder_layer.4} parent=1 // pred_fallthru
      _
    // Predicated region
    $region18: #{transformer_encoder_layer.4} parent=1 // pred_check
      _
    $region19: #{transformer_encoder_layer.4} parent=1 // pred_check_branch
      %71 = sbr.rel (0) target = $region21
    $region20: #{transformer_encoder_layer.4} parent=1 // pred_region
      _
    $region21: #{transformer_encoder_layer.4} parent=1 // pred_fallthru
      _
    // Predicated region
    $region22: #{transformer_encoder_layer.4} parent=1 // pred_check
      _
    $region23: #{transformer_encoder_layer.4} parent=1 // pred_check_branch
      %73 = sbr.rel (0) target = $region25
    $region24: #{transformer_encoder_layer.4} parent=1 // pred_region
      _
    $region25: #{transformer_encoder_layer.4} parent=1 // pred_fallthru
      _
    // Predicated region
    $region26: #{transformer_encoder_layer.4} parent=1 // pred_check
      _
    $region27: #{transformer_encoder_layer.4} parent=1 // pred_check_branch
      %75 = sbr.rel (0) target = $region29
    $region28: #{transformer_encoder_layer.4} parent=1 // pred_region
      _
    $region29: #{transformer_encoder_layer.4} parent=1 // pred_fallthru
      _
    // Predicated region
    $region30: #{transformer_encoder_layer.4} parent=1 // pred_check
      _
    $region31: #{transformer_encoder_layer.4} parent=1 // pred_check_branch
      %77 = sbr.rel (0) target = $region33
    $region32: #{transformer_encoder_layer.4} parent=1 // pred_region
      %79 = dma.done [#allocation3], 512
    $region33: #{transformer_encoder_layer.4} parent=1 // pred_fallthru
      _
    // Predicated region
    $region34: #{transformer_encoder_layer.4} parent=1 // pred_check
      _
    $region35: #{transformer_encoder_layer.4} parent=1 // pred_check_branch
      %81 = sbr.rel (0) target = $region37
    $region36: #{transformer_encoder_layer.4} parent=1 // pred_region
      %83 = dma.done [#allocation5], 512
    $region37: #{transformer_encoder_layer.4} parent=1 // pred_fallthru
      _
    // Predicated region
    $region38: #{transformer_encoder_layer.4} parent=1 // pred_check
      _
    $region39: #{transformer_encoder_layer.4} parent=1 // pred_check_branch
      %85 = sbr.rel (0) target = $region41
    $region40: #{transformer_encoder_layer.4} parent=1 // pred_region
      %87 = dma.done [#allocation5], 512
    $region41: #{transformer_encoder_layer.4} parent=1 // pred_fallthru
      _
    // Predicated region
    $region42: #{transformer_encoder_layer.4} parent=1 // pred_check
      _
    $region43: #{transformer_encoder_layer.4} parent=1 // pred_check_branch
      %89 = sbr.rel (0) target = $region45
    $region44: #{transformer_encoder_layer.4} parent=1 // pred_region
      %91 = dma.done [#allocation8], 512
    $region45: #{transformer_encoder_layer.4} parent=1 // pred_fallthru
      _
    %v92 = vld [vmem:[#allocation2] sm:$0xff]
    %v93 = vld [vmem:[#allocation2 + $0x8] sm:$0xff]
    %v94 = vld [vmem:[#allocation2 + $0x10] sm:$0xff]
    %v95 = vld [vmem:[#allocation2 + $0x18] sm:$0xff]
    %v96 = vld [vmem:[#allocation4] sm:$0xff]
    %v97 = vld [vmem:[#allocation4 + $0x8] sm:$0xff]
    %v98 = vld [vmem:[#allocation4 + $0x10] sm:$0xff]
    %v99 = vld [vmem:[#allocation4 + $0x18] sm:$0xff]
    %v100 = vld [vmem:[%s4] sm:$0x1]
    %v102 = vperm.slane %v100, 0
    %vm104 = vcmask 261120
    %v106 = vsel %vm104, %v92, 0
    %v109 = vsel %vm104, %v93, 0
    %v112 = vsel %vm104, %v94, 0
    %v115 = vsel %vm104, %v95, 0
    %117 = vmatpush.msra.mxu0 0.0
    %118 = vmatpush.msra.mxu0 0.0
    %119 = vmatpush.msra.mxu0 0.0
    %120 = vmatpush.msra.mxu0 0.0
    %121 = vmatpush.msra.mxu0 0.0
    %122 = vmatpush.msra.mxu0 0.0
    %123 = vmatpush.msra.mxu0 0.0
    %124 = vmatpush.msra.mxu0 0.0
    %125 = vmatpush.msra.mxu0 0.0
    %126 = vmatpush.msra.mxu0 0.0
    %127 = vmatpush.msra.mxu0 0.0
    %128 = vmatpush.msra.mxu0 0.0
    %129 = vmatpush.msra.mxu0 %v99
    %130 = vmatpush.msra.mxu0 %v98
    %131 = vmatpush.msra.mxu0 %v97
    %132 = vmatpush.msra.mxu0 %v96
    %133 = vmatmul.f32.gmra.mxu0 %v106
    %v134 = vpop.f32.mrf.mxu0
    %v135 = vadd.f32 %v102, %v134
    %136 = vmatmul.f32.gmra.mxu0 %v109
    %v137 = vpop.f32.mrf.mxu0
    %v138 = vadd.f32 %v102, %v137
    %139 = vmatmul.f32.gmra.mxu0 %v112
    %v140 = vpop.f32.mrf.mxu0
    %v141 = vadd.f32 %v102, %v140
    %142 = vmatmul.f32.gmra.mxu0 %v115
    %v143 = vpop.f32.mrf.mxu0
    %v144 = vadd.f32 %v102, %v143
    %145 = vdwg.mxu0
    %v146 = vld [vmem:[#allocation6] sm:$0xff]
    %v147 = vld [vmem:[#allocation6 + $0x8] sm:$0xff]
    %v148 = vld [vmem:[#allocation6 + $0x10] sm:$0xff]
    %v149 = vld [vmem:[#allocation6 + $0x18] sm:$0xff]
    %v150 = vld [vmem:[%s5] sm:$0x1]
    %v152 = vperm.slane %v150, 0
    %154 = vmatpush.msra.mxu0 0.0
    %155 = vmatpush.msra.mxu0 0.0
    %156 = vmatpush.msra.mxu0 0.0
    %157 = vmatpush.msra.mxu0 0.0
    %158 = vmatpush.msra.mxu0 0.0
    %159 = vmatpush.msra.mxu0 0.0
    %160 = vmatpush.msra.mxu0 0.0
    %161 = vmatpush.msra.mxu0 0.0
    %162 = vmatpush.msra.mxu0 0.0
    %163 = vmatpush.msra.mxu0 0.0
    %164 = vmatpush.msra.mxu0 0.0
    %165 = vmatpush.msra.mxu0 0.0
    %166 = vmatpush.msra.mxu0 %v149
    %167 = vmatpush.msra.mxu0 %v148
    %168 = vmatpush.msra.mxu0 %v147
    %169 = vmatpush.msra.mxu0 %v146
    %170 = vmatmul.f32.gmra.mxu0 %v106
    %v171 = vpop.f32.mrf.mxu0
    %v172 = vadd.f32 %v152, %v171
    %173 = vmatmul.f32.gmra.mxu0 %v109
    %v174 = vpop.f32.mrf.mxu0
    %v175 = vadd.f32 %v152, %v174
    %176 = vmatmul.f32.gmra.mxu0 %v112
    %v177 = vpop.f32.mrf.mxu0
    %v178 = vadd.f32 %v152, %v177
    %179 = vmatmul.f32.gmra.mxu0 %v115
    %v180 = vpop.f32.mrf.mxu0
    %v181 = vadd.f32 %v152, %v180
    %182 = vdwg.mxu0
    %v183 = vld [vmem:[#allocation7] sm:$0xff]
    %v184 = vld [vmem:[#allocation7 + $0x8] sm:$0xff]
    %v185 = vld [vmem:[#allocation7 + $0x10] sm:$0xff]
    %v186 = vld [vmem:[#allocation7 + $0x18] sm:$0xff]
    %v187 = vld [vmem:[%s6] sm:$0x1]
    %v189 = vperm.slane %v187, 0
    %191 = vmatpush.msra.mxu0 0.0
    %192 = vmatpush.msra.mxu0 0.0
    %193 = vmatpush.msra.mxu0 0.0
    %194 = vmatpush.msra.mxu0 0.0
    %195 = vmatpush.msra.mxu0 0.0
    %196 = vmatpush.msra.mxu0 0.0
    %197 = vmatpush.msra.mxu0 0.0
    %198 = vmatpush.msra.mxu0 0.0
    %199 = vmatpush.msra.mxu0 0.0
    %200 = vmatpush.msra.mxu0 0.0
    %201 = vmatpush.msra.mxu0 0.0
    %202 = vmatpush.msra.mxu0 0.0
    %203 = vmatpush.msra.mxu0 %v186
    %204 = vmatpush.msra.mxu0 %v185
    %205 = vmatpush.msra.mxu0 %v184
    %206 = vmatpush.msra.mxu0 %v183
    %207 = vmatmul.f32.gmra.mxu0 %v106
    %v208 = vpop.f32.mrf.mxu0
    %v209 = vadd.f32 %v189, %v208
    %210 = vmatmul.f32.gmra.mxu0 %v109
    %v211 = vpop.f32.mrf.mxu0
    %v212 = vadd.f32 %v189, %v211
    %213 = vmatmul.f32.gmra.mxu0 %v112
    %v214 = vpop.f32.mrf.mxu0
    %v215 = vadd.f32 %v189, %v214
    %216 = vmatmul.f32.gmra.mxu0 %v115
    %v217 = vpop.f32.mrf.mxu0
    %v218 = vadd.f32 %v189, %v217
    %219 = vdwg.mxu0
    %220 = vst.msk [vmem:[%s7] sm:$0xff] %vm104, %v135
    %221 = vst.msk [vmem:[%s7 + $0x8] sm:$0xff] %vm104, %v138
    %222 = vst.msk [vmem:[%s7 + $0x10] sm:$0xff] %vm104, %v141
    %223 = vst.msk [vmem:[%s7 + $0x18] sm:$0xff] %vm104, %v144
    %224 = vst.msk [vmem:[%s8] sm:$0xff] %vm104, %v172
    %225 = vst.msk [vmem:[%s8 + $0x8] sm:$0xff] %vm104, %v175
    %226 = vst.msk [vmem:[%s8 + $0x10] sm:$0xff] %vm104, %v178
    %227 = vst.msk [vmem:[%s8 + $0x18] sm:$0xff] %vm104, %v181
    %228 = vst.msk [vmem:[%s9] sm:$0xff] %vm104, %v209
    %229 = vst.msk [vmem:[%s9 + $0x8] sm:$0xff] %vm104, %v212
    %230 = vst.msk [vmem:[%s9 + $0x10] sm:$0xff] %vm104, %v215
    %231 = vst.msk [vmem:[%s9 + $0x18] sm:$0xff] %vm104, %v218
    // Predicated region
    $region46: #{transformer_encoder_layer.4} parent=1 // pred_check
      _
    $region47: #{transformer_encoder_layer.4} parent=1 // pred_check_branch
      %233 = sbr.rel (0) target = $region49
    $region48: #{transformer_encoder_layer.4} parent=1 // pred_region
      _
    $region49: #{transformer_encoder_layer.4} parent=1 // pred_fallthru
      _
    // Predicated region
    $region50: #{transformer_encoder_layer.4} parent=1 // pred_check
      _
    $region51: #{transformer_encoder_layer.4} parent=1 // pred_check_branch
      %235 = sbr.rel (0) target = $region53
    $region52: #{transformer_encoder_layer.4} parent=1 // pred_region
      _
    $region53: #{transformer_encoder_layer.4} parent=1 // pred_fallthru
      _
    // Predicated region
    $region54: #{transformer_encoder_layer.4} parent=1 // pred_check
      _
    $region55: #{transformer_encoder_layer.4} parent=1 // pred_check_branch
      %237 = sbr.rel (0) target = $region57
    $region56: #{transformer_encoder_layer.4} parent=1 // pred_region
      _
    $region57: #{transformer_encoder_layer.4} parent=1 // pred_fallthru
      _
    // Predicated region
    $region58: #{transformer_encoder_layer.4} parent=1 // pred_check
      _
    $region59: #{transformer_encoder_layer.4} parent=1 // pred_check_branch
      %239 = sbr.rel (0) target = $region61
    $region60: #{transformer_encoder_layer.4} parent=1 // pred_region
      _
    $region61: #{transformer_encoder_layer.4} parent=1 // pred_fallthru
      _
    // Predicated region
    $region62: #{transformer_encoder_layer.4} parent=1 // pred_check
      _
    $region63: #{transformer_encoder_layer.4} parent=1 // pred_check_branch
      %241 = sbr.rel (0) target = $region65
    $region64: #{transformer_encoder_layer.4} parent=1 // pred_region
      _
    $region65: #{transformer_encoder_layer.4} parent=1 // pred_fallthru
      _
    // Predicated region
    $region66: #{transformer_encoder_layer.4} parent=1 // pred_check
      _
    $region67: #{transformer_encoder_layer.4} parent=1 // pred_check_branch
      %243 = sbr.rel (0) target = $region69
    $region68: #{transformer_encoder_layer.4} parent=1 // pred_region
      _
    $region69: #{transformer_encoder_layer.4} parent=1 // pred_fallthru
      _
    %244 = vsyncpa [#allocation3], 1
    %245 = vsyncpa [#allocation5], 1
    %246 = vsyncpa [#allocation8], 1

// kernel: transformer_encoder_layer.7
$region0: #{transformer_encoder_layer.7}
  #allocation0 [shape = 'u32[]', space=smem, size = 0x4, offset = 0x4, fixed_abs, tag = 'smem constant byte address 0x4 - core index']
  #allocation1 [shape = 'u32[72,128]{1,0:T(1,128)}', space=vmem, size = 0x9000, scoped, tag = 'internal scratch']
  #allocation2 [shape = 'f32[32,32]{1,0:T(8,128)}', space=vmem, size = 0x4000, scoped, tag = 'scratch operand']
  %s0 = inlined_call_operand.vmem [shape: f32[32,32], index: 0, kind: input, shape index: {}]
  %s1 = inlined_call_operand.vmem [shape: f32[32,64], index: 1, kind: input, shape index: {}]
  %s2 = inlined_call_operand.vmem [shape: f32[1,64], index: 2, kind: input, shape index: {}]
  %s3 = inlined_call_operand.vmem [shape: f32[64,32], index: 3, kind: input, shape index: {}]
  %s4 = inlined_call_operand.vmem [shape: f32[1,32], index: 4, kind: input, shape index: {}]
  %s5 = inlined_call_operand.vmem [shape: f32[1,32], index: 5, kind: input, shape index: {}]
  %s6 = inlined_call_operand.vmem [shape: f32[1,32], index: 6, kind: input, shape index: {}]
  %s7 = inlined_call_operand.hbm [shape: f32[32,32], index: 7, kind: output, shape index: {}]
  %s8 = sld [smem:[#allocation0]]
  $region46: #{transformer_encoder_layer.7} parent=0
    _
  %s10 = ssub.s32 1, %s8
  %s11 = scalar_select 0, %s10, %s8
  $region1: #{transformer_encoder_layer.7} parent=0
    #allocation3 [shape = 'u8[16384]{0}', space=vmem, size = 0x4000, scoped, tag = 'output window, operand 0, single buffered']
    #allocation4 [shape = 's32[1]{0}', space=sflag, size = 0x4, scoped, tag = 'scoped memory for transformer_encoder_layer.7']
    %12 = vsyncpa [#allocation4], 0
    // Predicated region
    $region2: #{transformer_encoder_layer.7} parent=1 // pred_check
      _
    $region3: #{transformer_encoder_layer.7} parent=1 // pred_check_branch
      %14 = sbr.rel (0) target = $region5
    $region4: #{transformer_encoder_layer.7} parent=1 // pred_region
      _
    $region5: #{transformer_encoder_layer.7} parent=1 // pred_fallthru
      _
    // Predicated region
    $region6: #{transformer_encoder_layer.7} parent=1 // pred_check
      _
    $region7: #{transformer_encoder_layer.7} parent=1 // pred_check_branch
      %16 = sbr.rel (0) target = $region9
    $region8: #{transformer_encoder_layer.7} parent=1 // pred_region
      _
    $region9: #{transformer_encoder_layer.7} parent=1 // pred_fallthru
      _
    // Predicated region
    $region10: #{transformer_encoder_layer.7} parent=1 // pred_check
      _
    $region11: #{transformer_encoder_layer.7} parent=1 // pred_check_branch
      %18 = sbr.rel (0) target = $region13
    $region12: #{transformer_encoder_layer.7} parent=1 // pred_region
      _
    $region13: #{transformer_encoder_layer.7} parent=1 // pred_fallthru
      _
    // Predicated region
    $region14: #{transformer_encoder_layer.7} parent=1 // pred_check
      _
    $region15: #{transformer_encoder_layer.7} parent=1 // pred_check_branch
      %20 = sbr.rel (0) target = $region17
    $region16: #{transformer_encoder_layer.7} parent=1 // pred_region
      _
    $region17: #{transformer_encoder_layer.7} parent=1 // pred_fallthru
      _
    // Predicated region
    $region18: #{transformer_encoder_layer.7} parent=1 // pred_check
      _
    $region19: #{transformer_encoder_layer.7} parent=1 // pred_check_branch
      %22 = sbr.rel (0) target = $region21
    $region20: #{transformer_encoder_layer.7} parent=1 // pred_region
      _
    $region21: #{transformer_encoder_layer.7} parent=1 // pred_fallthru
      _
    // Predicated region
    $region22: #{transformer_encoder_layer.7} parent=1 // pred_check
      _
    $region23: #{transformer_encoder_layer.7} parent=1 // pred_check_branch
      %24 = sbr.rel (0) target = $region25
    $region24: #{transformer_encoder_layer.7} parent=1 // pred_region
      _
    $region25: #{transformer_encoder_layer.7} parent=1 // pred_fallthru
      _
    // Predicated region
    $region26: #{transformer_encoder_layer.7} parent=1 // pred_check
      _
    $region27: #{transformer_encoder_layer.7} parent=1 // pred_check_branch
      %26 = sbr.rel (0) target = $region29
    $region28: #{transformer_encoder_layer.7} parent=1 // pred_region
      _
    $region29: #{transformer_encoder_layer.7} parent=1 // pred_fallthru
      _
    %p27 = scmp.eq.s32.totalorder 0, 0
    // Predicated region
    $region30: #{transformer_encoder_layer.7} parent=1 // pred_check
      %p28 = pneg %p27
    $region31: #{transformer_encoder_layer.7} parent=1 // pred_check_branch
      %30 = sbr.rel (%p28) target = $region33
    $region32: #{transformer_encoder_layer.7} parent=1 // pred_region
      %vm31 = vcmask 261120
      %32 = vst.msk [vmem:[#allocation2] sm:$0xff] %vm31, 0.0
      %33 = vst.msk [vmem:[#allocation2 + $0x8] sm:$0xff] %vm31, 0.0
      %34 = vst.msk [vmem:[#allocation2 + $0x10] sm:$0xff] %vm31, 0.0
      %35 = vst.msk [vmem:[#allocation2 + $0x18] sm:$0xff] %vm31, 0.0
    $region33: #{transformer_encoder_layer.7} parent=1 // pred_fallthru
      _
    %v36 = vld [vmem:[%s0] sm:$0xff]
    %v37 = vld [vmem:[%s0 + $0x8] sm:$0xff]
    %v38 = vld [vmem:[%s0 + $0x10] sm:$0xff]
    %v39 = vld [vmem:[%s0 + $0x18] sm:$0xff]
    %v40 = vld [vmem:[%s1] sm:$0xff]
    %v41 = vld [vmem:[%s1 + $0x8] sm:$0xff]
    %v42 = vld [vmem:[%s1 + $0x10] sm:$0xff]
    %v43 = vld [vmem:[%s1 + $0x18] sm:$0xff]
    %v44 = vld [vmem:[%s2] sm:$0x1]
    %v46 = vperm.slane %v44, 0
    %vm48 = vcmask 261120
    %v50 = vsel %vm48, %v36, 0
    %v53 = vsel %vm48, %v37, 0
    %v56 = vsel %vm48, %v38, 0
    %v59 = vsel %vm48, %v39, 0
    %61 = vmatpush.msra.mxu0 0.0
    %62 = vmatpush.msra.mxu0 0.0
    %63 = vmatpush.msra.mxu0 0.0
    %64 = vmatpush.msra.mxu0 0.0
    %65 = vmatpush.msra.mxu0 0.0
    %66 = vmatpush.msra.mxu0 0.0
    %67 = vmatpush.msra.mxu0 0.0
    %68 = vmatpush.msra.mxu0 0.0
    %69 = vmatpush.msra.mxu0 0.0
    %70 = vmatpush.msra.mxu0 0.0
    %71 = vmatpush.msra.mxu0 0.0
    %72 = vmatpush.msra.mxu0 0.0
    %73 = vmatpush.msra.mxu0 %v43
    %74 = vmatpush.msra.mxu0 %v42
    %75 = vmatpush.msra.mxu0 %v41
    %76 = vmatpush.msra.mxu0 %v40
    %77 = vmatmul.f32.gmra.mxu0 %v50
    %v78 = vpop.f32.mrf.mxu0
    %v79 = vadd.f32 %v46, %v78
    %80 = vmatmul.f32.gmra.mxu0 %v53
    %v81 = vpop.f32.mrf.mxu0
    %v82 = vadd.f32 %v46, %v81
    %83 = vmatmul.f32.gmra.mxu0 %v56
    %v84 = vpop.f32.mrf.mxu0
    %v85 = vadd.f32 %v46, %v84
    %86 = vmatmul.f32.gmra.mxu0 %v59
    %v87 = vpop.f32.mrf.mxu0
    %v88 = vadd.f32 %v46, %v87
    %89 = vdwg.mxu0
    %v90 = vmax.f32 %v79, 0.0
    %v91 = vmax.f32 %v82, 0.0
    %v92 = vmax.f32 %v85, 0.0
    %v93 = vmax.f32 %v88, 0.0
    %v94 = vld [vmem:[#allocation2] sm:$0xff]
    %v95 = vld [vmem:[#allocation2 + $0x8] sm:$0xff]
    %v96 = vld [vmem:[#allocation2 + $0x10] sm:$0xff]
    %v97 = vld [vmem:[#allocation2 + $0x18] sm:$0xff]
    %v98 = vld [vmem:[%s3] sm:$0xff]
    %v99 = vld [vmem:[%s3 + $0x8] sm:$0xff]
    %v100 = vld [vmem:[%s3 + $0x10] sm:$0xff]
    %v101 = vld [vmem:[%s3 + $0x18] sm:$0xff]
    %v102 = vld [vmem:[%s3 + $0x20] sm:$0xff]
    %v103 = vld [vmem:[%s3 + $0x28] sm:$0xff]
    %v104 = vld [vmem:[%s3 + $0x30] sm:$0xff]
    %v105 = vld [vmem:[%s3 + $0x38] sm:$0xff]
    %vm106 = vcmask 523264
    %v108 = vsel %vm106, %v90, 0
    %v111 = vsel %vm106, %v91, 0
    %v114 = vsel %vm106, %v92, 0
    %v117 = vsel %vm106, %v93, 0
    %119 = vmatpush.msra.mxu0 0.0
    %120 = vmatpush.msra.mxu0 0.0
    %121 = vmatpush.msra.mxu0 0.0
    %122 = vmatpush.msra.mxu0 0.0
    %123 = vmatpush.msra.mxu0 0.0
    %124 = vmatpush.msra.mxu0 0.0
    %125 = vmatpush.msra.mxu0 0.0
    %126 = vmatpush.msra.mxu0 0.0
    %127 = vmatpush.msra.mxu0 %v105
    %128 = vmatpush.msra.mxu0 %v104
    %129 = vmatpush.msra.mxu0 %v103
    %130 = vmatpush.msra.mxu0 %v102
    %131 = vmatpush.msra.mxu0 %v101
    %132 = vmatpush.msra.mxu0 %v100
    %133 = vmatpush.msra.mxu0 %v99
    %134 = vmatpush.msra.mxu0 %v98
    %135 = vmatmul.f32.gmra.mxu0 %v108
    %v136 = vpop.f32.mrf.mxu0
    %v137 = vadd.f32 0.0, %v136
    %138 = vmatmul.f32.gmra.mxu0 %v111
    %v139 = vpop.f32.mrf.mxu0
    %v140 = vadd.f32 0.0, %v139
    %141 = vmatmul.f32.gmra.mxu0 %v114
    %v142 = vpop.f32.mrf.mxu0
    %v143 = vadd.f32 0.0, %v142
    %144 = vmatmul.f32.gmra.mxu0 %v117
    %v145 = vpop.f32.mrf.mxu0
    %v146 = vadd.f32 0.0, %v145
    %147 = vdwg.mxu0
    %v148 = vadd.f32 %v94, %v137
    %v149 = vadd.f32 %v95, %v140
    %v150 = vadd.f32 %v96, %v143
    %v151 = vadd.f32 %v97, %v146
    %152 = vst.msk [vmem:[#allocation2] sm:$0xff] %vm48, %v148
    %153 = vst.msk [vmem:[#allocation2 + $0x8] sm:$0xff] %vm48, %v149
    %154 = vst.msk [vmem:[#allocation2 + $0x10] sm:$0xff] %vm48, %v150
    %155 = vst.msk [vmem:[#allocation2 + $0x18] sm:$0xff] %vm48, %v151
    // Predicated region
    $region34: #{transformer_encoder_layer.7} parent=1 // pred_check
      %p156 = pneg %p27
    $region35: #{transformer_encoder_layer.7} parent=1 // pred_check_branch
      %158 = sbr.rel (%p156) target = $region37
    $region36: #{transformer_encoder_layer.7} parent=1 // pred_region
      %v159 = vld [vmem:[#allocation2] sm:$0xff]
      %v160 = vld [vmem:[#allocation2 + $0x8] sm:$0xff]
      %v161 = vld [vmem:[#allocation2 + $0x10] sm:$0xff]
      %v162 = vld [vmem:[#allocation2 + $0x18] sm:$0xff]
      %v163 = vadd.f32 %v36, %v159
      %v164 = vadd.f32 %v37, %v160
      %v165 = vadd.f32 %v38, %v161
      %v166 = vadd.f32 %v39, %v162
      %v167 = vld [vmem:[%s4] sm:$0x1]
      %v169 = vperm.slane %v167, 0
      %v171 = vadd.f32 %v163, %v169
      %v172 = vadd.f32 %v164, %v169
      %v173 = vadd.f32 %v165, %v169
      %v174 = vadd.f32 %v166, %v169
      %v175 = vld [vmem:[%s5] sm:$0x1]
      %v176 = vld [vmem:[%s6] sm:$0x1]
      %v177 = vsel %vm48, %v171, 0.0
      %178 = vadd.xlane.f32.xlu0 %v177
      %v179 = vpop.xlane.xlu0 %178
      %v180 = vsel %vm48, %v172, 0.0
      %181 = vadd.xlane.f32.xlu0 %v180
      %v182 = vpop.xlane.xlu0 %181
      %v183 = vsel %vm48, %v173, 0.0
      %184 = vadd.xlane.f32.xlu0 %v183
      %v185 = vpop.xlane.xlu0 %184
      %v186 = vsel %vm48, %v174, 0.0
      %187 = vadd.xlane.f32.xlu0 %v186
      %v188 = vpop.xlane.xlu0 %187
      %v189 = vrcp.pop 32.0
      %v190 = vmul.f32 32.0, %v189
      %v191 = vsub.f32 1.0, %v190
      %v192 = vmul.f32 %v189, %v191
      %v193 = vadd.f32 %v189, %v192
      %vm194 = vweird.f32 %v189
      %v195 = vsel %vm194, %v189, %v193
      %v196 = vmul.f32 %v179, %v195
      %v197 = vmul.f32 %v182, %v195
      %v198 = vmul.f32 %v185, %v195
      %v199 = vmul.f32 %v188, %v195
      %v200 = vsub.f32 %v171, %v196
      %v201 = vsub.f32 %v172, %v197
      %v202 = vsub.f32 %v173, %v198
      %v203 = vsub.f32 %v174, %v199
      %v204 = vmul.f32 %v200, %v200
      %v205 = vmul.f32 %v201, %v201
      %v206 = vmul.f32 %v202, %v202
      %v207 = vmul.f32 %v203, %v203
      %v208 = vsel %vm48, %v204, 0.0
      %209 = vadd.xlane.f32.xlu0 %v208
      %v210 = vpop.xlane.xlu0 %209
      %v211 = vsel %vm48, %v205, 0.0
      %212 = vadd.xlane.f32.xlu0 %v211
      %v213 = vpop.xlane.xlu0 %212
      %v214 = vsel %vm48, %v206, 0.0
      %215 = vadd.xlane.f32.xlu0 %v214
      %v216 = vpop.xlane.xlu0 %215
      %v217 = vsel %vm48, %v207, 0.0
      %218 = vadd.xlane.f32.xlu0 %v217
      %v219 = vpop.xlane.xlu0 %218
      %v220 = vmul.f32 %v210, %v195
      %v221 = vmul.f32 %v213, %v195
      %v222 = vmul.f32 %v216, %v195
      %v223 = vmul.f32 %v219, %v195
      %v224 = vadd.f32 %v220, 1e-05
      %v225 = vadd.f32 %v221, 1e-05
      %v226 = vadd.f32 %v222, 1e-05
      %v227 = vadd.f32 %v223, 1e-05
      %v228 = vrsqrt.pop %v224
      %v229 = vmul.f32 %v228, %v224
      %v230 = vmul.f32 %v229, %v228
      %v231 = vmul.f32 0.5, %v230
      %v232 = vsub.f32 1.5, %v231
      %v233 = vmul.f32 %v228, %v232
      %vm234 = vweird.f32 %v224
      %vm235 = vweird.f32 %v228
      %vm236 = vmor %vm234, %vm235
      %v237 = vsel %vm236, %v228, %v233
      %v238 = vrsqrt.pop %v225
      %v239 = vmul.f32 %v238, %v225
      %v240 = vmul.f32 %v239, %v238
      %v241 = vmul.f32 0.5, %v240
      %v242 = vsub.f32 1.5, %v241
      %v243 = vmul.f32 %v238, %v242
      %vm244 = vweird.f32 %v225
      %vm245 = vweird.f32 %v238
      %vm246 = vmor %vm244, %vm245
      %v247 = vsel %vm246, %v238, %v243
      %v248 = vrsqrt.pop %v226
      %v249 = vmul.f32 %v248, %v226
      %v250 = vmul.f32 %v249, %v248
      %v251 = vmul.f32 0.5, %v250
      %v252 = vsub.f32 1.5, %v251
      %v253 = vmul.f32 %v248, %v252
      %vm254 = vweird.f32 %v226
      %vm255 = vweird.f32 %v248
      %vm256 = vmor %vm254, %vm255
      %v257 = vsel %vm256, %v248, %v253
      %v258 = vrsqrt.pop %v227
      %v259 = vmul.f32 %v258, %v227
      %v260 = vmul.f32 %v259, %v258
      %v261 = vmul.f32 0.5, %v260
      %v262 = vsub.f32 1.5, %v261
      %v263 = vmul.f32 %v258, %v262
      %vm264 = vweird.f32 %v227
      %vm265 = vweird.f32 %v258
      %vm266 = vmor %vm264, %vm265
      %v267 = vsel %vm266, %v258, %v263
      %v268 = vmul.f32 %v200, %v237
      %v269 = vmul.f32 %v201, %v247
      %v270 = vmul.f32 %v202, %v257
      %v271 = vmul.f32 %v203, %v267
      %v273 = vperm.slane %v175, 0
      %v275 = vmul.f32 %v268, %v273
      %v276 = vmul.f32 %v269, %v273
      %v277 = vmul.f32 %v270, %v273
      %v278 = vmul.f32 %v271, %v273
      %v280 = vperm.slane %v176, 0
      %v282 = vadd.f32 %v275, %v280
      %v283 = vadd.f32 %v276, %v280
      %v284 = vadd.f32 %v277, %v280
      %v285 = vadd.f32 %v278, %v280
      %286 = vst.msk [vmem:[#allocation3] sm:$0xff] %vm48, %v282
      %287 = vst.msk [vmem:[#allocation3 + $0x8] sm:$0xff] %vm48, %v283
      %288 = vst.msk [vmem:[#allocation3 + $0x10] sm:$0xff] %vm48, %v284
      %289 = vst.msk [vmem:[#allocation3 + $0x18] sm:$0xff] %vm48, %v285
    $region37: #{transformer_encoder_layer.7} parent=1 // pred_fallthru
      _
    // Predicated region
    $region38: #{transformer_encoder_layer.7} parent=1 // pred_check
      _
    $region39: #{transformer_encoder_layer.7} parent=1 // pred_check_branch
      %291 = sbr.rel (0) target = $region41
    $region40: #{transformer_encoder_layer.7} parent=1 // pred_region
      %293 = vsyncadd [#allocation4], 0
      %s294 = sshll.u32 [#allocation3], 4
      %s295 = int_to_ptr.vmem [resolvable:$true] %s294
      %s296 = sshll.u32 %s7, 4
      %s297 = int_to_ptr.hbm [resolvable:$true] %s296
      %302 = dma.vmem_to_hbm [thread:$0]  %s295, 512, %s297, [#allocation4], 128, 128, 8
    $region41: #{transformer_encoder_layer.7} parent=1 // pred_fallthru
      _
    // Predicated region
    $region42: #{transformer_encoder_layer.7} parent=1 // pred_check
      _
    $region43: #{transformer_encoder_layer.7} parent=1 // pred_check_branch
      %304 = sbr.rel (0) target = $region45
    $region44: #{transformer_encoder_layer.7} parent=1 // pred_region
      %306 = dma.done [#allocation4], 512
    $region45: #{transformer_encoder_layer.7} parent=1 // pred_fallthru
      _
    %307 = vsyncpa [#allocation4], 1

// kernel: transformer_encoder_layer.5
$region0: #{transformer_encoder_layer.5}
  #allocation0 [shape = 'u32[]', space=smem, size = 0x4, offset = 0x4, fixed_abs, tag = 'smem constant byte address 0x4 - core index']
  #allocation1 [shape = 'u32[72,128]{1,0:T(1,128)}', space=vmem, size = 0x9000, scoped, tag = 'internal scratch']
  #allocation2 [shape = 'f32[4,16,1]{2,1,0:T(8,128)}', space=vmem, size = 0x8000, scoped, tag = 'scratch operand']
  #allocation3 [shape = 'f32[4,16,1]{2,1,0:T(8,128)}', space=vmem, size = 0x8000, scoped, tag = 'scratch operand']
  #allocation4 [shape = 'f32[4,16,8]{2,1,0:T(8,128)}', space=vmem, size = 0x8000, scoped, tag = 'scratch operand']
  %s0 = inlined_call_operand.vmem [shape: f32[2,16,32], index: 0, kind: input, shape index: {}]
  %s1 = inlined_call_operand.vmem [shape: f32[2,16,32], index: 1, kind: input, shape index: {}]
  %s2 = inlined_call_operand.vmem [shape: f32[2,16,32], index: 2, kind: input, shape index: {}]
  %s3 = inlined_call_operand.vmem [shape: f32[2,16,32], index: 3, kind: output, shape index: {}]
  %s4 = sld [smem:[#allocation0]]
  $region53: #{transformer_encoder_layer.5} parent=0
    _
  %s6 = ssub.s32 1, %s4
  %s7 = scalar_select 0, %s6, %s4
  loop: start=0, step=1, limit=4
  $region2: #{transformer_encoder_layer.5} parent=0 // loop_pre_header
    _
  $region3: #{transformer_encoder_layer.5} parent=0 // loop_header
    %s9 = sphi 0, %s13
    %p10 = scmp.ge.s32.totalorder %s9, 4
    %s16 = sphi 0, %s42
    %s17 = sphi 0, %s38
    %s18 = sphi 0, %s34
    %s19 = sphi 0, %s30
    %s20 = sphi 0, %s16
    %s21 = sphi 0, %s17
    %s22 = sphi 0, %s18
    %s23 = sphi 0, %s19
    %s24 = sphi 0, %s20
    %s25 = sphi 0, %s21
    %s26 = sphi 0, %s22
    %s27 = sphi 0, %s23
    %s49 = sphi 0, %s51
    %s52 = sphi 0, %s49
    %s53 = sphi 0, %s52
    %s69 = sphi 0, %s53
    %s79 = sphi 0, %s81
    %s82 = sphi 0, %s79
    %s83 = sphi 0, %s82
    %s99 = sphi 0, %s83
    %s109 = sphi 0, %s111
    %s112 = sphi 0, %s109
    %s113 = sphi 0, %s112
    %s129 = sphi 0, %s113
    %s139 = sphi 0, %s141
    %s142 = sphi 0, %s139
    %s143 = sphi 0, %s142
    %s159 = sphi 0, %s143
  $region4: #{transformer_encoder_layer.5} parent=0 // loop_header_branch
    %12 = sbr.rel (%p10) target = $region8
  $region5: #{transformer_encoder_layer.5} parent=0 // loop_body
    %s14 = ssub.s32 %s9, 1
    %s15 = ssub.s32 %s9, 2
    %s28 = sadd.s32 1, %s19
    %p29 = scmp.ge.s32.totalorder %s28, 1
    %s30 = scalar_select %p29, 0, %s28
    %s31 = sadd.s32 1, %s18
    %s32 = scalar_select %p29, %s31, %s18
    %p33 = scmp.ge.s32.totalorder %s32, 1
    %s34 = scalar_select %p33, 0, %s32
    %s35 = sadd.s32 1, %s17
    %s36 = scalar_select %p33, %s35, %s17
    %p37 = scmp.ge.s32.totalorder %s36, 1
    %s38 = scalar_select %p37, 0, %s36
    %s39 = sadd.s32 1, %s16
    %s40 = scalar_select %p37, %s39, %s16
    %p41 = scmp.ge.s32.totalorder %s40, 2
    %s42 = scalar_select %p41, 0, %s40
    %s43 = ssub.s32 %s16, %s42
    %s44 = ssub.s32 %s18, %s34
    %s45 = sor.u32 %s43, %s44
    %s46 = ssub.s32 %s17, %s38
    %s47 = sor.u32 %s45, %s46
    %p48 = scmp.eq.s32.totalorder %s47, 0
    %s50 = sadd.s32 %s49, 1
    %s51 = scalar_select %p48, %s49, %s50
    %p54 = pneg %p48
    %p55 = scmp.eq.s32.totalorder %s9, 1
    %p56 = por %p54, %p55
    %p57 = scmp.ne.s32.totalorder %s49, %s52
    %p58 = scmp.eq.s32.totalorder %s9, 0
    %p59 = por %p57, %p58
    %p60 = scmp.ne.s32.totalorder %s49, %s52
    %p61 = scmp.eq.s32.totalorder %s14, 1
    %p62 = por %p60, %p61
    %p63 = scmp.ne.s32.totalorder %s52, %s53
    %p64 = scmp.eq.s32.totalorder %s14, 0
    %p65 = por %p63, %p64
    %p66 = scmp.ne.s32.totalorder %s52, %s53
    %p67 = scmp.eq.s32.totalorder %s15, 1
    %p68 = por %p66, %p67
    %p70 = scmp.ne.s32.totalorder %s53, %s69
    %p71 = scmp.eq.s32.totalorder %s15, 0
    %p72 = por %p70, %p71
    %s73 = ssub.s32 %s16, %s42
    %s74 = ssub.s32 %s19, %s30
    %s75 = sor.u32 %s73, %s74
    %s76 = ssub.s32 %s17, %s38
    %s77 = sor.u32 %s75, %s76
    %p78 = scmp.eq.s32.totalorder %s77, 0
    %s80 = sadd.s32 %s79, 1
    %s81 = scalar_select %p78, %s79, %s80
    %p84 = pneg %p78
    %p85 = scmp.eq.s32.totalorder %s9, 1
    %p86 = por %p84, %p85
    %p87 = scmp.ne.s32.totalorder %s79, %s82
    %p88 = scmp.eq.s32.totalorder %s9, 0
    %p89 = por %p87, %p88
    %p90 = scmp.ne.s32.totalorder %s79, %s82
    %p91 = scmp.eq.s32.totalorder %s14, 1
    %p92 = por %p90, %p91
    %p93 = scmp.ne.s32.totalorder %s82, %s83
    %p94 = scmp.eq.s32.totalorder %s14, 0
    %p95 = por %p93, %p94
    %p96 = scmp.ne.s32.totalorder %s82, %s83
    %p97 = scmp.eq.s32.totalorder %s15, 1
    %p98 = por %p96, %p97
    %p100 = scmp.ne.s32.totalorder %s83, %s99
    %p101 = scmp.eq.s32.totalorder %s15, 0
    %p102 = por %p100, %p101
    %s103 = ssub.s32 %s16, %s42
    %s104 = ssub.s32 %s19, %s30
    %s105 = sor.u32 %s103, %s104
    %s106 = ssub.s32 %s17, %s38
    %s107 = sor.u32 %s105, %s106
    %p108 = scmp.eq.s32.totalorder %s107, 0
    %s110 = sadd.s32 %s109, 1
    %s111 = scalar_select %p108, %s109, %s110
    %p114 = pneg %p108
    %p115 = scmp.eq.s32.totalorder %s9, 1
    %p116 = por %p114, %p115
    %p117 = scmp.ne.s32.totalorder %s109, %s112
    %p118 = scmp.eq.s32.totalorder %s9, 0
    %p119 = por %p117, %p118
    %p120 = scmp.ne.s32.totalorder %s109, %s112
    %p121 = scmp.eq.s32.totalorder %s14, 1
    %p122 = por %p120, %p121
    %p123 = scmp.ne.s32.totalorder %s112, %s113
    %p124 = scmp.eq.s32.totalorder %s14, 0
    %p125 = por %p123, %p124
    %p126 = scmp.ne.s32.totalorder %s112, %s113
    %p127 = scmp.eq.s32.totalorder %s15, 1
    %p128 = por %p126, %p127
    %p130 = scmp.ne.s32.totalorder %s113, %s129
    %p131 = scmp.eq.s32.totalorder %s15, 0
    %p132 = por %p130, %p131
    %s133 = ssub.s32 %s16, %s42
    %s134 = ssub.s32 %s18, %s34
    %s135 = sor.u32 %s133, %s134
    %s136 = ssub.s32 %s17, %s38
    %s137 = sor.u32 %s135, %s136
    %p138 = scmp.eq.s32.totalorder %s137, 0
    %s140 = sadd.s32 %s139, 1
    %s141 = scalar_select %p138, %s139, %s140
    %p144 = pneg %p138
    %p145 = scmp.eq.s32.totalorder %s9, 1
    %p146 = por %p144, %p145
    %p147 = scmp.ne.s32.totalorder %s139, %s142
    %p148 = scmp.eq.s32.totalorder %s9, 0
    %p149 = por %p147, %p148
    %p150 = scmp.ne.s32.totalorder %s139, %s142
    %p151 = scmp.eq.s32.totalorder %s14, 1
    %p152 = por %p150, %p151
    %p153 = scmp.ne.s32.totalorder %s142, %s143
    %p154 = scmp.eq.s32.totalorder %s14, 0
    %p155 = por %p153, %p154
    %p156 = scmp.ne.s32.totalorder %s142, %s143
    %p157 = scmp.eq.s32.totalorder %s15, 1
    %p158 = por %p156, %p157
    %p160 = scmp.ne.s32.totalorder %s143, %s159
    %p161 = scmp.eq.s32.totalorder %s15, 0
    %p162 = por %p160, %p161
    %p163 = scmp.le.s32.totalorder 1, %s9
    %p164 = scmp.lt.s32.totalorder %s9, 3
    %p165 = pnand %p163, %p164
    %p166 = pneg %p165
    // Predicated region
    $region9: #{transformer_encoder_layer.5} parent=5 // pred_check
      _
    $region10: #{transformer_encoder_layer.5} parent=5 // pred_check_branch
      %168 = sbr.rel (%p165) target = $region12
    $region11: #{transformer_encoder_layer.5} parent=5 // pred_region
      %s169 = ssub.s32 %s9, 1
    $region12: #{transformer_encoder_layer.5} parent=5 // pred_fallthru
      _
    %p170 = scmp.lt.s32.totalorder %s9, 2
    // Predicated region
    $region13: #{transformer_encoder_layer.5} parent=5 // pred_check
      %p171 = pneg %p170
    $region14: #{transformer_encoder_layer.5} parent=5 // pred_check_branch
      %173 = sbr.rel (%p171) target = $region16
    $region15: #{transformer_encoder_layer.5} parent=5 // pred_region
      // Predicated region
      $region17: #{transformer_encoder_layer.5} parent=15 // pred_check
        %p174 = pneg %p59
      $region18: #{transformer_encoder_layer.5} parent=15 // pred_check_branch
        %176 = sbr.rel (%p174) target = $region20
      $region19: #{transformer_encoder_layer.5} parent=15 // pred_region
        %s177 = smul.u32 2, %s18
        %p178 = scmp.lt.s32.totalorder %s16, 1
        %s179 = scalar_select %p178, %s16, 1
        %p180 = scmp.lt.s32.totalorder %s177, 1
        %s181 = scalar_select %p180, %s177, 1
        %p182 = scmp.lt.s32.totalorder %s17, 0
        %s183 = scalar_select %p182, %s17, 0
        %s184 = sadd.s32 %s183, %s181
        %s185 = smul.addr %s179, 2
        %s186 = sadd.s32 %s184, %s185
        %s187 = smul.addr %s186, 8
        %s188 = scalar_lea.vmem %s0, %s187
        %s189 = smul.u32 2, %s18
      $region20: #{transformer_encoder_layer.5} parent=15 // pred_fallthru
        _
      // Predicated region
      $region21: #{transformer_encoder_layer.5} parent=15 // pred_check
        %p190 = pneg %p89
      $region22: #{transformer_encoder_layer.5} parent=15 // pred_check_branch
        %192 = sbr.rel (%p190) target = $region24
      $region23: #{transformer_encoder_layer.5} parent=15 // pred_region
        %s193 = smul.u32 2, %s19
        %p194 = scmp.lt.s32.totalorder %s16, 1
        %s195 = scalar_select %p194, %s16, 1
        %p196 = scmp.lt.s32.totalorder %s193, 1
        %s197 = scalar_select %p196, %s193, 1
        %p198 = scmp.lt.s32.totalorder %s17, 0
        %s199 = scalar_select %p198, %s17, 0
        %s200 = sadd.s32 %s199, %s197
        %s201 = smul.addr %s195, 2
        %s202 = sadd.s32 %s200, %s201
        %s203 = smul.addr %s202, 8
        %s204 = scalar_lea.vmem %s1, %s203
        %s205 = smul.u32 2, %s19
      $region24: #{transformer_encoder_layer.5} parent=15 // pred_fallthru
        _
      // Predicated region
      $region25: #{transformer_encoder_layer.5} parent=15 // pred_check
        %p206 = pneg %p119
      $region26: #{transformer_encoder_layer.5} parent=15 // pred_check_branch
        %208 = sbr.rel (%p206) target = $region28
      $region27: #{transformer_encoder_layer.5} parent=15 // pred_region
        %s209 = smul.u32 2, %s19
        %p210 = scmp.lt.s32.totalorder %s16, 1
        %s211 = scalar_select %p210, %s16, 1
        %p212 = scmp.lt.s32.totalorder %s209, 1
        %s213 = scalar_select %p212, %s209, 1
        %p214 = scmp.lt.s32.totalorder %s17, 0
        %s215 = scalar_select %p214, %s17, 0
        %s216 = sadd.s32 %s215, %s213
        %s217 = smul.addr %s211, 2
        %s218 = sadd.s32 %s216, %s217
        %s219 = smul.addr %s218, 8
        %s220 = scalar_lea.vmem %s2, %s219
        %s221 = smul.u32 2, %s19
      $region28: #{transformer_encoder_layer.5} parent=15 // pred_fallthru
        _
    $region16: #{transformer_encoder_layer.5} parent=5 // pred_fallthru
      _
    %p222 = scmp.le.s32.totalorder 1, %s9
    %p223 = scmp.lt.s32.totalorder %s9, 3
    %p224 = pnand %p222, %p223
    %p225 = pneg %p224
    // Predicated region
    $region29: #{transformer_encoder_layer.5} parent=5 // pred_check
      _
    $region30: #{transformer_encoder_layer.5} parent=5 // pred_check_branch
      %227 = sbr.rel (%p224) target = $region32
    $region31: #{transformer_encoder_layer.5} parent=5 // pred_region
      %s228 = ssub.s32 %s9, 1
      %s229 = smul.u32 2, %s22
      %p230 = scmp.lt.s32.totalorder %s20, 1
      %s231 = scalar_select %p230, %s20, 1
      %p232 = scmp.lt.s32.totalorder %s229, 1
      %s233 = scalar_select %p232, %s229, 1
      %p234 = scmp.lt.s32.totalorder %s21, 0
      %s235 = scalar_select %p234, %s21, 0
      %s236 = sadd.s32 %s235, %s233
      %s237 = smul.addr %s231, 2
      %s238 = sadd.s32 %s236, %s237
      %s239 = smul.addr %s238, 8
      %s240 = scalar_lea.vmem %s0, %s239
      %p241 = pneg %p65
      %p242 = pneg %p62
      %s243 = smul.u32 2, %s23
      %p244 = scmp.lt.s32.totalorder %s20, 1
      %s245 = scalar_select %p244, %s20, 1
      %p246 = scmp.lt.s32.totalorder %s243, 1
      %s247 = scalar_select %p246, %s243, 1
      %p248 = scmp.lt.s32.totalorder %s21, 0
      %s249 = scalar_select %p248, %s21, 0
      %s250 = sadd.s32 %s249, %s247
      %s251 = smul.addr %s245, 2
      %s252 = sadd.s32 %s250, %s251
      %s253 = smul.addr %s252, 8
      %s254 = scalar_lea.vmem %s1, %s253
      %p255 = pneg %p95
      %p256 = pneg %p92
      %s257 = smul.u32 2, %s23
      %p258 = scmp.lt.s32.totalorder %s20, 1
      %s259 = scalar_select %p258, %s20, 1
      %p260 = scmp.lt.s32.totalorder %s257, 1
      %s261 = scalar_select %p260, %s257, 1
      %p262 = scmp.lt.s32.totalorder %s21, 0
      %s263 = scalar_select %p262, %s21, 0
      %s264 = sadd.s32 %s263, %s261
      %s265 = smul.addr %s259, 2
      %s266 = sadd.s32 %s264, %s265
      %s267 = smul.addr %s266, 8
      %s268 = scalar_lea.vmem %s2, %s267
      %p269 = pneg %p125
      %p270 = pneg %p122
      %p271 = pneg %p155
      %p272 = pneg %p152
      %s273 = smul.u32 2, %s22
      %p274 = scmp.lt.s32.totalorder %s20, 1
      %s275 = scalar_select %p274, %s20, 1
      %p276 = scmp.lt.s32.totalorder %s273, 1
      %s277 = scalar_select %p276, %s273, 1
      %p278 = scmp.lt.s32.totalorder %s21, 0
      %s279 = scalar_select %p278, %s21, 0
      %s280 = sadd.s32 %s279, %s277
      %s281 = smul.addr %s275, 2
      %s282 = sadd.s32 %s280, %s281
      %s283 = smul.addr %s282, 8
      %s284 = scalar_lea.vmem %s3, %s283
      %s285 = smul.u32 2, %s22
      %p286 = scmp.lt.s32.totalorder %s20, 1
      %s287 = scalar_select %p286, %s20, 1
      %p288 = scmp.lt.s32.totalorder %s285, 1
      %s289 = scalar_select %p288, %s285, 1
      %p290 = scmp.lt.s32.totalorder %s21, 0
      %s291 = scalar_select %p290, %s21, 0
      %s292 = sadd.s32 %s291, %s289
      %s293 = smul.addr %s287, 2
      %s294 = sadd.s32 %s292, %s293
      %s295 = smul.addr %s294, 8
      %s296 = scalar_lea.vmem %s0, %s295
      %s297 = smul.u32 2, %s22
      %s298 = smul.u32 2, %s23
      %p299 = scmp.lt.s32.totalorder %s20, 1
      %s300 = scalar_select %p299, %s20, 1
      %p301 = scmp.lt.s32.totalorder %s298, 1
      %s302 = scalar_select %p301, %s298, 1
      %p303 = scmp.lt.s32.totalorder %s21, 0
      %s304 = scalar_select %p303, %s21, 0
      %s305 = sadd.s32 %s304, %s302
      %s306 = smul.addr %s300, 2
      %s307 = sadd.s32 %s305, %s306
      %s308 = smul.addr %s307, 8
      %s309 = scalar_lea.vmem %s1, %s308
      %s310 = smul.u32 2, %s23
      %s311 = smul.u32 2, %s23
      %p312 = scmp.lt.s32.totalorder %s20, 1
      %s313 = scalar_select %p312, %s20, 1
      %p314 = scmp.lt.s32.totalorder %s311, 1
      %s315 = scalar_select %p314, %s311, 1
      %p316 = scmp.lt.s32.totalorder %s21, 0
      %s317 = scalar_select %p316, %s21, 0
      %s318 = sadd.s32 %s317, %s315
      %s319 = smul.addr %s313, 2
      %s320 = sadd.s32 %s318, %s319
      %s321 = smul.addr %s320, 8
      %s322 = scalar_lea.vmem %s2, %s321
      %s323 = smul.u32 2, %s23
      %s324 = smul.u32 2, %s22
      %p325 = scmp.lt.s32.totalorder %s20, 1
      %s326 = scalar_select %p325, %s20, 1
      %p327 = scmp.lt.s32.totalorder %s324, 1
      %s328 = scalar_select %p327, %s324, 1
      %p329 = scmp.lt.s32.totalorder %s21, 0
      %s330 = scalar_select %p329, %s21, 0
      %s331 = sadd.s32 %s330, %s328
      %s332 = smul.addr %s326, 2
      %s333 = sadd.s32 %s331, %s332
      %s334 = smul.addr %s333, 8
      %s335 = scalar_lea.vmem %s3, %s334
      %s336 = smul.u32 2, %s22
      %p337 = scmp.eq.s32.totalorder %s23, 0
      // Predicated region
      $region33: #{transformer_encoder_layer.5} parent=31 // pred_check
        %p338 = pneg %p337
      $region34: #{transformer_encoder_layer.5} parent=31 // pred_check_branch
        %340 = sbr.rel (%p338) target = $region36
      $region35: #{transformer_encoder_layer.5} parent=31 // pred_region
        %vm341 = vcmask 7168
        %342 = vst.msk [vmem:[#allocation2] sm:$0xff] %vm341, -inf
        %343 = vst.msk [vmem:[#allocation2 + $0x8] sm:$0xff] %vm341, -inf
        %344 = vst.msk [vmem:[#allocation2 + $0x10] sm:$0xff] %vm341, -inf
        %345 = vst.msk [vmem:[#allocation2 + $0x18] sm:$0xff] %vm341, -inf
        %346 = vst.msk [vmem:[#allocation2 + $0x20] sm:$0xff] %vm341, -inf
        %347 = vst.msk [vmem:[#allocation2 + $0x28] sm:$0xff] %vm341, -inf
        %348 = vst.msk [vmem:[#allocation2 + $0x30] sm:$0xff] %vm341, -inf
        %349 = vst.msk [vmem:[#allocation2 + $0x38] sm:$0xff] %vm341, -inf
        %350 = vst.msk [vmem:[#allocation3] sm:$0xff] %vm341, 0.0
        %351 = vst.msk [vmem:[#allocation3 + $0x8] sm:$0xff] %vm341, 0.0
        %352 = vst.msk [vmem:[#allocation3 + $0x10] sm:$0xff] %vm341, 0.0
        %353 = vst.msk [vmem:[#allocation3 + $0x18] sm:$0xff] %vm341, 0.0
        %354 = vst.msk [vmem:[#allocation3 + $0x20] sm:$0xff] %vm341, 0.0
        %355 = vst.msk [vmem:[#allocation3 + $0x28] sm:$0xff] %vm341, 0.0
        %356 = vst.msk [vmem:[#allocation3 + $0x30] sm:$0xff] %vm341, 0.0
        %357 = vst.msk [vmem:[#allocation3 + $0x38] sm:$0xff] %vm341, 0.0
        %vm358 = vcmask 64512
        %359 = vst.msk [vmem:[#allocation4] sm:$0xff] %vm358, 0.0
        %360 = vst.msk [vmem:[#allocation4 + $0x8] sm:$0xff] %vm358, 0.0
        %361 = vst.msk [vmem:[#allocation4 + $0x10] sm:$0xff] %vm358, 0.0
        %362 = vst.msk [vmem:[#allocation4 + $0x18] sm:$0xff] %vm358, 0.0
        %363 = vst.msk [vmem:[#allocation4 + $0x20] sm:$0xff] %vm358, 0.0
        %364 = vst.msk [vmem:[#allocation4 + $0x28] sm:$0xff] %vm358, 0.0
        %365 = vst.msk [vmem:[#allocation4 + $0x30] sm:$0xff] %vm358, 0.0
        %366 = vst.msk [vmem:[#allocation4 + $0x38] sm:$0xff] %vm358, 0.0
      $region36: #{transformer_encoder_layer.5} parent=31 // pred_fallthru
        _
      %v367 = vld [vmem:[%s296] sm:$0xff]
      %v368 = vld [vmem:[%s296 + $0x8] sm:$0xff]
      %v369 = vld [vmem:[%s309] sm:$0xff]
      %v370 = vld [vmem:[%s309 + $0x8] sm:$0xff]
      %vm371 = vcmask 64512
      %v373 = vsel %vm371, %v367, 0
      %v376 = vsel %vm371, %v368, 0
      %v379 = vsel %vm371, %v369, 0
      %v382 = vsel %vm371, %v370, 0
      %384 = vmatpush.xpose.msra.mxu0 0.0
      %385 = vmatpush.xpose.msra.mxu0 0.0
      %386 = vmatpush.xpose.msra.mxu0 0.0
      %387 = vmatpush.xpose.msra.mxu0 0.0
      %388 = vmatpush.xpose.msra.mxu0 0.0
      %389 = vmatpush.xpose.msra.mxu0 0.0
      %390 = vmatpush.xpose.msra.mxu0 0.0
      %391 = vmatpush.xpose.msra.mxu0 0.0
      %392 = vmatpush.xpose.msra.mxu0 0.0
      %393 = vmatpush.xpose.msra.mxu0 0.0
      %394 = vmatpush.xpose.msra.mxu0 0.0
      %395 = vmatpush.xpose.msra.mxu0 0.0
      %396 = vmatpush.xpose.msra.mxu0 0.0
      %397 = vmatpush.xpose.msra.mxu0 0.0
      %398 = vmatpush.xpose.msra.mxu0 %v382
      %399 = vmatpush.xpose.msra.mxu0 %v379
      %400 = vmatmul.f32.gmra.mxu0 %v373
      %v401 = vpop.f32.mrf.mxu0
      %v402 = vadd.f32 0.0, %v401
      %403 = vmatmul.f32.gmra.mxu0 %v376
      %v404 = vpop.f32.mrf.mxu0
      %v405 = vadd.f32 0.0, %v404
      %406 = vdwg.mxu0
      %v407 = vmul.f32 %v402, 0.35355338
      %v408 = vmul.f32 %v405, 0.35355338
      %v409 = vld [vmem:[#allocation2] sm:$0xff]
      %v410 = vld [vmem:[#allocation2 + $0x8] sm:$0xff]
      %vm411 = vcmask 130048
      %v412 = vsel %vm411, %v407, -inf
      %413 = vmax.xlane.f32.xlu0 %v412
      %v414 = vpop.xlane.xlu0 %413
      %v415 = vsel %vm411, %v408, -inf
      %416 = vmax.xlane.f32.xlu0 %v415
      %v417 = vpop.xlane.xlu0 %416
      %v418 = vmax.f32 %v409, %v414
      %v419 = vmax.f32 %v410, %v417
      %v420 = vsub.f32 %v409, %v418
      %v421 = vsub.f32 %v410, %v419
      %v422 = vmul.f32 %v420, 1.442695
      %v423 = vpow.pop %v422
      %v424 = vmul.f32 %v421, 1.442695
      %v425 = vpow.pop %v424
      %427 = vset.pattern.permute.xlu0 0
      %428 = vperm.xlu0 %427, %v418
      %v429 = vpop.permute.xlu0 %428
      %432 = vset.pattern.permute.xlu0 0
      %433 = vperm.xlu0 %432, %v419
      %v434 = vpop.permute.xlu0 %433
      %v436 = vsub.f32 %v407, %v429
      %v437 = vsub.f32 %v408, %v434
      %v438 = vmul.f32 %v436, 1.442695
      %v439 = vpow.pop %v438
      %v440 = vmul.f32 %v437, 1.442695
      %v441 = vpow.pop %v440
      %v442 = vld [vmem:[#allocation3] sm:$0xff]
      %v443 = vld [vmem:[#allocation3 + $0x8] sm:$0xff]
      %v444 = vmul.f32 %v423, %v442
      %v445 = vmul.f32 %v425, %v443
      %v446 = vsel %vm411, %v439, 0.0
      %447 = vadd.xlane.f32.xlu0 %v446
      %v448 = vpop.xlane.xlu0 %447
      %v449 = vsel %vm411, %v441, 0.0
      %450 = vadd.xlane.f32.xlu0 %v449
      %v451 = vpop.xlane.xlu0 %450
      %v452 = vadd.f32 %v444, %v448
      %v453 = vadd.f32 %v445, %v451
      %vm454 = vcmask 7168
      %455 = vst.msk [vmem:[#allocation3] sm:$0xff] %vm454, %v452
      %456 = vst.msk [vmem:[#allocation3 + $0x8] sm:$0xff] %vm454, %v453
      %v457 = vld [vmem:[#allocation4] sm:$0xff]
      %v458 = vld [vmem:[#allocation4 + $0x8] sm:$0xff]
      %460 = vset.pattern.permute.xlu0 0
      %461 = vperm.xlu0 %460, %v423
      %v462 = vpop.permute.xlu0 %461
      %465 = vset.pattern.permute.xlu0 0
      %466 = vperm.xlu0 %465, %v425
      %v467 = vpop.permute.xlu0 %466
      %v469 = vmul.f32 %v462, %v457
      %v470 = vmul.f32 %v467, %v458
      %v471 = vld [vmem:[%s322] sm:$0xff]
      %v472 = vld [vmem:[%s322 + $0x8] sm:$0xff]
      %v474 = vsel %vm411, %v439, 0
      %v477 = vsel %vm411, %v441, 0
      %479 = vmatpush.msra.mxu0 0.0
      %480 = vmatpush.msra.mxu0 0.0
      %481 = vmatpush.msra.mxu0 0.0
      %482 = vmatpush.msra.mxu0 0.0
      %483 = vmatpush.msra.mxu0 0.0
      %484 = vmatpush.msra.mxu0 0.0
      %485 = vmatpush.msra.mxu0 0.0
      %486 = vmatpush.msra.mxu0 0.0
      %487 = vmatpush.msra.mxu0 0.0
      %488 = vmatpush.msra.mxu0 0.0
      %489 = vmatpush.msra.mxu0 0.0
      %490 = vmatpush.msra.mxu0 0.0
      %491 = vmatpush.msra.mxu0 0.0
      %492 = vmatpush.msra.mxu0 0.0
      %493 = vmatpush.msra.mxu0 %v472
      %494 = vmatpush.msra.mxu0 %v471
      %495 = vmatmul.f32.gmra.mxu0 %v474
      %v496 = vpop.f32.mrf.mxu0
      %v497 = vadd.f32 0.0, %v496
      %498 = vmatmul.f32.gmra.mxu0 %v477
      %v499 = vpop.f32.mrf.mxu0
      %v500 = vadd.f32 0.0, %v499
      %501 = vdwg.mxu0
      %v502 = vadd.f32 %v469, %v497
      %v503 = vadd.f32 %v470, %v500
      %504 = vst.msk [vmem:[#allocation4] sm:$0xff] %vm371, %v502
      %505 = vst.msk [vmem:[#allocation4 + $0x8] sm:$0xff] %vm371, %v503
      %506 = vst.msk [vmem:[#allocation2] sm:$0xff] %vm454, %v418
      %507 = vst.msk [vmem:[#allocation2 + $0x8] sm:$0xff] %vm454, %v419
      %v508 = vld [vmem:[%s296] sm:$0xff]
      %v509 = vld [vmem:[%s296 + $0x8] sm:$0xff]
      %v510 = vld [vmem:[%s309] sm:$0xff]
      %v511 = vld [vmem:[%s309 + $0x8] sm:$0xff]
      %514 = vrot.lane.b32.xlu0 %v508, 120
      %v515 = vpop.permute.xlu0 %514
      %516 = vrot.lane.b32.xlu0 %v509, 120
      %v517 = vpop.permute.xlu0 %516
      %520 = vrot.lane.b32.xlu0 %v510, 120
      %v521 = vpop.permute.xlu0 %520
      %522 = vrot.lane.b32.xlu0 %v511, 120
      %v523 = vpop.permute.xlu0 %522
      %v524 = vsel %vm371, %v515, 0
      %v526 = vsel %vm371, %v517, 0
      %v528 = vsel %vm371, %v521, 0
      %v530 = vsel %vm371, %v523, 0
      %532 = vmatpush.xpose.msra.mxu0 0.0
      %533 = vmatpush.xpose.msra.mxu0 0.0
      %534 = vmatpush.xpose.msra.mxu0 0.0
      %535 = vmatpush.xpose.msra.mxu0 0.0
      %536 = vmatpush.xpose.msra.mxu0 0.0
      %537 = vmatpush.xpose.msra.mxu0 0.0
      %538 = vmatpush.xpose.msra.mxu0 0.0
      %539 = vmatpush.xpose.msra.mxu0 0.0
      %540 = vmatpush.xpose.msra.mxu0 0.0
      %541 = vmatpush.xpose.msra.mxu0 0.0
      %542 = vmatpush.xpose.msra.mxu0 0.0
      %543 = vmatpush.xpose.msra.mxu0 0.0
      %544 = vmatpush.xpose.msra.mxu0 0.0
      %545 = vmatpush.xpose.msra.mxu0 0.0
      %546 = vmatpush.xpose.msra.mxu0 %v530
      %547 = vmatpush.xpose.msra.mxu0 %v528
      %548 = vmatmul.f32.gmra.mxu0 %v524
      %v549 = vpop.f32.mrf.mxu0
      %v550 = vadd.f32 0.0, %v549
      %551 = vmatmul.f32.gmra.mxu0 %v526
      %v552 = vpop.f32.mrf.mxu0
      %v553 = vadd.f32 0.0, %v552
      %554 = vdwg.mxu0
      %v555 = vmul.f32 %v550, 0.35355338
      %v556 = vmul.f32 %v553, 0.35355338
      %s557 = scalar_lea.vmem [#allocation2], 16
      %v558 = vld [vmem:[%s557] sm:$0xff]
      %v559 = vld [vmem:[%s557 + $0x8] sm:$0xff]
      %v560 = vsel %vm411, %v555, -inf
      %561 = vmax.xlane.f32.xlu0 %v560
      %v562 = vpop.xlane.xlu0 %561
      %v563 = vsel %vm411, %v556, -inf
      %564 = vmax.xlane.f32.xlu0 %v563
      %v565 = vpop.xlane.xlu0 %564
      %v566 = vmax.f32 %v558, %v562
      %v567 = vmax.f32 %v559, %v565
      %v568 = vsub.f32 %v558, %v566
      %v569 = vsub.f32 %v559, %v567
      %v570 = vmul.f32 %v568, 1.442695
      %v571 = vpow.pop %v570
      %v572 = vmul.f32 %v569, 1.442695
      %v573 = vpow.pop %v572
      %575 = vset.pattern.permute.xlu0 0
      %576 = vperm.xlu0 %575, %v566
      %v577 = vpop.permute.xlu0 %576
      %580 = vset.pattern.permute.xlu0 0
      %581 = vperm.xlu0 %580, %v567
      %v582 = vpop.permute.xlu0 %581
      %v584 = vsub.f32 %v555, %v577
      %v585 = vsub.f32 %v556, %v582
      %v586 = vmul.f32 %v584, 1.442695
      %v587 = vpow.pop %v586
      %v588 = vmul.f32 %v585, 1.442695
      %v589 = vpow.pop %v588
      %s590 = scalar_lea.vmem [#allocation3], 16
      %v591 = vld [vmem:[%s590] sm:$0xff]
      %v592 = vld [vmem:[%s590 + $0x8] sm:$0xff]
      %v593 = vmul.f32 %v571, %v591
      %v594 = vmul.f32 %v573, %v592
      %v595 = vsel %vm411, %v587, 0.0
      %596 = vadd.xlane.f32.xlu0 %v595
      %v597 = vpop.xlane.xlu0 %596
      %v598 = vsel %vm411, %v589, 0.0
      %599 = vadd.xlane.f32.xlu0 %v598
      %v600 = vpop.xlane.xlu0 %599
      %v601 = vadd.f32 %v593, %v597
      %v602 = vadd.f32 %v594, %v600
      %603 = vst.msk [vmem:[%s590] sm:$0xff] %vm454, %v601
      %604 = vst.msk [vmem:[%s590 + $0x8] sm:$0xff] %vm454, %v602
      %s605 = scalar_lea.vmem [#allocation4], 16
      %v606 = vld [vmem:[%s605] sm:$0xff]
      %v607 = vld [vmem:[%s605 + $0x8] sm:$0xff]
      %609 = vset.pattern.permute.xlu0 0
      %610 = vperm.xlu0 %609, %v571
      %v611 = vpop.permute.xlu0 %610
      %614 = vset.pattern.permute.xlu0 0
      %615 = vperm.xlu0 %614, %v573
      %v616 = vpop.permute.xlu0 %615
      %v618 = vmul.f32 %v611, %v606
      %v619 = vmul.f32 %v616, %v607
      %v620 = vld [vmem:[%s322] sm:$0xff]
      %v621 = vld [vmem:[%s322 + $0x8] sm:$0xff]
      %624 = vrot.lane.b32.xlu0 %v620, 120
      %v625 = vpop.permute.xlu0 %624
      %626 = vrot.lane.b32.xlu0 %v621, 120
      %v627 = vpop.permute.xlu0 %626
      %v631 = vsel %vm411, %v587, 0
      %v634 = vsel %vm411, %v589, 0
      %636 = vmatpush.msra.mxu0 0.0
      %637 = vmatpush.msra.mxu0 0.0
      %638 = vmatpush.msra.mxu0 0.0
      %639 = vmatpush.msra.mxu0 0.0
      %640 = vmatpush.msra.mxu0 0.0
      %641 = vmatpush.msra.mxu0 0.0
      %642 = vmatpush.msra.mxu0 0.0
      %643 = vmatpush.msra.mxu0 0.0
      %644 = vmatpush.msra.mxu0 0.0
      %645 = vmatpush.msra.mxu0 0.0
      %646 = vmatpush.msra.mxu0 0.0
      %647 = vmatpush.msra.mxu0 0.0
      %648 = vmatpush.msra.mxu0 0.0
      %649 = vmatpush.msra.mxu0 0.0
      %650 = vmatpush.msra.mxu0 %v627
      %651 = vmatpush.msra.mxu0 %v625
      %652 = vmatmul.f32.gmra.mxu0 %v631
      %v653 = vpop.f32.mrf.mxu0
      %v654 = vadd.f32 0.0, %v653
      %655 = vmatmul.f32.gmra.mxu0 %v634
      %v656 = vpop.f32.mrf.mxu0
      %v657 = vadd.f32 0.0, %v656
      %658 = vdwg.mxu0
      %v659 = vadd.f32 %v618, %v654
      %v660 = vadd.f32 %v619, %v657
      %661 = vst.msk [vmem:[%s605] sm:$0xff] %vm371, %v659
      %662 = vst.msk [vmem:[%s605 + $0x8] sm:$0xff] %vm371, %v660
      %663 = vst.msk [vmem:[%s557] sm:$0xff] %vm454, %v566
      %664 = vst.msk [vmem:[%s557 + $0x8] sm:$0xff] %vm454, %v567
      %v665 = vld [vmem:[%s296] sm:$0xff]
      %v666 = vld [vmem:[%s296 + $0x8] sm:$0xff]
      %v667 = vld [vmem:[%s309] sm:$0xff]
      %v668 = vld [vmem:[%s309 + $0x8] sm:$0xff]
      %671 = vrot.lane.b32.xlu0 %v665, 112
      %v672 = vpop.permute.xlu0 %671
      %673 = vrot.lane.b32.xlu0 %v666, 112
      %v674 = vpop.permute.xlu0 %673
      %677 = vrot.lane.b32.xlu0 %v667, 112
      %v678 = vpop.permute.xlu0 %677
      %679 = vrot.lane.b32.xlu0 %v668, 112
      %v680 = vpop.permute.xlu0 %679
      %v681 = vsel %vm371, %v672, 0
      %v683 = vsel %vm371, %v674, 0
      %v685 = vsel %vm371, %v678, 0
      %v687 = vsel %vm371, %v680, 0
      %689 = vmatpush.xpose.msra.mxu0 0.0
      %690 = vmatpush.xpose.msra.mxu0 0.0
      %691 = vmatpush.xpose.msra.mxu0 0.0
      %692 = vmatpush.xpose.msra.mxu0 0.0
      %693 = vmatpush.xpose.msra.mxu0 0.0
      %694 = vmatpush.xpose.msra.mxu0 0.0
      %695 = vmatpush.xpose.msra.mxu0 0.0
      %696 = vmatpush.xpose.msra.mxu0 0.0
      %697 = vmatpush.xpose.msra.mxu0 0.0
      %698 = vmatpush.xpose.msra.mxu0 0.0
      %699 = vmatpush.xpose.msra.mxu0 0.0
      %700 = vmatpush.xpose.msra.mxu0 0.0
      %701 = vmatpush.xpose.msra.mxu0 0.0
      %702 = vmatpush.xpose.msra.mxu0 0.0
      %703 = vmatpush.xpose.msra.mxu0 %v687
      %704 = vmatpush.xpose.msra.mxu0 %v685
      %705 = vmatmul.f32.gmra.mxu0 %v681
      %v706 = vpop.f32.mrf.mxu0
      %v707 = vadd.f32 0.0, %v706
      %708 = vmatmul.f32.gmra.mxu0 %v683
      %v709 = vpop.f32.mrf.mxu0
      %v710 = vadd.f32 0.0, %v709
      %711 = vdwg.mxu0
      %v712 = vmul.f32 %v707, 0.35355338
      %v713 = vmul.f32 %v710, 0.35355338
      %s714 = scalar_lea.vmem [#allocation2], 32
      %v715 = vld [vmem:[%s714] sm:$0xff]
      %v716 = vld [vmem:[%s714 + $0x8] sm:$0xff]
      %v717 = vsel %vm411, %v712, -inf
      %718 = vmax.xlane.f32.xlu0 %v717
      %v719 = vpop.xlane.xlu0 %718
      %v720 = vsel %vm411, %v713, -inf
      %721 = vmax.xlane.f32.xlu0 %v720
      %v722 = vpop.xlane.xlu0 %721
      %v723 = vmax.f32 %v715, %v719
      %v724 = vmax.f32 %v716, %v722
      %v725 = vsub.f32 %v715, %v723
      %v726 = vsub.f32 %v716, %v724
      %v727 = vmul.f32 %v725, 1.442695
      %v728 = vpow.pop %v727
      %v729 = vmul.f32 %v726, 1.442695
      %v730 = vpow.pop %v729
      %732 = vset.pattern.permute.xlu0 0
      %733 = vperm.xlu0 %732, %v723
      %v734 = vpop.permute.xlu0 %733
      %737 = vset.pattern.permute.xlu0 0
      %738 = vperm.xlu0 %737, %v724
      %v739 = vpop.permute.xlu0 %738
      %v741 = vsub.f32 %v712, %v734
      %v742 = vsub.f32 %v713, %v739
      %v743 = vmul.f32 %v741, 1.442695
      %v744 = vpow.pop %v743
      %v745 = vmul.f32 %v742, 1.442695
      %v746 = vpow.pop %v745
      %s747 = scalar_lea.vmem [#allocation3], 32
      %v748 = vld [vmem:[%s747] sm:$0xff]
      %v749 = vld [vmem:[%s747 + $0x8] sm:$0xff]
      %v750 = vmul.f32 %v728, %v748
      %v751 = vmul.f32 %v730, %v749
      %v752 = vsel %vm411, %v744, 0.0
      %753 = vadd.xlane.f32.xlu0 %v752
      %v754 = vpop.xlane.xlu0 %753
      %v755 = vsel %vm411, %v746, 0.0
      %756 = vadd.xlane.f32.xlu0 %v755
      %v757 = vpop.xlane.xlu0 %756
      %v758 = vadd.f32 %v750, %v754
      %v759 = vadd.f32 %v751, %v757
      %760 = vst.msk [vmem:[%s747] sm:$0xff] %vm454, %v758
      %761 = vst.msk [vmem:[%s747 + $0x8] sm:$0xff] %vm454, %v759
      %s762 = scalar_lea.vmem [#allocation4], 32
      %v763 = vld [vmem:[%s762] sm:$0xff]
      %v764 = vld [vmem:[%s762 + $0x8] sm:$0xff]
      %766 = vset.pattern.permute.xlu0 0
      %767 = vperm.xlu0 %766, %v728
      %v768 = vpop.permute.xlu0 %767
      %771 = vset.pattern.permute.xlu0 0
      %772 = vperm.xlu0 %771, %v730
      %v773 = vpop.permute.xlu0 %772
      %v775 = vmul.f32 %v768, %v763
      %v776 = vmul.f32 %v773, %v764
      %v777 = vld [vmem:[%s322] sm:$0xff]
      %v778 = vld [vmem:[%s322 + $0x8] sm:$0xff]
      %781 = vrot.lane.b32.xlu0 %v777, 112
      %v782 = vpop.permute.xlu0 %781
      %783 = vrot.lane.b32.xlu0 %v778, 112
      %v784 = vpop.permute.xlu0 %783
      %v788 = vsel %vm411, %v744, 0
      %v791 = vsel %vm411, %v746, 0
      %793 = vmatpush.msra.mxu0 0.0
      %794 = vmatpush.msra.mxu0 0.0
      %795 = vmatpush.msra.mxu0 0.0
      %796 = vmatpush.msra.mxu0 0.0
      %797 = vmatpush.msra.mxu0 0.0
      %798 = vmatpush.msra.mxu0 0.0
      %799 = vmatpush.msra.mxu0 0.0
      %800 = vmatpush.msra.mxu0 0.0
      %801 = vmatpush.msra.mxu0 0.0
      %802 = vmatpush.msra.mxu0 0.0
      %803 = vmatpush.msra.mxu0 0.0
      %804 = vmatpush.msra.mxu0 0.0
      %805 = vmatpush.msra.mxu0 0.0
      %806 = vmatpush.msra.mxu0 0.0
      %807 = vmatpush.msra.mxu0 %v784
      %808 = vmatpush.msra.mxu0 %v782
      %809 = vmatmul.f32.gmra.mxu0 %v788
      %v810 = vpop.f32.mrf.mxu0
      %v811 = vadd.f32 0.0, %v810
      %812 = vmatmul.f32.gmra.mxu0 %v791
      %v813 = vpop.f32.mrf.mxu0
      %v814 = vadd.f32 0.0, %v813
      %815 = vdwg.mxu0
      %v816 = vadd.f32 %v775, %v811
      %v817 = vadd.f32 %v776, %v814
      %818 = vst.msk [vmem:[%s762] sm:$0xff] %vm371, %v816
      %819 = vst.msk [vmem:[%s762 + $0x8] sm:$0xff] %vm371, %v817
      %820 = vst.msk [vmem:[%s714] sm:$0xff] %vm454, %v723
      %821 = vst.msk [vmem:[%s714 + $0x8] sm:$0xff] %vm454, %v724
      %v822 = vld [vmem:[%s296] sm:$0xff]
      %v823 = vld [vmem:[%s296 + $0x8] sm:$0xff]
      %v824 = vld [vmem:[%s309] sm:$0xff]
      %v825 = vld [vmem:[%s309 + $0x8] sm:$0xff]
      %828 = vrot.lane.b32.xlu0 %v822, 104
      %v829 = vpop.permute.xlu0 %828
      %830 = vrot.lane.b32.xlu0 %v823, 104
      %v831 = vpop.permute.xlu0 %830
      %834 = vrot.lane.b32.xlu0 %v824, 104
      %v835 = vpop.permute.xlu0 %834
      %836 = vrot.lane.b32.xlu0 %v825, 104
      %v837 = vpop.permute.xlu0 %836
      %v838 = vsel %vm371, %v829, 0
      %v840 = vsel %vm371, %v831, 0
      %v842 = vsel %vm371, %v835, 0
      %v844 = vsel %vm371, %v837, 0
      %846 = vmatpush.xpose.msra.mxu0 0.0
      %847 = vmatpush.xpose.msra.mxu0 0.0
      %848 = vmatpush.xpose.msra.mxu0 0.0
      %849 = vmatpush.xpose.msra.mxu0 0.0
      %850 = vmatpush.xpose.msra.mxu0 0.0
      %851 = vmatpush.xpose.msra.mxu0 0.0
      %852 = vmatpush.xpose.msra.mxu0 0.0
      %853 = vmatpush.xpose.msra.mxu0 0.0
      %854 = vmatpush.xpose.msra.mxu0 0.0
      %855 = vmatpush.xpose.msra.mxu0 0.0
      %856 = vmatpush.xpose.msra.mxu0 0.0
      %857 = vmatpush.xpose.msra.mxu0 0.0
      %858 = vmatpush.xpose.msra.mxu0 0.0
      %859 = vmatpush.xpose.msra.mxu0 0.0
      %860 = vmatpush.xpose.msra.mxu0 %v844
      %861 = vmatpush.xpose.msra.mxu0 %v842
      %862 = vmatmul.f32.gmra.mxu0 %v838
      %v863 = vpop.f32.mrf.mxu0
      %v864 = vadd.f32 0.0, %v863
      %865 = vmatmul.f32.gmra.mxu0 %v840
      %v866 = vpop.f32.mrf.mxu0
      %v867 = vadd.f32 0.0, %v866
      %868 = vdwg.mxu0
      %v869 = vmul.f32 %v864, 0.35355338
      %v870 = vmul.f32 %v867, 0.35355338
      %s871 = scalar_lea.vmem [#allocation2], 48
      %v872 = vld [vmem:[%s871] sm:$0xff]
      %v873 = vld [vmem:[%s871 + $0x8] sm:$0xff]
      %v874 = vsel %vm411, %v869, -inf
      %875 = vmax.xlane.f32.xlu0 %v874
      %v876 = vpop.xlane.xlu0 %875
      %v877 = vsel %vm411, %v870, -inf
      %878 = vmax.xlane.f32.xlu0 %v877
      %v879 = vpop.xlane.xlu0 %878
      %v880 = vmax.f32 %v872, %v876
      %v881 = vmax.f32 %v873, %v879
      %v882 = vsub.f32 %v872, %v880
      %v883 = vsub.f32 %v873, %v881
      %v884 = vmul.f32 %v882, 1.442695
      %v885 = vpow.pop %v884
      %v886 = vmul.f32 %v883, 1.442695
      %v887 = vpow.pop %v886
      %889 = vset.pattern.permute.xlu0 0
      %890 = vperm.xlu0 %889, %v880
      %v891 = vpop.permute.xlu0 %890
      %894 = vset.pattern.permute.xlu0 0
      %895 = vperm.xlu0 %894, %v881
      %v896 = vpop.permute.xlu0 %895
      %v898 = vsub.f32 %v869, %v891
      %v899 = vsub.f32 %v870, %v896
      %v900 = vmul.f32 %v898, 1.442695
      %v901 = vpow.pop %v900
      %v902 = vmul.f32 %v899, 1.442695
      %v903 = vpow.pop %v902
      %s904 = scalar_lea.vmem [#allocation3], 48
      %v905 = vld [vmem:[%s904] sm:$0xff]
      %v906 = vld [vmem:[%s904 + $0x8] sm:$0xff]
      %v907 = vmul.f32 %v885, %v905
      %v908 = vmul.f32 %v887, %v906
      %v909 = vsel %vm411, %v901, 0.0
      %910 = vadd.xlane.f32.xlu0 %v909
      %v911 = vpop.xlane.xlu0 %910
      %v912 = vsel %vm411, %v903, 0.0
      %913 = vadd.xlane.f32.xlu0 %v912
      %v914 = vpop.xlane.xlu0 %913
      %v915 = vadd.f32 %v907, %v911
      %v916 = vadd.f32 %v908, %v914
      %917 = vst.msk [vmem:[%s904] sm:$0xff] %vm454, %v915
      %918 = vst.msk [vmem:[%s904 + $0x8] sm:$0xff] %vm454, %v916
      %s919 = scalar_lea.vmem [#allocation4], 48
      %v920 = vld [vmem:[%s919] sm:$0xff]
      %v921 = vld [vmem:[%s919 + $0x8] sm:$0xff]
      %923 = vset.pattern.permute.xlu0 0
      %924 = vperm.xlu0 %923, %v885
      %v925 = vpop.permute.xlu0 %924
      %928 = vset.pattern.permute.xlu0 0
      %929 = vperm.xlu0 %928, %v887
      %v930 = vpop.permute.xlu0 %929
      %v932 = vmul.f32 %v925, %v920
      %v933 = vmul.f32 %v930, %v921
      %v934 = vld [vmem:[%s322] sm:$0xff]
      %v935 = vld [vmem:[%s322 + $0x8] sm:$0xff]
      %938 = vrot.lane.b32.xlu0 %v934, 104
      %v939 = vpop.permute.xlu0 %938
      %940 = vrot.lane.b32.xlu0 %v935, 104
      %v941 = vpop.permute.xlu0 %940
      %v945 = vsel %vm411, %v901, 0
      %v948 = vsel %vm411, %v903, 0
      %950 = vmatpush.msra.mxu0 0.0
      %951 = vmatpush.msra.mxu0 0.0
      %952 = vmatpush.msra.mxu0 0.0
      %953 = vmatpush.msra.mxu0 0.0
      %954 = vmatpush.msra.mxu0 0.0
      %955 = vmatpush.msra.mxu0 0.0
      %956 = vmatpush.msra.mxu0 0.0
      %957 = vmatpush.msra.mxu0 0.0
      %958 = vmatpush.msra.mxu0 0.0
      %959 = vmatpush.msra.mxu0 0.0
      %960 = vmatpush.msra.mxu0 0.0
      %961 = vmatpush.msra.mxu0 0.0
      %962 = vmatpush.msra.mxu0 0.0
      %963 = vmatpush.msra.mxu0 0.0
      %964 = vmatpush.msra.mxu0 %v941
      %965 = vmatpush.msra.mxu0 %v939
      %966 = vmatmul.f32.gmra.mxu0 %v945
      %v967 = vpop.f32.mrf.mxu0
      %v968 = vadd.f32 0.0, %v967
      %969 = vmatmul.f32.gmra.mxu0 %v948
      %v970 = vpop.f32.mrf.mxu0
      %v971 = vadd.f32 0.0, %v970
      %972 = vdwg.mxu0
      %v973 = vadd.f32 %v932, %v968
      %v974 = vadd.f32 %v933, %v971
      %975 = vst.msk [vmem:[%s919] sm:$0xff] %vm371, %v973
      %976 = vst.msk [vmem:[%s919 + $0x8] sm:$0xff] %vm371, %v974
      %977 = vst.msk [vmem:[%s871] sm:$0xff] %vm454, %v880
      %978 = vst.msk [vmem:[%s871 + $0x8] sm:$0xff] %vm454, %v881
      // Predicated region
      $region37: #{transformer_encoder_layer.5} parent=31 // pred_check
        %p979 = pneg %p337
      $region38: #{transformer_encoder_layer.5} parent=31 // pred_check_branch
        %981 = sbr.rel (%p979) target = $region40
      $region39: #{transformer_encoder_layer.5} parent=31 // pred_region
        %v982 = vld [vmem:[#allocation3] sm:$0xff]
        %v983 = vld [vmem:[#allocation3 + $0x8] sm:$0xff]
        %v984 = vrcp.pop %v982
        %v985 = vrcp.pop %v983
        %v986 = vld [vmem:[#allocation4] sm:$0xff]
        %v987 = vld [vmem:[#allocation4 + $0x8] sm:$0xff]
        %989 = vset.pattern.permute.xlu0 0
        %990 = vperm.xlu0 %989, %v984
        %v991 = vpop.permute.xlu0 %990
        %994 = vset.pattern.permute.xlu0 0
        %995 = vperm.xlu0 %994, %v985
        %v996 = vpop.permute.xlu0 %995
        %v998 = vmul.f32 %v986, %v991
        %v999 = vmul.f32 %v987, %v996
        %1000 = vst.msk [vmem:[%s335] sm:$0xff] %vm371, %v998
        %1001 = vst.msk [vmem:[%s335 + $0x8] sm:$0xff] %vm371, %v999
        %v1002 = vld [vmem:[%s590] sm:$0xff]
        %v1003 = vld [vmem:[%s590 + $0x8] sm:$0xff]
        %v1004 = vrcp.pop %v1002
        %v1005 = vrcp.pop %v1003
        %v1006 = vld [vmem:[%s605] sm:$0xff]
        %v1007 = vld [vmem:[%s605 + $0x8] sm:$0xff]
        %1009 = vset.pattern.permute.xlu0 0
        %1010 = vperm.xlu0 %1009, %v1004
        %v1011 = vpop.permute.xlu0 %1010
        %1014 = vset.pattern.permute.xlu0 0
        %1015 = vperm.xlu0 %1014, %v1005
        %v1016 = vpop.permute.xlu0 %1015
        %v1018 = vmul.f32 %v1006, %v1011
        %v1019 = vmul.f32 %v1007, %v1016
        %1022 = vrot.lane.b32.xlu0 %v1018, 8
        %v1023 = vpop.permute.xlu0 %1022
        %1024 = vrot.lane.b32.xlu0 %v1019, 8
        %v1025 = vpop.permute.xlu0 %1024
        %vm1028 = vcmask 130112
        %1029 = vst.msk [vmem:[%s335] sm:$0xff] %vm1028, %v1023
        %1030 = vst.msk [vmem:[%s335 + $0x8] sm:$0xff] %vm1028, %v1025
        %v1031 = vld [vmem:[%s747] sm:$0xff]
        %v1032 = vld [vmem:[%s747 + $0x8] sm:$0xff]
        %v1033 = vrcp.pop %v1031
        %v1034 = vrcp.pop %v1032
        %v1035 = vld [vmem:[%s762] sm:$0xff]
        %v1036 = vld [vmem:[%s762 + $0x8] sm:$0xff]
        %1038 = vset.pattern.permute.xlu0 0
        %1039 = vperm.xlu0 %1038, %v1033
        %v1040 = vpop.permute.xlu0 %1039
        %1043 = vset.pattern.permute.xlu0 0
        %1044 = vperm.xlu0 %1043, %v1034
        %v1045 = vpop.permute.xlu0 %1044
        %v1047 = vmul.f32 %v1035, %v1040
        %v1048 = vmul.f32 %v1036, %v1045
        %1051 = vrot.lane.b32.xlu0 %v1047, 16
        %v1052 = vpop.permute.xlu0 %1051
        %1053 = vrot.lane.b32.xlu0 %v1048, 16
        %v1054 = vpop.permute.xlu0 %1053
        %vm1057 = vcmask 195712
        %1058 = vst.msk [vmem:[%s335] sm:$0xff] %vm1057, %v1052
        %1059 = vst.msk [vmem:[%s335 + $0x8] sm:$0xff] %vm1057, %v1054
        %v1060 = vld [vmem:[%s904] sm:$0xff]
        %v1061 = vld [vmem:[%s904 + $0x8] sm:$0xff]
        %v1062 = vrcp.pop %v1060
        %v1063 = vrcp.pop %v1061
        %v1064 = vld [vmem:[%s919] sm:$0xff]
        %v1065 = vld [vmem:[%s919 + $0x8] sm:$0xff]
        %1067 = vset.pattern.permute.xlu0 0
        %1068 = vperm.xlu0 %1067, %v1062
        %v1069 = vpop.permute.xlu0 %1068
        %1072 = vset.pattern.permute.xlu0 0
        %1073 = vperm.xlu0 %1072, %v1063
        %v1074 = vpop.permute.xlu0 %1073
        %v1076 = vmul.f32 %v1064, %v1069
        %v1077 = vmul.f32 %v1065, %v1074
        %1080 = vrot.lane.b32.xlu0 %v1076, 24
        %v1081 = vpop.permute.xlu0 %1080
        %1082 = vrot.lane.b32.xlu0 %v1077, 24
        %v1083 = vpop.permute.xlu0 %1082
        %vm1086 = vcmask 261312
        %1087 = vst.msk [vmem:[%s335] sm:$0xff] %vm1086, %v1081
        %1088 = vst.msk [vmem:[%s335 + $0x8] sm:$0xff] %vm1086, %v1083
      $region40: #{transformer_encoder_layer.5} parent=31 // pred_fallthru
        _
      %s1089 = smul.u32 2, %s22
      %p1090 = scmp.lt.s32.totalorder %s20, 1
      %s1091 = scalar_select %p1090, %s20, 1
      %p1092 = scmp.lt.s32.totalorder %s1089, 1
      %s1093 = scalar_select %p1092, %s1089, 1
      %p1094 = scmp.lt.s32.totalorder %s21, 0
      %s1095 = scalar_select %p1094, %s21, 0
      %s1096 = sadd.s32 %s1095, %s1093
      %s1097 = smul.addr %s1091, 2
      %s1098 = sadd.s32 %s1096, %s1097
      %s1099 = smul.addr %s1098, 8
      %s1100 = scalar_lea.vmem %s3, %s1099
      // Predicated region
      $region41: #{transformer_encoder_layer.5} parent=31 // pred_check
        %p1101 = pneg %p152
      $region42: #{transformer_encoder_layer.5} parent=31 // pred_check_branch
        %1103 = sbr.rel (%p1101) target = $region44
      $region43: #{transformer_encoder_layer.5} parent=31 // pred_region
        %s1104 = smul.u32 2, %s22
      $region44: #{transformer_encoder_layer.5} parent=31 // pred_fallthru
        _
    $region32: #{transformer_encoder_layer.5} parent=5 // pred_fallthru
      _
    %p1105 = scmp.le.s32.totalorder 2, %s9
    // Predicated region
    $region45: #{transformer_encoder_layer.5} parent=5 // pred_check
      %p1106 = pneg %p1105
    $region46: #{transformer_encoder_layer.5} parent=5 // pred_check_branch
      %1108 = sbr.rel (%p1106) target = $region48
    $region47: #{transformer_encoder_layer.5} parent=5 // pred_region
      %s1109 = ssub.s32 %s9, 2
      // Predicated region
      $region49: #{transformer_encoder_layer.5} parent=47 // pred_check
        %p1110 = pneg %p158
      $region50: #{transformer_encoder_layer.5} parent=47 // pred_check_branch
        %1112 = sbr.rel (%p1110) target = $region52
      $region51: #{transformer_encoder_layer.5} parent=47 // pred_region
        %s1113 = smul.u32 2, %s26
        %p1114 = scmp.lt.s32.totalorder %s24, 1
        %s1115 = scalar_select %p1114, %s24, 1
        %p1116 = scmp.lt.s32.totalorder %s1113, 1
        %s1117 = scalar_select %p1116, %s1113, 1
        %p1118 = scmp.lt.s32.totalorder %s25, 0
        %s1119 = scalar_select %p1118, %s25, 0
        %s1120 = sadd.s32 %s1119, %s1117
        %s1121 = smul.addr %s1115, 2
        %s1122 = sadd.s32 %s1120, %s1121
        %s1123 = smul.addr %s1122, 8
        %s1124 = scalar_lea.vmem %s3, %s1123
      $region52: #{transformer_encoder_layer.5} parent=47 // pred_fallthru
        _
    $region48: #{transformer_encoder_layer.5} parent=5 // pred_fallthru
      _
  $region6: #{transformer_encoder_layer.5} parent=0 // loop_footer
    %s13 = sadd.s32 1, %s9
  $region7: #{transformer_encoder_layer.5} parent=0 // loop_footer_branch
    %8 = sbr.rel target = $region3
  $region8: #{transformer_encoder_layer.5} parent=0 // loop_exit
    _

</llo_original>
